<compile_context>
chip_gen: v7x
topology: tpu7x:2x2x1
jax: 0.10.0
libtpu: 0.0.40
codegen_flags: <defaults>
</compile_context>

<pallas_src>
import jax
import jax.numpy as jnp
import numpy as np
from jax.experimental import pallas as pl
from jax.experimental.pallas import tpu as pltpu

HIDDEN = 128


def _actor_rollout_kernel(
    x_front_ref, hx0_ref, cx0_ref,
    w_front_ref, b_front_ref,
    wih_ref, whh_ref, b_lstm_ref,
    w2x_ref, w2h_ref, b2_ref,
    w3_ref, b3_ref, w4_ref, b4_ref,
    out_ref, h_out_ref, c_out_ref,
):
    f32 = jnp.float32
    T = x_front_ref.shape[0]   # static rollout length

    # ---- batched (non-recurrent) work over all T steps --------------------
    # fc1 + fc1_rec fused as one block-diagonal matmul on [x_state | x_hist].
    front = jnp.maximum(
        jnp.dot(x_front_ref[...], w_front_ref[...], preferred_element_type=f32)
        + b_front_ref[...], 0.0)                        # (T, 256)
    x1_all = front[:, :HIDDEN]                          # relu(fc1(x_state))
    x2_all = front[:, HIDDEN:]                          # relu(fc1_rec(x_hist))

    # Input half of the LSTM gates: x2 @ W_ih + (b_ih + b_hh), batched over T.
    pre_gates = (jnp.dot(x2_all, wih_ref[...], preferred_element_type=f32)
                 + b_lstm_ref[...])                     # (T, 512)
    # Input half of fc2: x1 @ w2[:128, :] + b2, batched over T.
    pre_fc2 = (jnp.dot(x1_all, w2x_ref[...], preferred_element_type=f32)
               + b2_ref[...])                           # (T, 128)

    whh = whh_ref[...]
    w2h = w2h_ref[...]
    w3 = w3_ref[...]
    b3 = b3_ref[...]
    w4 = w4_ref[...]
    b4 = b4_ref[...]

    # ---- serialized recurrent chain; (h, c) carried in vregs --------------
    h = hx0_ref[...]                                    # (1, 128)
    c = cx0_ref[...]                                    # (1, 128)
    out_rows, h_rows, c_rows = [], [], []
    for t in range(T):   # static unrolled loop: 4 small K=128 dots per step
        gates = pre_gates[t:t + 1, :] + jnp.dot(
            h, whh, preferred_element_type=f32)         # (1, 512)
        i_g = jax.nn.sigmoid(gates[:, 0 * HIDDEN:1 * HIDDEN])
        f_g = jax.nn.sigmoid(gates[:, 1 * HIDDEN:2 * HIDDEN])
        g_g = jnp.tanh(gates[:, 2 * HIDDEN:3 * HIDDEN])
        o_g = jax.nn.sigmoid(gates[:, 3 * HIDDEN:4 * HIDDEN])
        c = f_g * c + i_g * g_g
        h = o_g * jnp.tanh(c)

        # fc2 with the concat removed: x1-part precomputed, h-part recurrent.
        x3 = jnp.maximum(
            pre_fc2[t:t + 1, :] + jnp.dot(h, w2h, preferred_element_type=f32),
            0.0)
        x4 = jnp.maximum(
            jnp.dot(x3, w3, preferred_element_type=f32) + b3, 0.0)
        out = jnp.tanh(jnp.dot(x4, w4, preferred_element_type=f32) + b4)

        out_rows.append(out)
        h_rows.append(h)
        c_rows.append(c)

    # Single lane/sublane-dense (T, 128) store per output.
    out_ref[...] = jnp.concatenate(out_rows, axis=0)
    h_out_ref[...] = jnp.concatenate(h_rows, axis=0)
    c_out_ref[...] = jnp.concatenate(c_rows, axis=0)


def init_actor_params(key, dim_actions, dim_states):
    """Deterministic parameter init matching the PyTorch module's shapes.

    Linear weights: xavier_uniform_ (as in the module). Biases and LSTMCell
    params: PyTorch default U(-1/sqrt(fan), 1/sqrt(fan)). All weights are
    stored pre-transposed to (in_features, out_features).
    """
    ks = jax.random.split(key, 16)

    def xavier(k, fan_in, fan_out):
        bound = float(np.sqrt(6.0 / (fan_in + fan_out)))
        return jax.random.uniform(k, (fan_in, fan_out), jnp.float32, -bound, bound)

    def unif(k, shape, fan):
        bound = 1.0 / float(np.sqrt(fan))
        return jax.random.uniform(k, shape, jnp.float32, -bound, bound)

    p = {}
    p["w1"] = xavier(ks[0], dim_states, HIDDEN)                  # fc1
    p["b1"] = unif(ks[1], (1, HIDDEN), dim_states)
    p["w1r"] = xavier(ks[2], dim_states + dim_actions, HIDDEN)   # fc1_rec
    p["b1r"] = unif(ks[3], (1, HIDDEN), dim_states + dim_actions)
    # LSTMCell(128, 128): stored transposed -> (128, 512)
    p["wih"] = unif(ks[4], (HIDDEN, 4 * HIDDEN), HIDDEN)
    p["bih"] = unif(ks[5], (1, 4 * HIDDEN), HIDDEN)
    p["whh"] = unif(ks[6], (HIDDEN, 4 * HIDDEN), HIDDEN)
    p["bhh"] = unif(ks[7], (1, 4 * HIDDEN), HIDDEN)
    p["w2"] = xavier(ks[8], 2 * HIDDEN, HIDDEN)                  # fc2
    p["b2"] = unif(ks[9], (1, HIDDEN), 2 * HIDDEN)
    p["w3"] = xavier(ks[10], HIDDEN, HIDDEN)                     # fc3
    p["b3"] = unif(ks[11], (1, HIDDEN), HIDDEN)
    p["w4"] = xavier(ks[12], HIDDEN, dim_actions)                # fc4
    p["b4"] = unif(ks[13], (1, dim_actions), HIDDEN)
    return p


@jax.jit
def actor_rollout(x_hist_seq, x_state_seq, hx0, cx0, params):
    """Run T consecutive Actor.forward steps inside ONE pallas_call.

    x_hist_seq:  (T, 1, dim_states + dim_actions)
    x_state_seq: (T, 1, dim_states)
    hx0, cx0:    (1, 128) initial LSTM state
    Returns (out_seq (T,1,dim_actions), h_seq (T,1,128), c_seq (T,1,128)).
    """
    f32 = jnp.float32
    T = x_state_seq.shape[0]
    dim_states = x_state_seq.shape[-1]
    dim_hist = x_hist_seq.shape[-1]
    dim_actions = params["w4"].shape[1]
    f_in = dim_states + dim_hist

    # --- tiny weight prep (fused / split matmul layouts) -------------------
    w_front = jnp.zeros((f_in, 2 * HIDDEN), f32)
    w_front = w_front.at[:dim_states, :HIDDEN].set(params["w1"])
    w_front = w_front.at[dim_states:, HIDDEN:].set(params["w1r"])
    b_front = jnp.concatenate([params["b1"], params["b1r"]], axis=-1)

    b_lstm = params["bih"] + params["bhh"]                            # (1, 512)

    w2x = params["w2"][:HIDDEN, :]                                    # x1 half
    w2h = params["w2"][HIDDEN:, :]                                    # h  half

    w4p = jnp.zeros((HIDDEN, HIDDEN), f32).at[:, :dim_actions].set(params["w4"])
    b4p = jnp.zeros((1, HIDDEN), f32).at[:, :dim_actions].set(params["b4"])

    # (T, f_in) input slab: [x_state | x_hist]
    x_front = jnp.concatenate([x_state_seq, x_hist_seq], axis=-1).reshape(T, f_in)

    out_p, h_seq, c_seq = pl.pallas_call(
        _actor_rollout_kernel,
        out_shape=(
            jax.ShapeDtypeStruct((T, HIDDEN), f32),   # lane-padded actions
            jax.ShapeDtypeStruct((T, HIDDEN), f32),   # h per step
            jax.ShapeDtypeStruct((T, HIDDEN), f32),   # c per step
        ),
    )(x_front, hx0, cx0,
      w_front, b_front,
      params["wih"], params["whh"], b_lstm,
      w2x, w2h, params["b2"],
      params["w3"], params["b3"], w4p, b4p)

    out_seq = out_p[:, :dim_actions][:, None, :]
    return out_seq, h_seq[:, None, :], c_seq[:, None, :]


def actor_forward(x_hist, x_state, hx, cx, params):
    """Single-step Actor.forward (module semantics): returns (out, (h, c))."""
    out_seq, h_seq, c_seq = actor_rollout(
        x_hist[None], x_state[None], hx, cx, params)
    return out_seq[0], (h_seq[0], c_seq[0])


def actor_forward_ref(x_hist, x_state, hx, cx, p):
    """Pure-JAX single-step reference for correctness checking."""
    x1 = jax.nn.relu(x_state @ p["w1"] + p["b1"])
    x2 = jax.nn.relu(x_hist @ p["w1r"] + p["b1r"])
    gates = x2 @ p["wih"] + p["bih"] + hx @ p["whh"] + p["bhh"]
    i_g = jax.nn.sigmoid(gates[:, :HIDDEN])
    f_g = jax.nn.sigmoid(gates[:, HIDDEN:2 * HIDDEN])
    g_g = jnp.tanh(gates[:, 2 * HIDDEN:3 * HIDDEN])
    o_g = jax.nn.sigmoid(gates[:, 3 * HIDDEN:])
    c_new = f_g * cx + i_g * g_g
    h_new = o_g * jnp.tanh(c_new)
    x3 = jax.nn.relu(jnp.concatenate([x1, h_new], axis=-1) @ p["w2"] + p["b2"])
    x4 = jax.nn.relu(x3 @ p["w3"] + p["b3"])
    out = jnp.tanh(x4 @ p["w4"] + p["b4"])
    return out, (h_new, c_new)


if __name__ == "__main__":
    dim_actions = 4
    dim_states = 8
    T = 8   # rollout length handled fully inside one kernel invocation

    key = jax.random.PRNGKey(0)
    k_p, k_s, k_h = jax.random.split(key, 3)
    params = init_actor_params(k_p, dim_actions, dim_states)

    x_state_seq = jax.random.normal(k_s, (T, 1, dim_states), jnp.float32)
    x_hist_seq = jax.random.normal(
        k_h, (T, 1, dim_states + dim_actions), jnp.float32)
    lstm_hx = jnp.zeros((1, HIDDEN), jnp.float32)   # reset_actor_lstm()
    lstm_cx = jnp.zeros((1, HIDDEN), jnp.float32)

    # Rollout kernel (single launch; weights VMEM-resident, (h, c) in vregs).
    out_seq, h_seq, c_seq = actor_rollout(
        x_hist_seq, x_state_seq, lstm_hx, lstm_cx, params)
    jax.block_until_ready((out_seq, h_seq, c_seq))

    # Step-by-step pure-JAX reference.
    h_r, c_r = lstm_hx, lstm_cx
    for t in range(T):
        out_r, (h_r, c_r) = actor_forward_ref(
            x_hist_seq[t], x_state_seq[t], h_r, c_r, params)
        np.testing.assert_allclose(np.asarray(out_seq[t]), np.asarray(out_r),
                                   rtol=1e-5, atol=1e-5)
        np.testing.assert_allclose(np.asarray(h_seq[t]), np.asarray(h_r),
                                   rtol=1e-5, atol=1e-5)
        np.testing.assert_allclose(np.asarray(c_seq[t]), np.asarray(c_r),
                                   rtol=1e-5, atol=1e-5)

    # Single-step API matching the original module's forward.
    out1, (h1, c1) = actor_forward(
        x_hist_seq[0], x_state_seq[0], lstm_hx, lstm_cx, params)
    jax.block_until_ready((out1, h1, c1))
    out1_r, (h1_r, c1_r) = actor_forward_ref(
        x_hist_seq[0], x_state_seq[0], lstm_hx, lstm_cx, params)
    np.testing.assert_allclose(np.asarray(out1), np.asarray(out1_r),
                               rtol=1e-5, atol=1e-5)
    np.testing.assert_allclose(np.asarray(h1), np.asarray(h1_r),
                               rtol=1e-5, atol=1e-5)
    np.testing.assert_allclose(np.asarray(c1), np.asarray(c1_r),
                               rtol=1e-5, atol=1e-5)

    print("KERNEL_OK")
</pallas_src>

<mosaic_0001>
module attributes {stable_mosaic.version = 11 : i64} {
  func.func @_actor_rollout_kernel(%arg0: memref<8x20xf32, #tpu.memory_space<vmem>>, %arg1: memref<1x128xf32, #tpu.memory_space<vmem>>, %arg2: memref<1x128xf32, #tpu.memory_space<vmem>>, %arg3: memref<20x256xf32, #tpu.memory_space<vmem>>, %arg4: memref<1x256xf32, #tpu.memory_space<vmem>>, %arg5: memref<128x512xf32, #tpu.memory_space<vmem>>, %arg6: memref<128x512xf32, #tpu.memory_space<vmem>>, %arg7: memref<1x512xf32, #tpu.memory_space<vmem>>, %arg8: memref<128x128xf32, #tpu.memory_space<vmem>>, %arg9: memref<128x128xf32, #tpu.memory_space<vmem>>, %arg10: memref<1x128xf32, #tpu.memory_space<vmem>>, %arg11: memref<128x128xf32, #tpu.memory_space<vmem>>, %arg12: memref<1x128xf32, #tpu.memory_space<vmem>>, %arg13: memref<128x128xf32, #tpu.memory_space<vmem>>, %arg14: memref<1x128xf32, #tpu.memory_space<vmem>>, %arg15: memref<8x128xf32, #tpu.memory_space<vmem>>, %arg16: memref<8x128xf32, #tpu.memory_space<vmem>>, %arg17: memref<8x128xf32, #tpu.memory_space<vmem>>) attributes {dimension_semantics = [], scalar_prefetch = 0 : i64, scratch_operands = 0 : i64, tpu.core_type = #tpu.core_type<tc>} {
    %c0 = arith.constant 0 : index
    %c0_0 = arith.constant 0 : index
    %0 = vector.load %arg0[%c0, %c0_0] : memref<8x20xf32, #tpu.memory_space<vmem>>, vector<8x20xf32>
    %c0_1 = arith.constant 0 : index
    %c0_2 = arith.constant 0 : index
    %1 = vector.load %arg3[%c0_1, %c0_2] : memref<20x256xf32, #tpu.memory_space<vmem>>, vector<20x256xf32>
    %cst = arith.constant dense<0.000000e+00> : vector<8x256xf32>
    %2 = tpu.matmul %0, %1, %cst {dimension_numbers = #tpu.dot_dimension_numbers<[1], [0], [0], [1], [0, 0, 1, 1], [], []>} : vector<8x20xf32>, vector<20x256xf32>, vector<8x256xf32> -> vector<8x256xf32>
    %c0_3 = arith.constant 0 : index
    %c0_4 = arith.constant 0 : index
    %3 = vector.load %arg4[%c0_3, %c0_4] : memref<1x256xf32, #tpu.memory_space<vmem>>, vector<1x256xf32>
    %4 = vector.broadcast %3 : vector<1x256xf32> to vector<8x256xf32>
    %5 = arith.addf %2, %4 : vector<8x256xf32>
    %cst_5 = arith.constant 0.000000e+00 : f32
    %6 = vector.broadcast %cst_5 : f32 to vector<8x256xf32>
    %7 = arith.maximumf %5, %6 : vector<8x256xf32>
    %8 = vector.extract_strided_slice %7 {offsets = [0, 0], sizes = [8, 128], strides = [1, 1]} : vector<8x256xf32> to vector<8x128xf32>
    %9 = vector.extract_strided_slice %7 {offsets = [0, 128], sizes = [8, 128], strides = [1, 1]} : vector<8x256xf32> to vector<8x128xf32>
    %c0_6 = arith.constant 0 : index
    %c0_7 = arith.constant 0 : index
    %10 = vector.load %arg5[%c0_6, %c0_7] : memref<128x512xf32, #tpu.memory_space<vmem>>, vector<128x512xf32>
    %cst_8 = arith.constant dense<0.000000e+00> : vector<8x512xf32>
    %11 = tpu.matmul %9, %10, %cst_8 {dimension_numbers = #tpu.dot_dimension_numbers<[1], [0], [0], [1], [0, 0, 1, 1], [], []>} : vector<8x128xf32>, vector<128x512xf32>, vector<8x512xf32> -> vector<8x512xf32>
    %c0_9 = arith.constant 0 : index
    %c0_10 = arith.constant 0 : index
    %12 = vector.load %arg7[%c0_9, %c0_10] : memref<1x512xf32, #tpu.memory_space<vmem>>, vector<1x512xf32>
    %13 = vector.broadcast %12 : vector<1x512xf32> to vector<8x512xf32>
    %14 = arith.addf %11, %13 : vector<8x512xf32>
    %c0_11 = arith.constant 0 : index
    %c0_12 = arith.constant 0 : index
    %15 = vector.load %arg8[%c0_11, %c0_12] : memref<128x128xf32, #tpu.memory_space<vmem>>, vector<128x128xf32>
    %cst_13 = arith.constant dense<0.000000e+00> : vector<8x128xf32>
    %16 = tpu.matmul %8, %15, %cst_13 {dimension_numbers = #tpu.dot_dimension_numbers<[1], [0], [0], [1], [0, 0, 1, 1], [], []>} : vector<8x128xf32>, vector<128x128xf32>, vector<8x128xf32> -> vector<8x128xf32>
    %c0_14 = arith.constant 0 : index
    %c0_15 = arith.constant 0 : index
    %17 = vector.load %arg10[%c0_14, %c0_15] : memref<1x128xf32, #tpu.memory_space<vmem>>, vector<1x128xf32>
    %18 = vector.broadcast %17 : vector<1x128xf32> to vector<8x128xf32>
    %19 = arith.addf %16, %18 : vector<8x128xf32>
    %c0_16 = arith.constant 0 : index
    %c0_17 = arith.constant 0 : index
    %20 = vector.load %arg6[%c0_16, %c0_17] : memref<128x512xf32, #tpu.memory_space<vmem>>, vector<128x512xf32>
    %c0_18 = arith.constant 0 : index
    %c0_19 = arith.constant 0 : index
    %21 = vector.load %arg9[%c0_18, %c0_19] : memref<128x128xf32, #tpu.memory_space<vmem>>, vector<128x128xf32>
    %c0_20 = arith.constant 0 : index
    %c0_21 = arith.constant 0 : index
    %22 = vector.load %arg11[%c0_20, %c0_21] : memref<128x128xf32, #tpu.memory_space<vmem>>, vector<128x128xf32>
    %c0_22 = arith.constant 0 : index
    %c0_23 = arith.constant 0 : index
    %23 = vector.load %arg12[%c0_22, %c0_23] : memref<1x128xf32, #tpu.memory_space<vmem>>, vector<1x128xf32>
    %c0_24 = arith.constant 0 : index
    %c0_25 = arith.constant 0 : index
    %24 = vector.load %arg13[%c0_24, %c0_25] : memref<128x128xf32, #tpu.memory_space<vmem>>, vector<128x128xf32>
    %c0_26 = arith.constant 0 : index
    %c0_27 = arith.constant 0 : index
    %25 = vector.load %arg14[%c0_26, %c0_27] : memref<1x128xf32, #tpu.memory_space<vmem>>, vector<1x128xf32>
    %c0_28 = arith.constant 0 : index
    %c0_29 = arith.constant 0 : index
    %26 = vector.load %arg1[%c0_28, %c0_29] : memref<1x128xf32, #tpu.memory_space<vmem>>, vector<1x128xf32>
    %c0_30 = arith.constant 0 : index
    %c0_31 = arith.constant 0 : index
    %27 = vector.load %arg2[%c0_30, %c0_31] : memref<1x128xf32, #tpu.memory_space<vmem>>, vector<1x128xf32>
    %28 = vector.extract_strided_slice %14 {offsets = [0, 0], sizes = [1, 512], strides = [1, 1]} : vector<8x512xf32> to vector<1x512xf32>
    %cst_32 = arith.constant dense<0.000000e+00> : vector<1x512xf32>
    %29 = tpu.matmul %26, %20, %cst_32 {dimension_numbers = #tpu.dot_dimension_numbers<[1], [0], [0], [1], [0, 0, 1, 1], [], []>} : vector<1x128xf32>, vector<128x512xf32>, vector<1x512xf32> -> vector<1x512xf32>
    %30 = arith.addf %28, %29 : vector<1x512xf32>
    %31 = vector.extract_strided_slice %30 {offsets = [0, 0], sizes = [1, 128], strides = [1, 1]} : vector<1x512xf32> to vector<1x128xf32>
    %32 = arith.negf %31 : vector<1x128xf32>
    %33 = math.exp %32 : vector<1x128xf32>
    %cst_33 = arith.constant 1.000000e+00 : f32
    %34 = vector.broadcast %cst_33 : f32 to vector<1x128xf32>
    %35 = arith.addf %34, %33 : vector<1x128xf32>
    %36 = arith.divf %34, %35 : vector<1x128xf32>
    %37 = vector.extract_strided_slice %30 {offsets = [0, 128], sizes = [1, 128], strides = [1, 1]} : vector<1x512xf32> to vector<1x128xf32>
    %38 = arith.negf %37 : vector<1x128xf32>
    %39 = math.exp %38 : vector<1x128xf32>
    %cst_34 = arith.constant 1.000000e+00 : f32
    %40 = vector.broadcast %cst_34 : f32 to vector<1x128xf32>
    %41 = arith.addf %40, %39 : vector<1x128xf32>
    %42 = arith.divf %40, %41 : vector<1x128xf32>
    %43 = vector.extract_strided_slice %30 {offsets = [0, 256], sizes = [1, 128], strides = [1, 1]} : vector<1x512xf32> to vector<1x128xf32>
    %44 = math.tanh %43 : vector<1x128xf32>
    %45 = vector.extract_strided_slice %30 {offsets = [0, 384], sizes = [1, 128], strides = [1, 1]} : vector<1x512xf32> to vector<1x128xf32>
    %46 = arith.negf %45 : vector<1x128xf32>
    %47 = math.exp %46 : vector<1x128xf32>
    %cst_35 = arith.constant 1.000000e+00 : f32
    %48 = vector.broadcast %cst_35 : f32 to vector<1x128xf32>
    %49 = arith.addf %48, %47 : vector<1x128xf32>
    %50 = arith.divf %48, %49 : vector<1x128xf32>
    %51 = arith.mulf %42, %27 : vector<1x128xf32>
    %52 = arith.mulf %36, %44 : vector<1x128xf32>
    %53 = arith.addf %51, %52 : vector<1x128xf32>
    %54 = math.tanh %53 : vector<1x128xf32>
    %55 = arith.mulf %50, %54 : vector<1x128xf32>
    %56 = vector.extract_strided_slice %19 {offsets = [0, 0], sizes = [1, 128], strides = [1, 1]} : vector<8x128xf32> to vector<1x128xf32>
    %cst_36 = arith.constant dense<0.000000e+00> : vector<1x128xf32>
    %57 = tpu.matmul %55, %21, %cst_36 {dimension_numbers = #tpu.dot_dimension_numbers<[1], [0], [0], [1], [0, 0, 1, 1], [], []>} : vector<1x128xf32>, vector<128x128xf32>, vector<1x128xf32> -> vector<1x128xf32>
    %58 = arith.addf %56, %57 : vector<1x128xf32>
    %cst_37 = arith.constant 0.000000e+00 : f32
    %59 = vector.broadcast %cst_37 : f32 to vector<1x128xf32>
    %60 = arith.maximumf %58, %59 : vector<1x128xf32>
    %cst_38 = arith.constant dense<0.000000e+00> : vector<1x128xf32>
    %61 = tpu.matmul %60, %22, %cst_38 {dimension_numbers = #tpu.dot_dimension_numbers<[1], [0], [0], [1], [0, 0, 1, 1], [], []>} : vector<1x128xf32>, vector<128x128xf32>, vector<1x128xf32> -> vector<1x128xf32>
    %62 = arith.addf %61, %23 : vector<1x128xf32>
    %cst_39 = arith.constant 0.000000e+00 : f32
    %63 = vector.broadcast %cst_39 : f32 to vector<1x128xf32>
    %64 = arith.maximumf %62, %63 : vector<1x128xf32>
    %cst_40 = arith.constant dense<0.000000e+00> : vector<1x128xf32>
    %65 = tpu.matmul %64, %24, %cst_40 {dimension_numbers = #tpu.dot_dimension_numbers<[1], [0], [0], [1], [0, 0, 1, 1], [], []>} : vector<1x128xf32>, vector<128x128xf32>, vector<1x128xf32> -> vector<1x128xf32>
    %66 = arith.addf %65, %25 : vector<1x128xf32>
    %67 = math.tanh %66 : vector<1x128xf32>
    %68 = vector.extract_strided_slice %14 {offsets = [1, 0], sizes = [1, 512], strides = [1, 1]} : vector<8x512xf32> to vector<1x512xf32>
    %cst_41 = arith.constant dense<0.000000e+00> : vector<1x512xf32>
    %69 = tpu.matmul %55, %20, %cst_41 {dimension_numbers = #tpu.dot_dimension_numbers<[1], [0], [0], [1], [0, 0, 1, 1], [], []>} : vector<1x128xf32>, vector<128x512xf32>, vector<1x512xf32> -> vector<1x512xf32>
    %70 = arith.addf %68, %69 : vector<1x512xf32>
    %71 = vector.extract_strided_slice %70 {offsets = [0, 0], sizes = [1, 128], strides = [1, 1]} : vector<1x512xf32> to vector<1x128xf32>
    %72 = arith.negf %71 : vector<1x128xf32>
    %73 = math.exp %72 : vector<1x128xf32>
    %cst_42 = arith.constant 1.000000e+00 : f32
    %74 = vector.broadcast %cst_42 : f32 to vector<1x128xf32>
    %75 = arith.addf %74, %73 : vector<1x128xf32>
    %76 = arith.divf %74, %75 : vector<1x128xf32>
    %77 = vector.extract_strided_slice %70 {offsets = [0, 128], sizes = [1, 128], strides = [1, 1]} : vector<1x512xf32> to vector<1x128xf32>
    %78 = arith.negf %77 : vector<1x128xf32>
    %79 = math.exp %78 : vector<1x128xf32>
    %cst_43 = arith.constant 1.000000e+00 : f32
    %80 = vector.broadcast %cst_43 : f32 to vector<1x128xf32>
    %81 = arith.addf %80, %79 : vector<1x128xf32>
    %82 = arith.divf %80, %81 : vector<1x128xf32>
    %83 = vector.extract_strided_slice %70 {offsets = [0, 256], sizes = [1, 128], strides = [1, 1]} : vector<1x512xf32> to vector<1x128xf32>
    %84 = math.tanh %83 : vector<1x128xf32>
    %85 = vector.extract_strided_slice %70 {offsets = [0, 384], sizes = [1, 128], strides = [1, 1]} : vector<1x512xf32> to vector<1x128xf32>
    %86 = arith.negf %85 : vector<1x128xf32>
    %87 = math.exp %86 : vector<1x128xf32>
    %cst_44 = arith.constant 1.000000e+00 : f32
    %88 = vector.broadcast %cst_44 : f32 to vector<1x128xf32>
    %89 = arith.addf %88, %87 : vector<1x128xf32>
    %90 = arith.divf %88, %89 : vector<1x128xf32>
    %91 = arith.mulf %82, %53 : vector<1x128xf32>
    %92 = arith.mulf %76, %84 : vector<1x128xf32>
    %93 = arith.addf %91, %92 : vector<1x128xf32>
    %94 = math.tanh %93 : vector<1x128xf32>
    %95 = arith.mulf %90, %94 : vector<1x128xf32>
    %96 = vector.extract_strided_slice %19 {offsets = [1, 0], sizes = [1, 128], strides = [1, 1]} : vector<8x128xf32> to vector<1x128xf32>
    %cst_45 = arith.constant dense<0.000000e+00> : vector<1x128xf32>
    %97 = tpu.matmul %95, %21, %cst_45 {dimension_numbers = #tpu.dot_dimension_numbers<[1], [0], [0], [1], [0, 0, 1, 1], [], []>} : vector<1x128xf32>, vector<128x128xf32>, vector<1x128xf32> -> vector<1x128xf32>
    %98 = arith.addf %96, %97 : vector<1x128xf32>
    %cst_46 = arith.constant 0.000000e+00 : f32
    %99 = vector.broadcast %cst_46 : f32 to vector<1x128xf32>
    %100 = arith.maximumf %98, %99 : vector<1x128xf32>
    %cst_47 = arith.constant dense<0.000000e+00> : vector<1x128xf32>
    %101 = tpu.matmul %100, %22, %cst_47 {dimension_numbers = #tpu.dot_dimension_numbers<[1], [0], [0], [1], [0, 0, 1, 1], [], []>} : vector<1x128xf32>, vector<128x128xf32>, vector<1x128xf32> -> vector<1x128xf32>
    %102 = arith.addf %101, %23 : vector<1x128xf32>
    %cst_48 = arith.constant 0.000000e+00 : f32
    %103 = vector.broadcast %cst_48 : f32 to vector<1x128xf32>
    %104 = arith.maximumf %102, %103 : vector<1x128xf32>
    %cst_49 = arith.constant dense<0.000000e+00> : vector<1x128xf32>
    %105 = tpu.matmul %104, %24, %cst_49 {dimension_numbers = #tpu.dot_dimension_numbers<[1], [0], [0], [1], [0, 0, 1, 1], [], []>} : vector<1x128xf32>, vector<128x128xf32>, vector<1x128xf32> -> vector<1x128xf32>
    %106 = arith.addf %105, %25 : vector<1x128xf32>
    %107 = math.tanh %106 : vector<1x128xf32>
    %108 = vector.extract_strided_slice %14 {offsets = [2, 0], sizes = [1, 512], strides = [1, 1]} : vector<8x512xf32> to vector<1x512xf32>
    %cst_50 = arith.constant dense<0.000000e+00> : vector<1x512xf32>
    %109 = tpu.matmul %95, %20, %cst_50 {dimension_numbers = #tpu.dot_dimension_numbers<[1], [0], [0], [1], [0, 0, 1, 1], [], []>} : vector<1x128xf32>, vector<128x512xf32>, vector<1x512xf32> -> vector<1x512xf32>
    %110 = arith.addf %108, %109 : vector<1x512xf32>
    %111 = vector.extract_strided_slice %110 {offsets = [0, 0], sizes = [1, 128], strides = [1, 1]} : vector<1x512xf32> to vector<1x128xf32>
    %112 = arith.negf %111 : vector<1x128xf32>
    %113 = math.exp %112 : vector<1x128xf32>
    %cst_51 = arith.constant 1.000000e+00 : f32
    %114 = vector.broadcast %cst_51 : f32 to vector<1x128xf32>
    %115 = arith.addf %114, %113 : vector<1x128xf32>
    %116 = arith.divf %114, %115 : vector<1x128xf32>
    %117 = vector.extract_strided_slice %110 {offsets = [0, 128], sizes = [1, 128], strides = [1, 1]} : vector<1x512xf32> to vector<1x128xf32>
    %118 = arith.negf %117 : vector<1x128xf32>
    %119 = math.exp %118 : vector<1x128xf32>
    %cst_52 = arith.constant 1.000000e+00 : f32
    %120 = vector.broadcast %cst_52 : f32 to vector<1x128xf32>
    %121 = arith.addf %120, %119 : vector<1x128xf32>
    %122 = arith.divf %120, %121 : vector<1x128xf32>
    %123 = vector.extract_strided_slice %110 {offsets = [0, 256], sizes = [1, 128], strides = [1, 1]} : vector<1x512xf32> to vector<1x128xf32>
    %124 = math.tanh %123 : vector<1x128xf32>
    %125 = vector.extract_strided_slice %110 {offsets = [0, 384], sizes = [1, 128], strides = [1, 1]} : vector<1x512xf32> to vector<1x128xf32>
    %126 = arith.negf %125 : vector<1x128xf32>
    %127 = math.exp %126 : vector<1x128xf32>
    %cst_53 = arith.constant 1.000000e+00 : f32
    %128 = vector.broadcast %cst_53 : f32 to vector<1x128xf32>
    %129 = arith.addf %128, %127 : vector<1x128xf32>
    %130 = arith.divf %128, %129 : vector<1x128xf32>
    %131 = arith.mulf %122, %93 : vector<1x128xf32>
    %132 = arith.mulf %116, %124 : vector<1x128xf32>
    %133 = arith.addf %131, %132 : vector<1x128xf32>
    %134 = math.tanh %133 : vector<1x128xf32>
    %135 = arith.mulf %130, %134 : vector<1x128xf32>
    %136 = vector.extract_strided_slice %19 {offsets = [2, 0], sizes = [1, 128], strides = [1, 1]} : vector<8x128xf32> to vector<1x128xf32>
    %cst_54 = arith.constant dense<0.000000e+00> : vector<1x128xf32>
    %137 = tpu.matmul %135, %21, %cst_54 {dimension_numbers = #tpu.dot_dimension_numbers<[1], [0], [0], [1], [0, 0, 1, 1], [], []>} : vector<1x128xf32>, vector<128x128xf32>, vector<1x128xf32> -> vector<1x128xf32>
    %138 = arith.addf %136, %137 : vector<1x128xf32>
    %cst_55 = arith.constant 0.000000e+00 : f32
    %139 = vector.broadcast %cst_55 : f32 to vector<1x128xf32>
    %140 = arith.maximumf %138, %139 : vector<1x128xf32>
    %cst_56 = arith.constant dense<0.000000e+00> : vector<1x128xf32>
    %141 = tpu.matmul %140, %22, %cst_56 {dimension_numbers = #tpu.dot_dimension_numbers<[1], [0], [0], [1], [0, 0, 1, 1], [], []>} : vector<1x128xf32>, vector<128x128xf32>, vector<1x128xf32> -> vector<1x128xf32>
    %142 = arith.addf %141, %23 : vector<1x128xf32>
    %cst_57 = arith.constant 0.000000e+00 : f32
    %143 = vector.broadcast %cst_57 : f32 to vector<1x128xf32>
    %144 = arith.maximumf %142, %143 : vector<1x128xf32>
    %cst_58 = arith.constant dense<0.000000e+00> : vector<1x128xf32>
    %145 = tpu.matmul %144, %24, %cst_58 {dimension_numbers = #tpu.dot_dimension_numbers<[1], [0], [0], [1], [0, 0, 1, 1], [], []>} : vector<1x128xf32>, vector<128x128xf32>, vector<1x128xf32> -> vector<1x128xf32>
    %146 = arith.addf %145, %25 : vector<1x128xf32>
    %147 = math.tanh %146 : vector<1x128xf32>
    %148 = vector.extract_strided_slice %14 {offsets = [3, 0], sizes = [1, 512], strides = [1, 1]} : vector<8x512xf32> to vector<1x512xf32>
    %cst_59 = arith.constant dense<0.000000e+00> : vector<1x512xf32>
    %149 = tpu.matmul %135, %20, %cst_59 {dimension_numbers = #tpu.dot_dimension_numbers<[1], [0], [0], [1], [0, 0, 1, 1], [], []>} : vector<1x128xf32>, vector<128x512xf32>, vector<1x512xf32> -> vector<1x512xf32>
    %150 = arith.addf %148, %149 : vector<1x512xf32>
    %151 = vector.extract_strided_slice %150 {offsets = [0, 0], sizes = [1, 128], strides = [1, 1]} : vector<1x512xf32> to vector<1x128xf32>
    %152 = arith.negf %151 : vector<1x128xf32>
    %153 = math.exp %152 : vector<1x128xf32>
    %cst_60 = arith.constant 1.000000e+00 : f32
    %154 = vector.broadcast %cst_60 : f32 to vector<1x128xf32>
    %155 = arith.addf %154, %153 : vector<1x128xf32>
    %156 = arith.divf %154, %155 : vector<1x128xf32>
    %157 = vector.extract_strided_slice %150 {offsets = [0, 128], sizes = [1, 128], strides = [1, 1]} : vector<1x512xf32> to vector<1x128xf32>
    %158 = arith.negf %157 : vector<1x128xf32>
    %159 = math.exp %158 : vector<1x128xf32>
    %cst_61 = arith.constant 1.000000e+00 : f32
    %160 = vector.broadcast %cst_61 : f32 to vector<1x128xf32>
    %161 = arith.addf %160, %159 : vector<1x128xf32>
    %162 = arith.divf %160, %161 : vector<1x128xf32>
    %163 = vector.extract_strided_slice %150 {offsets = [0, 256], sizes = [1, 128], strides = [1, 1]} : vector<1x512xf32> to vector<1x128xf32>
    %164 = math.tanh %163 : vector<1x128xf32>
    %165 = vector.extract_strided_slice %150 {offsets = [0, 384], sizes = [1, 128], strides = [1, 1]} : vector<1x512xf32> to vector<1x128xf32>
    %166 = arith.negf %165 : vector<1x128xf32>
    %167 = math.exp %166 : vector<1x128xf32>
    %cst_62 = arith.constant 1.000000e+00 : f32
    %168 = vector.broadcast %cst_62 : f32 to vector<1x128xf32>
    %169 = arith.addf %168, %167 : vector<1x128xf32>
    %170 = arith.divf %168, %169 : vector<1x128xf32>
    %171 = arith.mulf %162, %133 : vector<1x128xf32>
    %172 = arith.mulf %156, %164 : vector<1x128xf32>
    %173 = arith.addf %171, %172 : vector<1x128xf32>
    %174 = math.tanh %173 : vector<1x128xf32>
    %175 = arith.mulf %170, %174 : vector<1x128xf32>
    %176 = vector.extract_strided_slice %19 {offsets = [3, 0], sizes = [1, 128], strides = [1, 1]} : vector<8x128xf32> to vector<1x128xf32>
    %cst_63 = arith.constant dense<0.000000e+00> : vector<1x128xf32>
    %177 = tpu.matmul %175, %21, %cst_63 {dimension_numbers = #tpu.dot_dimension_numbers<[1], [0], [0], [1], [0, 0, 1, 1], [], []>} : vector<1x128xf32>, vector<128x128xf32>, vector<1x128xf32> -> vector<1x128xf32>
    %178 = arith.addf %176, %177 : vector<1x128xf32>
    %cst_64 = arith.constant 0.000000e+00 : f32
    %179 = vector.broadcast %cst_64 : f32 to vector<1x128xf32>
    %180 = arith.maximumf %178, %179 : vector<1x128xf32>
    %cst_65 = arith.constant dense<0.000000e+00> : vector<1x128xf32>
    %181 = tpu.matmul %180, %22, %cst_65 {dimension_numbers = #tpu.dot_dimension_numbers<[1], [0], [0], [1], [0, 0, 1, 1], [], []>} : vector<1x128xf32>, vector<128x128xf32>, vector<1x128xf32> -> vector<1x128xf32>
    %182 = arith.addf %181, %23 : vector<1x128xf32>
    %cst_66 = arith.constant 0.000000e+00 : f32
    %183 = vector.broadcast %cst_66 : f32 to vector<1x128xf32>
    %184 = arith.maximumf %182, %183 : vector<1x128xf32>
    %cst_67 = arith.constant dense<0.000000e+00> : vector<1x128xf32>
    %185 = tpu.matmul %184, %24, %cst_67 {dimension_numbers = #tpu.dot_dimension_numbers<[1], [0], [0], [1], [0, 0, 1, 1], [], []>} : vector<1x128xf32>, vector<128x128xf32>, vector<1x128xf32> -> vector<1x128xf32>
    %186 = arith.addf %185, %25 : vector<1x128xf32>
    %187 = math.tanh %186 : vector<1x128xf32>
    %188 = vector.extract_strided_slice %14 {offsets = [4, 0], sizes = [1, 512], strides = [1, 1]} : vector<8x512xf32> to vector<1x512xf32>
    %cst_68 = arith.constant dense<0.000000e+00> : vector<1x512xf32>
    %189 = tpu.matmul %175, %20, %cst_68 {dimension_numbers = #tpu.dot_dimension_numbers<[1], [0], [0], [1], [0, 0, 1, 1], [], []>} : vector<1x128xf32>, vector<128x512xf32>, vector<1x512xf32> -> vector<1x512xf32>
    %190 = arith.addf %188, %189 : vector<1x512xf32>
    %191 = vector.extract_strided_slice %190 {offsets = [0, 0], sizes = [1, 128], strides = [1, 1]} : vector<1x512xf32> to vector<1x128xf32>
    %192 = arith.negf %191 : vector<1x128xf32>
    %193 = math.exp %192 : vector<1x128xf32>
    %cst_69 = arith.constant 1.000000e+00 : f32
    %194 = vector.broadcast %cst_69 : f32 to vector<1x128xf32>
    %195 = arith.addf %194, %193 : vector<1x128xf32>
    %196 = arith.divf %194, %195 : vector<1x128xf32>
    %197 = vector.extract_strided_slice %190 {offsets = [0, 128], sizes = [1, 128], strides = [1, 1]} : vector<1x512xf32> to vector<1x128xf32>
    %198 = arith.negf %197 : vector<1x128xf32>
    %199 = math.exp %198 : vector<1x128xf32>
    %cst_70 = arith.constant 1.000000e+00 : f32
    %200 = vector.broadcast %cst_70 : f32 to vector<1x128xf32>
    %201 = arith.addf %200, %199 : vector<1x128xf32>
    %202 = arith.divf %200, %201 : vector<1x128xf32>
    %203 = vector.extract_strided_slice %190 {offsets = [0, 256], sizes = [1, 128], strides = [1, 1]} : vector<1x512xf32> to vector<1x128xf32>
    %204 = math.tanh %203 : vector<1x128xf32>
    %205 = vector.extract_strided_slice %190 {offsets = [0, 384], sizes = [1, 128], strides = [1, 1]} : vector<1x512xf32> to vector<1x128xf32>
    %206 = arith.negf %205 : vector<1x128xf32>
    %207 = math.exp %206 : vector<1x128xf32>
    %cst_71 = arith.constant 1.000000e+00 : f32
    %208 = vector.broadcast %cst_71 : f32 to vector<1x128xf32>
    %209 = arith.addf %208, %207 : vector<1x128xf32>
    %210 = arith.divf %208, %209 : vector<1x128xf32>
    %211 = arith.mulf %202, %173 : vector<1x128xf32>
    %212 = arith.mulf %196, %204 : vector<1x128xf32>
    %213 = arith.addf %211, %212 : vector<1x128xf32>
    %214 = math.tanh %213 : vector<1x128xf32>
    %215 = arith.mulf %210, %214 : vector<1x128xf32>
    %216 = vector.extract_strided_slice %19 {offsets = [4, 0], sizes = [1, 128], strides = [1, 1]} : vector<8x128xf32> to vector<1x128xf32>
    %cst_72 = arith.constant dense<0.000000e+00> : vector<1x128xf32>
    %217 = tpu.matmul %215, %21, %cst_72 {dimension_numbers = #tpu.dot_dimension_numbers<[1], [0], [0], [1], [0, 0, 1, 1], [], []>} : vector<1x128xf32>, vector<128x128xf32>, vector<1x128xf32> -> vector<1x128xf32>
    %218 = arith.addf %216, %217 : vector<1x128xf32>
    %cst_73 = arith.constant 0.000000e+00 : f32
    %219 = vector.broadcast %cst_73 : f32 to vector<1x128xf32>
    %220 = arith.maximumf %218, %219 : vector<1x128xf32>
    %cst_74 = arith.constant dense<0.000000e+00> : vector<1x128xf32>
    %221 = tpu.matmul %220, %22, %cst_74 {dimension_numbers = #tpu.dot_dimension_numbers<[1], [0], [0], [1], [0, 0, 1, 1], [], []>} : vector<1x128xf32>, vector<128x128xf32>, vector<1x128xf32> -> vector<1x128xf32>
    %222 = arith.addf %221, %23 : vector<1x128xf32>
    %cst_75 = arith.constant 0.000000e+00 : f32
    %223 = vector.broadcast %cst_75 : f32 to vector<1x128xf32>
    %224 = arith.maximumf %222, %223 : vector<1x128xf32>
    %cst_76 = arith.constant dense<0.000000e+00> : vector<1x128xf32>
    %225 = tpu.matmul %224, %24, %cst_76 {dimension_numbers = #tpu.dot_dimension_numbers<[1], [0], [0], [1], [0, 0, 1, 1], [], []>} : vector<1x128xf32>, vector<128x128xf32>, vector<1x128xf32> -> vector<1x128xf32>
    %226 = arith.addf %225, %25 : vector<1x128xf32>
    %227 = math.tanh %226 : vector<1x128xf32>
    %228 = vector.extract_strided_slice %14 {offsets = [5, 0], sizes = [1, 512], strides = [1, 1]} : vector<8x512xf32> to vector<1x512xf32>
    %cst_77 = arith.constant dense<0.000000e+00> : vector<1x512xf32>
    %229 = tpu.matmul %215, %20, %cst_77 {dimension_numbers = #tpu.dot_dimension_numbers<[1], [0], [0], [1], [0, 0, 1, 1], [], []>} : vector<1x128xf32>, vector<128x512xf32>, vector<1x512xf32> -> vector<1x512xf32>
    %230 = arith.addf %228, %229 : vector<1x512xf32>
    %231 = vector.extract_strided_slice %230 {offsets = [0, 0], sizes = [1, 128], strides = [1, 1]} : vector<1x512xf32> to vector<1x128xf32>
    %232 = arith.negf %231 : vector<1x128xf32>
    %233 = math.exp %232 : vector<1x128xf32>
    %cst_78 = arith.constant 1.000000e+00 : f32
    %234 = vector.broadcast %cst_78 : f32 to vector<1x128xf32>
    %235 = arith.addf %234, %233 : vector<1x128xf32>
    %236 = arith.divf %234, %235 : vector<1x128xf32>
    %237 = vector.extract_strided_slice %230 {offsets = [0, 128], sizes = [1, 128], strides = [1, 1]} : vector<1x512xf32> to vector<1x128xf32>
    %238 = arith.negf %237 : vector<1x128xf32>
    %239 = math.exp %238 : vector<1x128xf32>
    %cst_79 = arith.constant 1.000000e+00 : f32
    %240 = vector.broadcast %cst_79 : f32 to vector<1x128xf32>
    %241 = arith.addf %240, %239 : vector<1x128xf32>
    %242 = arith.divf %240, %241 : vector<1x128xf32>
    %243 = vector.extract_strided_slice %230 {offsets = [0, 256], sizes = [1, 128], strides = [1, 1]} : vector<1x512xf32> to vector<1x128xf32>
    %244 = math.tanh %243 : vector<1x128xf32>
    %245 = vector.extract_strided_slice %230 {offsets = [0, 384], sizes = [1, 128], strides = [1, 1]} : vector<1x512xf32> to vector<1x128xf32>
    %246 = arith.negf %245 : vector<1x128xf32>
    %247 = math.exp %246 : vector<1x128xf32>
    %cst_80 = arith.constant 1.000000e+00 : f32
    %248 = vector.broadcast %cst_80 : f32 to vector<1x128xf32>
    %249 = arith.addf %248, %247 : vector<1x128xf32>
    %250 = arith.divf %248, %249 : vector<1x128xf32>
    %251 = arith.mulf %242, %213 : vector<1x128xf32>
    %252 = arith.mulf %236, %244 : vector<1x128xf32>
    %253 = arith.addf %251, %252 : vector<1x128xf32>
    %254 = math.tanh %253 : vector<1x128xf32>
    %255 = arith.mulf %250, %254 : vector<1x128xf32>
    %256 = vector.extract_strided_slice %19 {offsets = [5, 0], sizes = [1, 128], strides = [1, 1]} : vector<8x128xf32> to vector<1x128xf32>
    %cst_81 = arith.constant dense<0.000000e+00> : vector<1x128xf32>
    %257 = tpu.matmul %255, %21, %cst_81 {dimension_numbers = #tpu.dot_dimension_numbers<[1], [0], [0], [1], [0, 0, 1, 1], [], []>} : vector<1x128xf32>, vector<128x128xf32>, vector<1x128xf32> -> vector<1x128xf32>
    %258 = arith.addf %256, %257 : vector<1x128xf32>
    %cst_82 = arith.constant 0.000000e+00 : f32
    %259 = vector.broadcast %cst_82 : f32 to vector<1x128xf32>
    %260 = arith.maximumf %258, %259 : vector<1x128xf32>
    %cst_83 = arith.constant dense<0.000000e+00> : vector<1x128xf32>
    %261 = tpu.matmul %260, %22, %cst_83 {dimension_numbers = #tpu.dot_dimension_numbers<[1], [0], [0], [1], [0, 0, 1, 1], [], []>} : vector<1x128xf32>, vector<128x128xf32>, vector<1x128xf32> -> vector<1x128xf32>
    %262 = arith.addf %261, %23 : vector<1x128xf32>
    %cst_84 = arith.constant 0.000000e+00 : f32
    %263 = vector.broadcast %cst_84 : f32 to vector<1x128xf32>
    %264 = arith.maximumf %262, %263 : vector<1x128xf32>
    %cst_85 = arith.constant dense<0.000000e+00> : vector<1x128xf32>
    %265 = tpu.matmul %264, %24, %cst_85 {dimension_numbers = #tpu.dot_dimension_numbers<[1], [0], [0], [1], [0, 0, 1, 1], [], []>} : vector<1x128xf32>, vector<128x128xf32>, vector<1x128xf32> -> vector<1x128xf32>
    %266 = arith.addf %265, %25 : vector<1x128xf32>
    %267 = math.tanh %266 : vector<1x128xf32>
    %268 = vector.extract_strided_slice %14 {offsets = [6, 0], sizes = [1, 512], strides = [1, 1]} : vector<8x512xf32> to vector<1x512xf32>
    %cst_86 = arith.constant dense<0.000000e+00> : vector<1x512xf32>
    %269 = tpu.matmul %255, %20, %cst_86 {dimension_numbers = #tpu.dot_dimension_numbers<[1], [0], [0], [1], [0, 0, 1, 1], [], []>} : vector<1x128xf32>, vector<128x512xf32>, vector<1x512xf32> -> vector<1x512xf32>
    %270 = arith.addf %268, %269 : vector<1x512xf32>
    %271 = vector.extract_strided_slice %270 {offsets = [0, 0], sizes = [1, 128], strides = [1, 1]} : vector<1x512xf32> to vector<1x128xf32>
    %272 = arith.negf %271 : vector<1x128xf32>
    %273 = math.exp %272 : vector<1x128xf32>
    %cst_87 = arith.constant 1.000000e+00 : f32
    %274 = vector.broadcast %cst_87 : f32 to vector<1x128xf32>
    %275 = arith.addf %274, %273 : vector<1x128xf32>
    %276 = arith.divf %274, %275 : vector<1x128xf32>
    %277 = vector.extract_strided_slice %270 {offsets = [0, 128], sizes = [1, 128], strides = [1, 1]} : vector<1x512xf32> to vector<1x128xf32>
    %278 = arith.negf %277 : vector<1x128xf32>
    %279 = math.exp %278 : vector<1x128xf32>
    %cst_88 = arith.constant 1.000000e+00 : f32
    %280 = vector.broadcast %cst_88 : f32 to vector<1x128xf32>
    %281 = arith.addf %280, %279 : vector<1x128xf32>
    %282 = arith.divf %280, %281 : vector<1x128xf32>
    %283 = vector.extract_strided_slice %270 {offsets = [0, 256], sizes = [1, 128], strides = [1, 1]} : vector<1x512xf32> to vector<1x128xf32>
    %284 = math.tanh %283 : vector<1x128xf32>
    %285 = vector.extract_strided_slice %270 {offsets = [0, 384], sizes = [1, 128], strides = [1, 1]} : vector<1x512xf32> to vector<1x128xf32>
    %286 = arith.negf %285 : vector<1x128xf32>
    %287 = math.exp %286 : vector<1x128xf32>
    %cst_89 = arith.constant 1.000000e+00 : f32
    %288 = vector.broadcast %cst_89 : f32 to vector<1x128xf32>
    %289 = arith.addf %288, %287 : vector<1x128xf32>
    %290 = arith.divf %288, %289 : vector<1x128xf32>
    %291 = arith.mulf %282, %253 : vector<1x128xf32>
    %292 = arith.mulf %276, %284 : vector<1x128xf32>
    %293 = arith.addf %291, %292 : vector<1x128xf32>
    %294 = math.tanh %293 : vector<1x128xf32>
    %295 = arith.mulf %290, %294 : vector<1x128xf32>
    %296 = vector.extract_strided_slice %19 {offsets = [6, 0], sizes = [1, 128], strides = [1, 1]} : vector<8x128xf32> to vector<1x128xf32>
    %cst_90 = arith.constant dense<0.000000e+00> : vector<1x128xf32>
    %297 = tpu.matmul %295, %21, %cst_90 {dimension_numbers = #tpu.dot_dimension_numbers<[1], [0], [0], [1], [0, 0, 1, 1], [], []>} : vector<1x128xf32>, vector<128x128xf32>, vector<1x128xf32> -> vector<1x128xf32>
    %298 = arith.addf %296, %297 : vector<1x128xf32>
    %cst_91 = arith.constant 0.000000e+00 : f32
    %299 = vector.broadcast %cst_91 : f32 to vector<1x128xf32>
    %300 = arith.maximumf %298, %299 : vector<1x128xf32>
    %cst_92 = arith.constant dense<0.000000e+00> : vector<1x128xf32>
    %301 = tpu.matmul %300, %22, %cst_92 {dimension_numbers = #tpu.dot_dimension_numbers<[1], [0], [0], [1], [0, 0, 1, 1], [], []>} : vector<1x128xf32>, vector<128x128xf32>, vector<1x128xf32> -> vector<1x128xf32>
    %302 = arith.addf %301, %23 : vector<1x128xf32>
    %cst_93 = arith.constant 0.000000e+00 : f32
    %303 = vector.broadcast %cst_93 : f32 to vector<1x128xf32>
    %304 = arith.maximumf %302, %303 : vector<1x128xf32>
    %cst_94 = arith.constant dense<0.000000e+00> : vector<1x128xf32>
    %305 = tpu.matmul %304, %24, %cst_94 {dimension_numbers = #tpu.dot_dimension_numbers<[1], [0], [0], [1], [0, 0, 1, 1], [], []>} : vector<1x128xf32>, vector<128x128xf32>, vector<1x128xf32> -> vector<1x128xf32>
    %306 = arith.addf %305, %25 : vector<1x128xf32>
    %307 = math.tanh %306 : vector<1x128xf32>
    %308 = vector.extract_strided_slice %14 {offsets = [7, 0], sizes = [1, 512], strides = [1, 1]} : vector<8x512xf32> to vector<1x512xf32>
    %cst_95 = arith.constant dense<0.000000e+00> : vector<1x512xf32>
    %309 = tpu.matmul %295, %20, %cst_95 {dimension_numbers = #tpu.dot_dimension_numbers<[1], [0], [0], [1], [0, 0, 1, 1], [], []>} : vector<1x128xf32>, vector<128x512xf32>, vector<1x512xf32> -> vector<1x512xf32>
    %310 = arith.addf %308, %309 : vector<1x512xf32>
    %311 = vector.extract_strided_slice %310 {offsets = [0, 0], sizes = [1, 128], strides = [1, 1]} : vector<1x512xf32> to vector<1x128xf32>
    %312 = arith.negf %311 : vector<1x128xf32>
    %313 = math.exp %312 : vector<1x128xf32>
    %cst_96 = arith.constant 1.000000e+00 : f32
    %314 = vector.broadcast %cst_96 : f32 to vector<1x128xf32>
    %315 = arith.addf %314, %313 : vector<1x128xf32>
    %316 = arith.divf %314, %315 : vector<1x128xf32>
    %317 = vector.extract_strided_slice %310 {offsets = [0, 128], sizes = [1, 128], strides = [1, 1]} : vector<1x512xf32> to vector<1x128xf32>
    %318 = arith.negf %317 : vector<1x128xf32>
    %319 = math.exp %318 : vector<1x128xf32>
    %cst_97 = arith.constant 1.000000e+00 : f32
    %320 = vector.broadcast %cst_97 : f32 to vector<1x128xf32>
    %321 = arith.addf %320, %319 : vector<1x128xf32>
    %322 = arith.divf %320, %321 : vector<1x128xf32>
    %323 = vector.extract_strided_slice %310 {offsets = [0, 256], sizes = [1, 128], strides = [1, 1]} : vector<1x512xf32> to vector<1x128xf32>
    %324 = math.tanh %323 : vector<1x128xf32>
    %325 = vector.extract_strided_slice %310 {offsets = [0, 384], sizes = [1, 128], strides = [1, 1]} : vector<1x512xf32> to vector<1x128xf32>
    %326 = arith.negf %325 : vector<1x128xf32>
    %327 = math.exp %326 : vector<1x128xf32>
    %cst_98 = arith.constant 1.000000e+00 : f32
    %328 = vector.broadcast %cst_98 : f32 to vector<1x128xf32>
    %329 = arith.addf %328, %327 : vector<1x128xf32>
    %330 = arith.divf %328, %329 : vector<1x128xf32>
    %331 = arith.mulf %322, %293 : vector<1x128xf32>
    %332 = arith.mulf %316, %324 : vector<1x128xf32>
    %333 = arith.addf %331, %332 : vector<1x128xf32>
    %334 = math.tanh %333 : vector<1x128xf32>
    %335 = arith.mulf %330, %334 : vector<1x128xf32>
    %336 = vector.extract_strided_slice %19 {offsets = [7, 0], sizes = [1, 128], strides = [1, 1]} : vector<8x128xf32> to vector<1x128xf32>
    %cst_99 = arith.constant dense<0.000000e+00> : vector<1x128xf32>
    %337 = tpu.matmul %335, %21, %cst_99 {dimension_numbers = #tpu.dot_dimension_numbers<[1], [0], [0], [1], [0, 0, 1, 1], [], []>} : vector<1x128xf32>, vector<128x128xf32>, vector<1x128xf32> -> vector<1x128xf32>
    %338 = arith.addf %336, %337 : vector<1x128xf32>
    %cst_100 = arith.constant 0.000000e+00 : f32
    %339 = vector.broadcast %cst_100 : f32 to vector<1x128xf32>
    %340 = arith.maximumf %338, %339 : vector<1x128xf32>
    %cst_101 = arith.constant dense<0.000000e+00> : vector<1x128xf32>
    %341 = tpu.matmul %340, %22, %cst_101 {dimension_numbers = #tpu.dot_dimension_numbers<[1], [0], [0], [1], [0, 0, 1, 1], [], []>} : vector<1x128xf32>, vector<128x128xf32>, vector<1x128xf32> -> vector<1x128xf32>
    %342 = arith.addf %341, %23 : vector<1x128xf32>
    %cst_102 = arith.constant 0.000000e+00 : f32
    %343 = vector.broadcast %cst_102 : f32 to vector<1x128xf32>
    %344 = arith.maximumf %342, %343 : vector<1x128xf32>
    %cst_103 = arith.constant dense<0.000000e+00> : vector<1x128xf32>
    %345 = tpu.matmul %344, %24, %cst_103 {dimension_numbers = #tpu.dot_dimension_numbers<[1], [0], [0], [1], [0, 0, 1, 1], [], []>} : vector<1x128xf32>, vector<128x128xf32>, vector<1x128xf32> -> vector<1x128xf32>
    %346 = arith.addf %345, %25 : vector<1x128xf32>
    %347 = math.tanh %346 : vector<1x128xf32>
    %348 = tpu.concatenate %67, %107, %147, %187, %227, %267, %307, %347 in 0 : vector<1x128xf32>, vector<1x128xf32>, vector<1x128xf32>, vector<1x128xf32>, vector<1x128xf32>, vector<1x128xf32>, vector<1x128xf32>, vector<1x128xf32> -> vector<8x128xf32>
    %c0_104 = arith.constant 0 : index
    %c0_105 = arith.constant 0 : index
    %349 = vector.load %arg15[%c0_104, %c0_105] : memref<8x128xf32, #tpu.memory_space<vmem>>, vector<8x128xf32>
    tpu.vector_store %arg15[%c0_104, %c0_105], %348 {strides = array<i32>} : memref<8x128xf32, #tpu.memory_space<vmem>>, vector<8x128xf32>,
    %350 = tpu.concatenate %55, %95, %135, %175, %215, %255, %295, %335 in 0 : vector<1x128xf32>, vector<1x128xf32>, vector<1x128xf32>, vector<1x128xf32>, vector<1x128xf32>, vector<1x128xf32>, vector<1x128xf32>, vector<1x128xf32> -> vector<8x128xf32>
    %c0_106 = arith.constant 0 : index
    %c0_107 = arith.constant 0 : index
    %351 = vector.load %arg16[%c0_106, %c0_107] : memref<8x128xf32, #tpu.memory_space<vmem>>, vector<8x128xf32>
    tpu.vector_store %arg16[%c0_106, %c0_107], %350 {strides = array<i32>} : memref<8x128xf32, #tpu.memory_space<vmem>>, vector<8x128xf32>,
    %352 = tpu.concatenate %53, %93, %133, %173, %213, %253, %293, %333 in 0 : vector<1x128xf32>, vector<1x128xf32>, vector<1x128xf32>, vector<1x128xf32>, vector<1x128xf32>, vector<1x128xf32>, vector<1x128xf32>, vector<1x128xf32> -> vector<8x128xf32>
    %c0_108 = arith.constant 0 : index
    %c0_109 = arith.constant 0 : index
    %353 = vector.load %arg17[%c0_108, %c0_109] : memref<8x128xf32, #tpu.memory_space<vmem>>, vector<8x128xf32>
    tpu.vector_store %arg17[%c0_108, %c0_109], %352 {strides = array<i32>} : memref<8x128xf32, #tpu.memory_space<vmem>>, vector<8x128xf32>,
    return
  }
}

</mosaic_0001>

<llo_original>
// kernel: actor_rollout.1
$region0: #{actor_rollout.1}
  #allocation0 [shape = 'u32[]', space=smem, size = 0x4, offset = 0x4, fixed_abs, tag = 'smem constant byte address 0x4 - core index']
  #allocation1 [shape = 'u32[144,128]{1,0:T(1,128)}', space=vmem, size = 0x12000, scoped, tag = 'internal scratch']
  %s0 = inlined_call_operand.vmem [shape: f32[8,20], index: 0, kind: input, shape index: {}]
  %s1 = inlined_call_operand.hbm [shape: f32[1,128], index: 1, kind: input, shape index: {}]
  %s2 = inlined_call_operand.hbm [shape: f32[1,128], index: 2, kind: input, shape index: {}]
  %s3 = inlined_call_operand.vmem [shape: f32[20,256], index: 3, kind: input, shape index: {}]
  %s4 = inlined_call_operand.vmem [shape: f32[1,256], index: 4, kind: input, shape index: {}]
  %s5 = inlined_call_operand.vmem [shape: f32[128,512], index: 5, kind: input, shape index: {}]
  %s6 = inlined_call_operand.vmem [shape: f32[128,512], index: 6, kind: input, shape index: {}]
  %s7 = inlined_call_operand.vmem [shape: f32[1,512], index: 7, kind: input, shape index: {}]
  %s8 = inlined_call_operand.vmem [shape: f32[128,128], index: 8, kind: input, shape index: {}]
  %s9 = inlined_call_operand.vmem [shape: f32[128,128], index: 9, kind: input, shape index: {}]
  %s10 = inlined_call_operand.hbm [shape: f32[1,128], index: 10, kind: input, shape index: {}]
  %s11 = inlined_call_operand.hbm [shape: f32[128,128], index: 11, kind: input, shape index: {}]
  %s12 = inlined_call_operand.vmem [shape: f32[1,128], index: 12, kind: input, shape index: {}]
  %s13 = inlined_call_operand.vmem [shape: f32[128,128], index: 13, kind: input, shape index: {}]
  %s14 = inlined_call_operand.vmem [shape: f32[1,128], index: 14, kind: input, shape index: {}]
  %s15 = inlined_call_operand.vmem [shape: f32[8,128], index: 15, kind: output, shape index: {0}]
  %s16 = inlined_call_operand.hbm [shape: f32[8,128], index: 16, kind: output, shape index: {1}]
  %s17 = inlined_call_operand.hbm [shape: f32[8,128], index: 17, kind: output, shape index: {2}]
  %18 = xla_tuple %s15, %s16, %s17
  %s19 = sld [smem:[#allocation0]]
  $region102: #{actor_rollout.1} parent=0
    _
  %s21 = ssub.s32 1, %s19
  %s22 = scalar_select 0, %s21, %s19
  $region1: #{actor_rollout.1} parent=0
    #allocation2 [shape = 'u8[512]{0}', space=vmem, size = 0x400, scoped, tag = 'input window, operand 1, single buffered']
    #allocation3 [shape = 's32[1]{0}', space=sflag, size = 0x4, scoped, tag = 'scoped memory for actor_rollout.1']
    #allocation4 [shape = 's32[1]{0}', space=sflag, size = 0x4, scoped, tag = 'scoped memory for actor_rollout.1']
    #allocation5 [shape = 'u8[512]{0}', space=vmem, size = 0x400, scoped, tag = 'input window, operand 2, single buffered']
    #allocation6 [shape = 's32[1]{0}', space=sflag, size = 0x4, scoped, tag = 'scoped memory for actor_rollout.1']
    #allocation7 [shape = 'u8[512]{0}', space=vmem, size = 0x400, scoped, tag = 'input window, operand 10, single buffered']
    #allocation8 [shape = 'u8[65536]{0}', space=vmem, size = 0x10000, scoped, tag = 'input window, operand 11, single buffered']
    #allocation9 [shape = 's32[1]{0}', space=sflag, size = 0x4, scoped, tag = 'scoped memory for actor_rollout.1']
    #allocation10 [shape = 'u8[4096]{0}', space=vmem, size = 0x1000, scoped, tag = 'output window, operand 1, single buffered']
    #allocation11 [shape = 'u8[4096]{0}', space=vmem, size = 0x1000, scoped, tag = 'output window, operand 2, single buffered']
    #allocation12 [shape = 's32[1]{0}', space=sflag, size = 0x4, scoped, tag = 'scoped memory for actor_rollout.1']
    %23 = vsyncpa [#allocation3], 0
    %24 = vsyncpa [#allocation6], 0
    %25 = vsyncpa [#allocation9], 0
    %26 = vsyncpa [#allocation4], 0
    %27 = vsyncpa [#allocation12], 0
    // Predicated region
    $region2: #{actor_rollout.1} parent=1 // pred_check
      _
    $region3: #{actor_rollout.1} parent=1 // pred_check_branch
      %29 = sbr.rel (0) target = $region5
    $region4: #{actor_rollout.1} parent=1 // pred_region
      _
    $region5: #{actor_rollout.1} parent=1 // pred_fallthru
      _
    // Predicated region
    $region6: #{actor_rollout.1} parent=1 // pred_check
      _
    $region7: #{actor_rollout.1} parent=1 // pred_check_branch
      %31 = sbr.rel (0) target = $region9
    $region8: #{actor_rollout.1} parent=1 // pred_region
      %s33 = ssub.s32 16, 16
      %34 = vsyncadd [#allocation3], %s33
      %s36 = sshll.u32 [#allocation2], 4
      %s37 = int_to_ptr.vmem [resolvable:$true] %s36
      %39 = dma.hbm_to_vmem [thread:$0]  %s1, 16, %s37, [#allocation3]
    $region9: #{actor_rollout.1} parent=1 // pred_fallthru
      _
    // Predicated region
    $region10: #{actor_rollout.1} parent=1 // pred_check
      _
    $region11: #{actor_rollout.1} parent=1 // pred_check_branch
      %41 = sbr.rel (0) target = $region13
    $region12: #{actor_rollout.1} parent=1 // pred_region
      %s43 = ssub.s32 16, 16
      %44 = vsyncadd [#allocation6], %s43
      %s46 = sshll.u32 [#allocation5], 4
      %s47 = int_to_ptr.vmem [resolvable:$true] %s46
      %49 = dma.hbm_to_vmem [thread:$0]  %s2, 16, %s47, [#allocation6]
    $region13: #{actor_rollout.1} parent=1 // pred_fallthru
      _
    // Predicated region
    $region14: #{actor_rollout.1} parent=1 // pred_check
      _
    $region15: #{actor_rollout.1} parent=1 // pred_check_branch
      %51 = sbr.rel (0) target = $region17
    $region16: #{actor_rollout.1} parent=1 // pred_region
      _
    $region17: #{actor_rollout.1} parent=1 // pred_fallthru
      _
    // Predicated region
    $region18: #{actor_rollout.1} parent=1 // pred_check
      _
    $region19: #{actor_rollout.1} parent=1 // pred_check_branch
      %53 = sbr.rel (0) target = $region21
    $region20: #{actor_rollout.1} parent=1 // pred_region
      _
    $region21: #{actor_rollout.1} parent=1 // pred_fallthru
      _
    // Predicated region
    $region22: #{actor_rollout.1} parent=1 // pred_check
      _
    $region23: #{actor_rollout.1} parent=1 // pred_check_branch
      %55 = sbr.rel (0) target = $region25
    $region24: #{actor_rollout.1} parent=1 // pred_region
      _
    $region25: #{actor_rollout.1} parent=1 // pred_fallthru
      _
    // Predicated region
    $region26: #{actor_rollout.1} parent=1 // pred_check
      _
    $region27: #{actor_rollout.1} parent=1 // pred_check_branch
      %57 = sbr.rel (0) target = $region29
    $region28: #{actor_rollout.1} parent=1 // pred_region
      _
    $region29: #{actor_rollout.1} parent=1 // pred_fallthru
      _
    // Predicated region
    $region30: #{actor_rollout.1} parent=1 // pred_check
      _
    $region31: #{actor_rollout.1} parent=1 // pred_check_branch
      %59 = sbr.rel (0) target = $region33
    $region32: #{actor_rollout.1} parent=1 // pred_region
      _
    $region33: #{actor_rollout.1} parent=1 // pred_fallthru
      _
    // Predicated region
    $region34: #{actor_rollout.1} parent=1 // pred_check
      _
    $region35: #{actor_rollout.1} parent=1 // pred_check_branch
      %61 = sbr.rel (0) target = $region37
    $region36: #{actor_rollout.1} parent=1 // pred_region
      _
    $region37: #{actor_rollout.1} parent=1 // pred_fallthru
      _
    // Predicated region
    $region38: #{actor_rollout.1} parent=1 // pred_check
      _
    $region39: #{actor_rollout.1} parent=1 // pred_check_branch
      %63 = sbr.rel (0) target = $region41
    $region40: #{actor_rollout.1} parent=1 // pred_region
      _
    $region41: #{actor_rollout.1} parent=1 // pred_fallthru
      _
    // Predicated region
    $region42: #{actor_rollout.1} parent=1 // pred_check
      _
    $region43: #{actor_rollout.1} parent=1 // pred_check_branch
      %65 = sbr.rel (0) target = $region45
    $region44: #{actor_rollout.1} parent=1 // pred_region
      %s67 = ssub.s32 16, 16
      %68 = vsyncadd [#allocation6], %s67
      %s70 = sshll.u32 [#allocation7], 4
      %s71 = int_to_ptr.vmem [resolvable:$true] %s70
      %73 = dma.hbm_to_vmem [thread:$0]  %s10, 16, %s71, [#allocation6]
    $region45: #{actor_rollout.1} parent=1 // pred_fallthru
      _
    // Predicated region
    $region46: #{actor_rollout.1} parent=1 // pred_check
      _
    $region47: #{actor_rollout.1} parent=1 // pred_check_branch
      %75 = sbr.rel (0) target = $region49
    $region48: #{actor_rollout.1} parent=1 // pred_region
      %s77 = ssub.s32 2048, 2048
      %78 = vsyncadd [#allocation9], %s77
      %s79 = sshll.u32 [#allocation8], 4
      %s80 = int_to_ptr.vmem [resolvable:$true] %s79
      %85 = dma.hbm_to_vmem [thread:$0]  %s11, 2048, %s80, [#allocation9], 128, 128, 8
    $region49: #{actor_rollout.1} parent=1 // pred_fallthru
      _
    // Predicated region
    $region50: #{actor_rollout.1} parent=1 // pred_check
      _
    $region51: #{actor_rollout.1} parent=1 // pred_check_branch
      %87 = sbr.rel (0) target = $region53
    $region52: #{actor_rollout.1} parent=1 // pred_region
      _
    $region53: #{actor_rollout.1} parent=1 // pred_fallthru
      _
    // Predicated region
    $region54: #{actor_rollout.1} parent=1 // pred_check
      _
    $region55: #{actor_rollout.1} parent=1 // pred_check_branch
      %89 = sbr.rel (0) target = $region57
    $region56: #{actor_rollout.1} parent=1 // pred_region
      _
    $region57: #{actor_rollout.1} parent=1 // pred_fallthru
      _
    // Predicated region
    $region58: #{actor_rollout.1} parent=1 // pred_check
      _
    $region59: #{actor_rollout.1} parent=1 // pred_check_branch
      %91 = sbr.rel (0) target = $region61
    $region60: #{actor_rollout.1} parent=1 // pred_region
      _
    $region61: #{actor_rollout.1} parent=1 // pred_fallthru
      _
    // Predicated region
    $region62: #{actor_rollout.1} parent=1 // pred_check
      _
    $region63: #{actor_rollout.1} parent=1 // pred_check_branch
      %93 = sbr.rel (0) target = $region65
    $region64: #{actor_rollout.1} parent=1 // pred_region
      %94 = dma.done [#allocation3], 16
    $region65: #{actor_rollout.1} parent=1 // pred_fallthru
      _
    // Predicated region
    $region66: #{actor_rollout.1} parent=1 // pred_check
      _
    $region67: #{actor_rollout.1} parent=1 // pred_check_branch
      %96 = sbr.rel (0) target = $region69
    $region68: #{actor_rollout.1} parent=1 // pred_region
      %97 = dma.done [#allocation6], 16
    $region69: #{actor_rollout.1} parent=1 // pred_fallthru
      _
    // Predicated region
    $region70: #{actor_rollout.1} parent=1 // pred_check
      _
    $region71: #{actor_rollout.1} parent=1 // pred_check_branch
      %99 = sbr.rel (0) target = $region73
    $region72: #{actor_rollout.1} parent=1 // pred_region
      %100 = dma.done [#allocation6], 16
    $region73: #{actor_rollout.1} parent=1 // pred_fallthru
      _
    // Predicated region
    $region74: #{actor_rollout.1} parent=1 // pred_check
      _
    $region75: #{actor_rollout.1} parent=1 // pred_check_branch
      %102 = sbr.rel (0) target = $region77
    $region76: #{actor_rollout.1} parent=1 // pred_region
      %103 = dma.done [#allocation9], 2048
    $region77: #{actor_rollout.1} parent=1 // pred_fallthru
      _
    %v104 = vld [vmem:[%s0] sm:$0xff]
    %v105 = vld [vmem:[%s3] sm:$0xff]
    %v106 = vld [vmem:[%s3 + $0x8] sm:$0xff]
    %v107 = vld [vmem:[%s3 + $0x10] sm:$0xff]
    %v108 = vld [vmem:[%s3 + $0x18] sm:$0xff]
    %v109 = vld [vmem:[%s3 + $0x20] sm:$0xf]
    %v110 = vld [vmem:[%s3 + $0x28] sm:$0xf]
    %v111 = vld [vmem:[%s4] sm:$0x3]
    %v113 = vlaneseq
    %v114 = vshrl.u32 %v113, 7
    %v115 = vsub.s32 0, %v114
    %v116 = vrot.slane %v111, %v115
    %v117 = vlaneseq
    %v118 = vshrl.u32 %v117, 7
    %v119 = vsub.s32 1, %v118
    %v120 = vrot.slane %v111, %v119
    %vm123 = vcmask 162816
    %v125 = vsel %vm123, %v104, 0
    %vm127 = vcmask 1043456
    %v129 = vsel %vm127, %v109, 0
    %v132 = vsel %vm127, %v110, 0
    %134 = vmatprep.subr.mxu0 %v106
    %135 = vmatpush1.msra.mxu0 %v105
    %136 = vmatprep.subr.mxu0 %v108
    %137 = vmatpush1.msra.mxu0 %v107
    %138 = vmatprep.subr.mxu0 %v132
    %139 = vmatpush1.msra.mxu0 %v129
    %140 = vmatprep.subr.mxu0 0.0
    %141 = vmatpush1.msra.mxu0 0.0
    %142 = vmatprep.subr.mxu0 0.0
    %143 = vmatpush1.msra.mxu0 0.0
    %144 = vmatprep.subr.mxu0 0.0
    %145 = vmatpush1.msra.mxu0 0.0
    %146 = vmatprep.subr.mxu0 0.0
    %147 = vmatpush1.msra.mxu0 0.0
    %148 = vmatprep.subr.mxu0 0.0
    %149 = vmatpush1.msra.mxu0 0.0
    %150 = vmatprep.subr.mxu0 0.0
    %151 = vmatpush1.msra.mxu0 0.0
    %152 = vmatprep.subr.mxu0 0.0
    %153 = vmatpush1.msra.mxu0 0.0
    %154 = vmatprep.subr.mxu0 0.0
    %155 = vmatpush1.msra.mxu0 0.0
    %156 = vmatprep.subr.mxu0 0.0
    %157 = vmatpush1.msra.mxu0 0.0
    %158 = vmatprep.subr.mxu0 0.0
    %159 = vmatpush1.msra.mxu0 0.0
    %160 = vmatprep.subr.mxu0 0.0
    %161 = vmatpush1.msra.mxu0 0.0
    %162 = vmatprep.subr.mxu0 0.0
    %163 = vmatpush1.msra.mxu0 0.0
    %164 = vmatprep.subr.mxu0 0.0
    %165 = vmatpush1.msra.mxu0 0.0
    %166 = vmatprep.subr.mxu0 0.0
    %167 = vmatpush1.msra.mxu0 0.0
    %168 = vmatprep.subr.mxu0 0.0
    %169 = vmatpush1.msra.mxu0 0.0
    %170 = vmatprep.subr.mxu0 0.0
    %171 = vmatpush1.msra.mxu0 0.0
    %172 = vmatprep.subr.mxu0 0.0
    %173 = vmatpush1.msra.mxu0 0.0
    %174 = vmatprep.subr.mxu0 0.0
    %175 = vmatpush1.msra.mxu0 0.0
    %176 = vmatprep.subr.mxu0 0.0
    %177 = vmatpush1.msra.mxu0 0.0
    %178 = vmatprep.subr.mxu0 0.0
    %179 = vmatpush1.msra.mxu0 0.0
    %180 = vmatprep.subr.mxu0 0.0
    %181 = vmatpush1.msra.mxu0 0.0
    %182 = vmatprep.subr.mxu0 0.0
    %183 = vmatpush1.msra.mxu0 0.0
    %184 = vmatprep.subr.mxu0 0.0
    %185 = vmatpush1.msra.mxu0 0.0
    %186 = vmatprep.subr.mxu0 0.0
    %187 = vmatpush1.msra.mxu0 0.0
    %188 = vmatprep.subr.mxu0 0.0
    %189 = vmatpush1.msra.mxu0 0.0
    %190 = vmatprep.subr.mxu0 0.0
    %191 = vmatpush1.msra.mxu0 0.0
    %192 = vmatprep.subr.mxu0 0.0
    %193 = vmatpush1.msra.mxu0 0.0
    %194 = vmatprep.subr.mxu0 0.0
    %195 = vmatpush1.msra.mxu0 0.0
    %196 = vmatprep.subr.mxu0 0.0
    %197 = vmatpush1.msra.mxu0 0.0
    %198 = vmatprep.mubr.f32.mxu0 0.0
    %199 = vmatmul.mubr.f32.gmra.mrb[0].mxu0 %v125
    %v200 = vpop.f32.mrb[0].mxu0
    %v201 = vadd.f32 %v116, %v200
    %v202 = vpop.f32.mrb[0].mxu0
    %v203 = vadd.f32 %v120, %v202
    %204 = vdwg.mxu0
    %v205 = vmax.f32 %v201, 0.0
    %v206 = vmax.f32 %v203, 0.0
    %v207 = vld [vmem:[%s5] sm:$0xff]
    %v208 = vld [vmem:[%s5 + $0x8] sm:$0xff]
    %v209 = vld [vmem:[%s5 + $0x10] sm:$0xff]
    %v210 = vld [vmem:[%s5 + $0x18] sm:$0xff]
    %v211 = vld [vmem:[%s5 + $0x20] sm:$0xff]
    %v212 = vld [vmem:[%s5 + $0x28] sm:$0xff]
    %v213 = vld [vmem:[%s5 + $0x30] sm:$0xff]
    %v214 = vld [vmem:[%s5 + $0x38] sm:$0xff]
    %v215 = vld [vmem:[%s5 + $0x40] sm:$0xff]
    %v216 = vld [vmem:[%s5 + $0x48] sm:$0xff]
    %v217 = vld [vmem:[%s5 + $0x50] sm:$0xff]
    %v218 = vld [vmem:[%s5 + $0x58] sm:$0xff]
    %v219 = vld [vmem:[%s5 + $0x60] sm:$0xff]
    %v220 = vld [vmem:[%s5 + $0x68] sm:$0xff]
    %v221 = vld [vmem:[%s5 + $0x70] sm:$0xff]
    %v222 = vld [vmem:[%s5 + $0x78] sm:$0xff]
    %v223 = vld [vmem:[%s5 + $0x80] sm:$0xff]
    %v224 = vld [vmem:[%s5 + $0x88] sm:$0xff]
    %v225 = vld [vmem:[%s5 + $0x90] sm:$0xff]
    %v226 = vld [vmem:[%s5 + $0x98] sm:$0xff]
    %v227 = vld [vmem:[%s5 + $0xa0] sm:$0xff]
    %v228 = vld [vmem:[%s5 + $0xa8] sm:$0xff]
    %v229 = vld [vmem:[%s5 + $0xb0] sm:$0xff]
    %v230 = vld [vmem:[%s5 + $0xb8] sm:$0xff]
    %v231 = vld [vmem:[%s5 + $0xc0] sm:$0xff]
    %v232 = vld [vmem:[%s5 + $0xc8] sm:$0xff]
    %v233 = vld [vmem:[%s5 + $0xd0] sm:$0xff]
    %v234 = vld [vmem:[%s5 + $0xd8] sm:$0xff]
    %v235 = vld [vmem:[%s5 + $0xe0] sm:$0xff]
    %v236 = vld [vmem:[%s5 + $0xe8] sm:$0xff]
    %v237 = vld [vmem:[%s5 + $0xf0] sm:$0xff]
    %v238 = vld [vmem:[%s5 + $0xf8] sm:$0xff]
    %v239 = vld [vmem:[%s5 + $0x100] sm:$0xff]
    %v240 = vld [vmem:[%s5 + $0x108] sm:$0xff]
    %v241 = vld [vmem:[%s5 + $0x110] sm:$0xff]
    %v242 = vld [vmem:[%s5 + $0x118] sm:$0xff]
    %v243 = vld [vmem:[%s5 + $0x120] sm:$0xff]
    %v244 = vld [vmem:[%s5 + $0x128] sm:$0xff]
    %v245 = vld [vmem:[%s5 + $0x130] sm:$0xff]
    %v246 = vld [vmem:[%s5 + $0x138] sm:$0xff]
    %v247 = vld [vmem:[%s5 + $0x140] sm:$0xff]
    %v248 = vld [vmem:[%s5 + $0x148] sm:$0xff]
    %v249 = vld [vmem:[%s5 + $0x150] sm:$0xff]
    %v250 = vld [vmem:[%s5 + $0x158] sm:$0xff]
    %v251 = vld [vmem:[%s5 + $0x160] sm:$0xff]
    %v252 = vld [vmem:[%s5 + $0x168] sm:$0xff]
    %v253 = vld [vmem:[%s5 + $0x170] sm:$0xff]
    %v254 = vld [vmem:[%s5 + $0x178] sm:$0xff]
    %v255 = vld [vmem:[%s5 + $0x180] sm:$0xff]
    %v256 = vld [vmem:[%s5 + $0x188] sm:$0xff]
    %v257 = vld [vmem:[%s5 + $0x190] sm:$0xff]
    %v258 = vld [vmem:[%s5 + $0x198] sm:$0xff]
    %v259 = vld [vmem:[%s5 + $0x1a0] sm:$0xff]
    %v260 = vld [vmem:[%s5 + $0x1a8] sm:$0xff]
    %v261 = vld [vmem:[%s5 + $0x1b0] sm:$0xff]
    %v262 = vld [vmem:[%s5 + $0x1b8] sm:$0xff]
    %v263 = vld [vmem:[%s5 + $0x1c0] sm:$0xff]
    %v264 = vld [vmem:[%s5 + $0x1c8] sm:$0xff]
    %v265 = vld [vmem:[%s5 + $0x1d0] sm:$0xff]
    %v266 = vld [vmem:[%s5 + $0x1d8] sm:$0xff]
    %v267 = vld [vmem:[%s5 + $0x1e0] sm:$0xff]
    %v268 = vld [vmem:[%s5 + $0x1e8] sm:$0xff]
    %v269 = vld [vmem:[%s5 + $0x1f0] sm:$0xff]
    %v270 = vld [vmem:[%s5 + $0x1f8] sm:$0xff]
    %v271 = vld [vmem:[%s7] sm:$0xf]
    %v273 = vlaneseq
    %v274 = vshrl.u32 %v273, 7
    %v275 = vsub.s32 0, %v274
    %v276 = vrot.slane %v271, %v275
    %v277 = vlaneseq
    %v278 = vshrl.u32 %v277, 7
    %v279 = vsub.s32 1, %v278
    %v280 = vrot.slane %v271, %v279
    %v281 = vlaneseq
    %v282 = vshrl.u32 %v281, 7
    %v283 = vsub.s32 2, %v282
    %v284 = vrot.slane %v271, %v283
    %v285 = vlaneseq
    %v286 = vshrl.u32 %v285, 7
    %v287 = vsub.s32 3, %v286
    %v288 = vrot.slane %v271, %v287
    %293 = vmatprep.subr.mxu0 %v208
    %294 = vmatpush1.msra.mxu0 %v207
    %295 = vmatprep.subr.mxu0 %v212
    %296 = vmatpush1.msra.mxu0 %v211
    %297 = vmatprep.subr.mxu0 %v216
    %298 = vmatpush1.msra.mxu0 %v215
    %299 = vmatprep.subr.mxu0 %v220
    %300 = vmatpush1.msra.mxu0 %v219
    %301 = vmatprep.subr.mxu0 %v224
    %302 = vmatpush1.msra.mxu0 %v223
    %303 = vmatprep.subr.mxu0 %v228
    %304 = vmatpush1.msra.mxu0 %v227
    %305 = vmatprep.subr.mxu0 %v232
    %306 = vmatpush1.msra.mxu0 %v231
    %307 = vmatprep.subr.mxu0 %v236
    %308 = vmatpush1.msra.mxu0 %v235
    %309 = vmatprep.subr.mxu0 %v240
    %310 = vmatpush1.msra.mxu0 %v239
    %311 = vmatprep.subr.mxu0 %v244
    %312 = vmatpush1.msra.mxu0 %v243
    %313 = vmatprep.subr.mxu0 %v248
    %314 = vmatpush1.msra.mxu0 %v247
    %315 = vmatprep.subr.mxu0 %v252
    %316 = vmatpush1.msra.mxu0 %v251
    %317 = vmatprep.subr.mxu0 %v256
    %318 = vmatpush1.msra.mxu0 %v255
    %319 = vmatprep.subr.mxu0 %v260
    %320 = vmatpush1.msra.mxu0 %v259
    %321 = vmatprep.subr.mxu0 %v264
    %322 = vmatpush1.msra.mxu0 %v263
    %323 = vmatprep.subr.mxu0 %v268
    %324 = vmatpush1.msra.mxu0 %v267
    %325 = vmatprep.subr.mxu0 0.0
    %326 = vmatpush1.msra.mxu0 0.0
    %327 = vmatprep.subr.mxu0 0.0
    %328 = vmatpush1.msra.mxu0 0.0
    %329 = vmatprep.subr.mxu0 0.0
    %330 = vmatpush1.msra.mxu0 0.0
    %331 = vmatprep.subr.mxu0 0.0
    %332 = vmatpush1.msra.mxu0 0.0
    %333 = vmatprep.subr.mxu0 0.0
    %334 = vmatpush1.msra.mxu0 0.0
    %335 = vmatprep.subr.mxu0 0.0
    %336 = vmatpush1.msra.mxu0 0.0
    %337 = vmatprep.subr.mxu0 0.0
    %338 = vmatpush1.msra.mxu0 0.0
    %339 = vmatprep.subr.mxu0 0.0
    %340 = vmatpush1.msra.mxu0 0.0
    %341 = vmatprep.subr.mxu0 0.0
    %342 = vmatpush1.msra.mxu0 0.0
    %343 = vmatprep.subr.mxu0 0.0
    %344 = vmatpush1.msra.mxu0 0.0
    %345 = vmatprep.subr.mxu0 0.0
    %346 = vmatpush1.msra.mxu0 0.0
    %347 = vmatprep.subr.mxu0 0.0
    %348 = vmatpush1.msra.mxu0 0.0
    %349 = vmatprep.subr.mxu0 0.0
    %350 = vmatpush1.msra.mxu0 0.0
    %351 = vmatprep.subr.mxu0 0.0
    %352 = vmatpush1.msra.mxu0 0.0
    %353 = vmatprep.subr.mxu0 0.0
    %354 = vmatpush1.msra.mxu0 0.0
    %355 = vmatprep.subr.mxu0 0.0
    %356 = vmatpush1.msra.mxu0 0.0
    %357 = vmatprep.mubr.f32.mxu0 0.0
    %358 = vmatmul.mubr.f32.gmra.mrb[0].mxu0 %v206
    %v359 = vpop.f32.mrb[0].mxu0
    %v360 = vadd.f32 %v276, %v359
    %v361 = vpop.f32.mrb[0].mxu0
    %v362 = vadd.f32 %v280, %v361
    %363 = vdwg.mxu0
    %364 = vmatprep.subr.mxu0 %v210
    %365 = vmatpush1.msra.mxu0 %v209
    %366 = vmatprep.subr.mxu0 %v214
    %367 = vmatpush1.msra.mxu0 %v213
    %368 = vmatprep.subr.mxu0 %v218
    %369 = vmatpush1.msra.mxu0 %v217
    %370 = vmatprep.subr.mxu0 %v222
    %371 = vmatpush1.msra.mxu0 %v221
    %372 = vmatprep.subr.mxu0 %v226
    %373 = vmatpush1.msra.mxu0 %v225
    %374 = vmatprep.subr.mxu0 %v230
    %375 = vmatpush1.msra.mxu0 %v229
    %376 = vmatprep.subr.mxu0 %v234
    %377 = vmatpush1.msra.mxu0 %v233
    %378 = vmatprep.subr.mxu0 %v238
    %379 = vmatpush1.msra.mxu0 %v237
    %380 = vmatprep.subr.mxu0 %v242
    %381 = vmatpush1.msra.mxu0 %v241
    %382 = vmatprep.subr.mxu0 %v246
    %383 = vmatpush1.msra.mxu0 %v245
    %384 = vmatprep.subr.mxu0 %v250
    %385 = vmatpush1.msra.mxu0 %v249
    %386 = vmatprep.subr.mxu0 %v254
    %387 = vmatpush1.msra.mxu0 %v253
    %388 = vmatprep.subr.mxu0 %v258
    %389 = vmatpush1.msra.mxu0 %v257
    %390 = vmatprep.subr.mxu0 %v262
    %391 = vmatpush1.msra.mxu0 %v261
    %392 = vmatprep.subr.mxu0 %v266
    %393 = vmatpush1.msra.mxu0 %v265
    %394 = vmatprep.subr.mxu0 %v270
    %395 = vmatpush1.msra.mxu0 %v269
    %396 = vmatprep.subr.mxu0 0.0
    %397 = vmatpush1.msra.mxu0 0.0
    %398 = vmatprep.subr.mxu0 0.0
    %399 = vmatpush1.msra.mxu0 0.0
    %400 = vmatprep.subr.mxu0 0.0
    %401 = vmatpush1.msra.mxu0 0.0
    %402 = vmatprep.subr.mxu0 0.0
    %403 = vmatpush1.msra.mxu0 0.0
    %404 = vmatprep.subr.mxu0 0.0
    %405 = vmatpush1.msra.mxu0 0.0
    %406 = vmatprep.subr.mxu0 0.0
    %407 = vmatpush1.msra.mxu0 0.0
    %408 = vmatprep.subr.mxu0 0.0
    %409 = vmatpush1.msra.mxu0 0.0
    %410 = vmatprep.subr.mxu0 0.0
    %411 = vmatpush1.msra.mxu0 0.0
    %412 = vmatprep.subr.mxu0 0.0
    %413 = vmatpush1.msra.mxu0 0.0
    %414 = vmatprep.subr.mxu0 0.0
    %415 = vmatpush1.msra.mxu0 0.0
    %416 = vmatprep.subr.mxu0 0.0
    %417 = vmatpush1.msra.mxu0 0.0
    %418 = vmatprep.subr.mxu0 0.0
    %419 = vmatpush1.msra.mxu0 0.0
    %420 = vmatprep.subr.mxu0 0.0
    %421 = vmatpush1.msra.mxu0 0.0
    %422 = vmatprep.subr.mxu0 0.0
    %423 = vmatpush1.msra.mxu0 0.0
    %424 = vmatprep.subr.mxu0 0.0
    %425 = vmatpush1.msra.mxu0 0.0
    %426 = vmatprep.subr.mxu0 0.0
    %427 = vmatpush1.msra.mxu0 0.0
    %428 = vmatprep.mubr.f32.mxu0 0.0
    %429 = vmatmul.mubr.f32.gmra.mrb[0].mxu0 %v206
    %v430 = vpop.f32.mrb[0].mxu0
    %v431 = vadd.f32 %v284, %v430
    %v432 = vpop.f32.mrb[0].mxu0
    %v433 = vadd.f32 %v288, %v432
    %434 = vdwg.mxu0
    %v435 = vld [vmem:[%s8] sm:$0xff]
    %v436 = vld [vmem:[%s8 + $0x8] sm:$0xff]
    %v437 = vld [vmem:[%s8 + $0x10] sm:$0xff]
    %v438 = vld [vmem:[%s8 + $0x18] sm:$0xff]
    %v439 = vld [vmem:[%s8 + $0x20] sm:$0xff]
    %v440 = vld [vmem:[%s8 + $0x28] sm:$0xff]
    %v441 = vld [vmem:[%s8 + $0x30] sm:$0xff]
    %v442 = vld [vmem:[%s8 + $0x38] sm:$0xff]
    %v443 = vld [vmem:[%s8 + $0x40] sm:$0xff]
    %v444 = vld [vmem:[%s8 + $0x48] sm:$0xff]
    %v445 = vld [vmem:[%s8 + $0x50] sm:$0xff]
    %v446 = vld [vmem:[%s8 + $0x58] sm:$0xff]
    %v447 = vld [vmem:[%s8 + $0x60] sm:$0xff]
    %v448 = vld [vmem:[%s8 + $0x68] sm:$0xff]
    %v449 = vld [vmem:[%s8 + $0x70] sm:$0xff]
    %v450 = vld [vmem:[%s8 + $0x78] sm:$0xff]
    %v451 = vld [vmem:[#allocation7] sm:$0x1]
    %v453 = vlaneseq
    %v454 = vshrl.u32 %v453, 7
    %v455 = vsub.s32 0, %v454
    %v456 = vrot.slane %v451, %v455
    %458 = vmatprep.subr.mxu0 0.0
    %459 = vmatpush1.msra.mxu0 %v435
    %460 = vmatprep.subr.mxu0 0.0
    %461 = vmatpush1.msra.mxu0 %v436
    %462 = vmatprep.subr.mxu0 0.0
    %463 = vmatpush1.msra.mxu0 %v437
    %464 = vmatprep.subr.mxu0 0.0
    %465 = vmatpush1.msra.mxu0 %v438
    %466 = vmatprep.subr.mxu0 0.0
    %467 = vmatpush1.msra.mxu0 %v439
    %468 = vmatprep.subr.mxu0 0.0
    %469 = vmatpush1.msra.mxu0 %v440
    %470 = vmatprep.subr.mxu0 0.0
    %471 = vmatpush1.msra.mxu0 %v441
    %472 = vmatprep.subr.mxu0 0.0
    %473 = vmatpush1.msra.mxu0 %v442
    %474 = vmatprep.subr.mxu0 0.0
    %475 = vmatpush1.msra.mxu0 %v443
    %476 = vmatprep.subr.mxu0 0.0
    %477 = vmatpush1.msra.mxu0 %v444
    %478 = vmatprep.subr.mxu0 0.0
    %479 = vmatpush1.msra.mxu0 %v445
    %480 = vmatprep.subr.mxu0 0.0
    %481 = vmatpush1.msra.mxu0 %v446
    %482 = vmatprep.subr.mxu0 0.0
    %483 = vmatpush1.msra.mxu0 %v447
    %484 = vmatprep.subr.mxu0 0.0
    %485 = vmatpush1.msra.mxu0 %v448
    %486 = vmatprep.subr.mxu0 0.0
    %487 = vmatpush1.msra.mxu0 %v449
    %488 = vmatprep.subr.mxu0 0.0
    %489 = vmatpush1.msra.mxu0 %v450
    %490 = vmatprep.subr.mxu0 0.0
    %491 = vmatpush1.msra.mxu0 0.0
    %492 = vmatprep.subr.mxu0 0.0
    %493 = vmatpush1.msra.mxu0 0.0
    %494 = vmatprep.subr.mxu0 0.0
    %495 = vmatpush1.msra.mxu0 0.0
    %496 = vmatprep.subr.mxu0 0.0
    %497 = vmatpush1.msra.mxu0 0.0
    %498 = vmatprep.subr.mxu0 0.0
    %499 = vmatpush1.msra.mxu0 0.0
    %500 = vmatprep.subr.mxu0 0.0
    %501 = vmatpush1.msra.mxu0 0.0
    %502 = vmatprep.subr.mxu0 0.0
    %503 = vmatpush1.msra.mxu0 0.0
    %504 = vmatprep.subr.mxu0 0.0
    %505 = vmatpush1.msra.mxu0 0.0
    %506 = vmatprep.subr.mxu0 0.0
    %507 = vmatpush1.msra.mxu0 0.0
    %508 = vmatprep.subr.mxu0 0.0
    %509 = vmatpush1.msra.mxu0 0.0
    %510 = vmatprep.subr.mxu0 0.0
    %511 = vmatpush1.msra.mxu0 0.0
    %512 = vmatprep.subr.mxu0 0.0
    %513 = vmatpush1.msra.mxu0 0.0
    %514 = vmatprep.subr.mxu0 0.0
    %515 = vmatpush1.msra.mxu0 0.0
    %516 = vmatprep.subr.mxu0 0.0
    %517 = vmatpush1.msra.mxu0 0.0
    %518 = vmatprep.subr.mxu0 0.0
    %519 = vmatpush1.msra.mxu0 0.0
    %520 = vmatprep.subr.mxu0 0.0
    %521 = vmatpush1.msra.mxu0 0.0
    %522 = vmatprep.mubr.f32.mxu0 0.0
    %523 = vmatmul.mubr.f32.gmra.mrb[0].mxu0 %v205
    %v524 = vpop.f32.mrb[0].mxu0
    %v525 = vadd.f32 %v456, %v524
    %v526 = vpop.f32.mrb[0].mxu0
    %527 = vdwg.mxu0
    %v528 = vld [vmem:[%s6] sm:$0xff]
    %v529 = vld [vmem:[%s6 + $0x8] sm:$0xff]
    %v530 = vld [vmem:[%s6 + $0x10] sm:$0xff]
    %v531 = vld [vmem:[%s6 + $0x18] sm:$0xff]
    %v532 = vld [vmem:[%s6 + $0x20] sm:$0xff]
    %v533 = vld [vmem:[%s6 + $0x28] sm:$0xff]
    %v534 = vld [vmem:[%s6 + $0x30] sm:$0xff]
    %v535 = vld [vmem:[%s6 + $0x38] sm:$0xff]
    %v536 = vld [vmem:[%s6 + $0x40] sm:$0xff]
    %v537 = vld [vmem:[%s6 + $0x48] sm:$0xff]
    %v538 = vld [vmem:[%s6 + $0x50] sm:$0xff]
    %v539 = vld [vmem:[%s6 + $0x58] sm:$0xff]
    %v540 = vld [vmem:[%s6 + $0x60] sm:$0xff]
    %v541 = vld [vmem:[%s6 + $0x68] sm:$0xff]
    %v542 = vld [vmem:[%s6 + $0x70] sm:$0xff]
    %v543 = vld [vmem:[%s6 + $0x78] sm:$0xff]
    %v544 = vld [vmem:[%s6 + $0x80] sm:$0xff]
    %v545 = vld [vmem:[%s6 + $0x88] sm:$0xff]
    %v546 = vld [vmem:[%s6 + $0x90] sm:$0xff]
    %v547 = vld [vmem:[%s6 + $0x98] sm:$0xff]
    %v548 = vld [vmem:[%s6 + $0xa0] sm:$0xff]
    %v549 = vld [vmem:[%s6 + $0xa8] sm:$0xff]
    %v550 = vld [vmem:[%s6 + $0xb0] sm:$0xff]
    %v551 = vld [vmem:[%s6 + $0xb8] sm:$0xff]
    %v552 = vld [vmem:[%s6 + $0xc0] sm:$0xff]
    %v553 = vld [vmem:[%s6 + $0xc8] sm:$0xff]
    %v554 = vld [vmem:[%s6 + $0xd0] sm:$0xff]
    %v555 = vld [vmem:[%s6 + $0xd8] sm:$0xff]
    %v556 = vld [vmem:[%s6 + $0xe0] sm:$0xff]
    %v557 = vld [vmem:[%s6 + $0xe8] sm:$0xff]
    %v558 = vld [vmem:[%s6 + $0xf0] sm:$0xff]
    %v559 = vld [vmem:[%s6 + $0xf8] sm:$0xff]
    %v560 = vld [vmem:[%s6 + $0x100] sm:$0xff]
    %v561 = vld [vmem:[%s6 + $0x108] sm:$0xff]
    %v562 = vld [vmem:[%s6 + $0x110] sm:$0xff]
    %v563 = vld [vmem:[%s6 + $0x118] sm:$0xff]
    %v564 = vld [vmem:[%s6 + $0x120] sm:$0xff]
    %v565 = vld [vmem:[%s6 + $0x128] sm:$0xff]
    %v566 = vld [vmem:[%s6 + $0x130] sm:$0xff]
    %v567 = vld [vmem:[%s6 + $0x138] sm:$0xff]
    %v568 = vld [vmem:[%s6 + $0x140] sm:$0xff]
    %v569 = vld [vmem:[%s6 + $0x148] sm:$0xff]
    %v570 = vld [vmem:[%s6 + $0x150] sm:$0xff]
    %v571 = vld [vmem:[%s6 + $0x158] sm:$0xff]
    %v572 = vld [vmem:[%s6 + $0x160] sm:$0xff]
    %v573 = vld [vmem:[%s6 + $0x168] sm:$0xff]
    %v574 = vld [vmem:[%s6 + $0x170] sm:$0xff]
    %v575 = vld [vmem:[%s6 + $0x178] sm:$0xff]
    %v576 = vld [vmem:[%s6 + $0x180] sm:$0xff]
    %v577 = vld [vmem:[%s6 + $0x188] sm:$0xff]
    %v578 = vld [vmem:[%s6 + $0x190] sm:$0xff]
    %v579 = vld [vmem:[%s6 + $0x198] sm:$0xff]
    %v580 = vld [vmem:[%s6 + $0x1a0] sm:$0xff]
    %v581 = vld [vmem:[%s6 + $0x1a8] sm:$0xff]
    %v582 = vld [vmem:[%s6 + $0x1b0] sm:$0xff]
    %v583 = vld [vmem:[%s6 + $0x1b8] sm:$0xff]
    %v584 = vld [vmem:[%s6 + $0x1c0] sm:$0xff]
    %v585 = vld [vmem:[%s6 + $0x1c8] sm:$0xff]
    %v586 = vld [vmem:[%s6 + $0x1d0] sm:$0xff]
    %v587 = vld [vmem:[%s6 + $0x1d8] sm:$0xff]
    %v588 = vld [vmem:[%s6 + $0x1e0] sm:$0xff]
    %v589 = vld [vmem:[%s6 + $0x1e8] sm:$0xff]
    %v590 = vld [vmem:[%s6 + $0x1f0] sm:$0xff]
    %v591 = vld [vmem:[%s6 + $0x1f8] sm:$0xff]
    %v592 = vld [vmem:[%s9] sm:$0xff]
    %v593 = vld [vmem:[%s9 + $0x8] sm:$0xff]
    %v594 = vld [vmem:[%s9 + $0x10] sm:$0xff]
    %v595 = vld [vmem:[%s9 + $0x18] sm:$0xff]
    %v596 = vld [vmem:[%s9 + $0x20] sm:$0xff]
    %v597 = vld [vmem:[%s9 + $0x28] sm:$0xff]
    %v598 = vld [vmem:[%s9 + $0x30] sm:$0xff]
    %v599 = vld [vmem:[%s9 + $0x38] sm:$0xff]
    %v600 = vld [vmem:[%s9 + $0x40] sm:$0xff]
    %v601 = vld [vmem:[%s9 + $0x48] sm:$0xff]
    %v602 = vld [vmem:[%s9 + $0x50] sm:$0xff]
    %v603 = vld [vmem:[%s9 + $0x58] sm:$0xff]
    %v604 = vld [vmem:[%s9 + $0x60] sm:$0xff]
    %v605 = vld [vmem:[%s9 + $0x68] sm:$0xff]
    %v606 = vld [vmem:[%s9 + $0x70] sm:$0xff]
    %v607 = vld [vmem:[%s9 + $0x78] sm:$0xff]
    %v608 = vld [vmem:[#allocation8] sm:$0xff]
    %v609 = vld [vmem:[#allocation8 + $0x8] sm:$0xff]
    %v610 = vld [vmem:[#allocation8 + $0x10] sm:$0xff]
    %v611 = vld [vmem:[#allocation8 + $0x18] sm:$0xff]
    %v612 = vld [vmem:[#allocation8 + $0x20] sm:$0xff]
    %v613 = vld [vmem:[#allocation8 + $0x28] sm:$0xff]
    %v614 = vld [vmem:[#allocation8 + $0x30] sm:$0xff]
    %v615 = vld [vmem:[#allocation8 + $0x38] sm:$0xff]
    %v616 = vld [vmem:[#allocation8 + $0x40] sm:$0xff]
    %v617 = vld [vmem:[#allocation8 + $0x48] sm:$0xff]
    %v618 = vld [vmem:[#allocation8 + $0x50] sm:$0xff]
    %v619 = vld [vmem:[#allocation8 + $0x58] sm:$0xff]
    %v620 = vld [vmem:[#allocation8 + $0x60] sm:$0xff]
    %v621 = vld [vmem:[#allocation8 + $0x68] sm:$0xff]
    %v622 = vld [vmem:[#allocation8 + $0x70] sm:$0xff]
    %v623 = vld [vmem:[#allocation8 + $0x78] sm:$0xff]
    %v624 = vld [vmem:[%s12] sm:$0x1]
    %v625 = vld [vmem:[%s13] sm:$0xff]
    %v626 = vld [vmem:[%s13 + $0x8] sm:$0xff]
    %v627 = vld [vmem:[%s13 + $0x10] sm:$0xff]
    %v628 = vld [vmem:[%s13 + $0x18] sm:$0xff]
    %v629 = vld [vmem:[%s13 + $0x20] sm:$0xff]
    %v630 = vld [vmem:[%s13 + $0x28] sm:$0xff]
    %v631 = vld [vmem:[%s13 + $0x30] sm:$0xff]
    %v632 = vld [vmem:[%s13 + $0x38] sm:$0xff]
    %v633 = vld [vmem:[%s13 + $0x40] sm:$0xff]
    %v634 = vld [vmem:[%s13 + $0x48] sm:$0xff]
    %v635 = vld [vmem:[%s13 + $0x50] sm:$0xff]
    %v636 = vld [vmem:[%s13 + $0x58] sm:$0xff]
    %v637 = vld [vmem:[%s13 + $0x60] sm:$0xff]
    %v638 = vld [vmem:[%s13 + $0x68] sm:$0xff]
    %v639 = vld [vmem:[%s13 + $0x70] sm:$0xff]
    %v640 = vld [vmem:[%s13 + $0x78] sm:$0xff]
    %v641 = vld [vmem:[%s14] sm:$0x1]
    %v642 = vld [vmem:[#allocation2] sm:$0x1]
    %v643 = vld [vmem:[#allocation5] sm:$0x1]
    %644 = vmatprep.subr.mxu0 %v529
    %645 = vmatpush1.msra.mxu0 %v528
    %646 = vmatprep.subr.mxu0 %v533
    %647 = vmatpush1.msra.mxu0 %v532
    %648 = vmatprep.subr.mxu0 %v537
    %649 = vmatpush1.msra.mxu0 %v536
    %650 = vmatprep.subr.mxu0 %v541
    %651 = vmatpush1.msra.mxu0 %v540
    %652 = vmatprep.subr.mxu0 %v545
    %653 = vmatpush1.msra.mxu0 %v544
    %654 = vmatprep.subr.mxu0 %v549
    %655 = vmatpush1.msra.mxu0 %v548
    %656 = vmatprep.subr.mxu0 %v553
    %657 = vmatpush1.msra.mxu0 %v552
    %658 = vmatprep.subr.mxu0 %v557
    %659 = vmatpush1.msra.mxu0 %v556
    %660 = vmatprep.subr.mxu0 %v561
    %661 = vmatpush1.msra.mxu0 %v560
    %662 = vmatprep.subr.mxu0 %v565
    %663 = vmatpush1.msra.mxu0 %v564
    %664 = vmatprep.subr.mxu0 %v569
    %665 = vmatpush1.msra.mxu0 %v568
    %666 = vmatprep.subr.mxu0 %v573
    %667 = vmatpush1.msra.mxu0 %v572
    %668 = vmatprep.subr.mxu0 %v577
    %669 = vmatpush1.msra.mxu0 %v576
    %670 = vmatprep.subr.mxu0 %v581
    %671 = vmatpush1.msra.mxu0 %v580
    %672 = vmatprep.subr.mxu0 %v585
    %673 = vmatpush1.msra.mxu0 %v584
    %674 = vmatprep.subr.mxu0 %v589
    %675 = vmatpush1.msra.mxu0 %v588
    %676 = vmatprep.subr.mxu0 0.0
    %677 = vmatpush1.msra.mxu0 0.0
    %678 = vmatprep.subr.mxu0 0.0
    %679 = vmatpush1.msra.mxu0 0.0
    %680 = vmatprep.subr.mxu0 0.0
    %681 = vmatpush1.msra.mxu0 0.0
    %682 = vmatprep.subr.mxu0 0.0
    %683 = vmatpush1.msra.mxu0 0.0
    %684 = vmatprep.subr.mxu0 0.0
    %685 = vmatpush1.msra.mxu0 0.0
    %686 = vmatprep.subr.mxu0 0.0
    %687 = vmatpush1.msra.mxu0 0.0
    %688 = vmatprep.subr.mxu0 0.0
    %689 = vmatpush1.msra.mxu0 0.0
    %690 = vmatprep.subr.mxu0 0.0
    %691 = vmatpush1.msra.mxu0 0.0
    %692 = vmatprep.subr.mxu0 0.0
    %693 = vmatpush1.msra.mxu0 0.0
    %694 = vmatprep.subr.mxu0 0.0
    %695 = vmatpush1.msra.mxu0 0.0
    %696 = vmatprep.subr.mxu0 0.0
    %697 = vmatpush1.msra.mxu0 0.0
    %698 = vmatprep.subr.mxu0 0.0
    %699 = vmatpush1.msra.mxu0 0.0
    %700 = vmatprep.subr.mxu0 0.0
    %701 = vmatpush1.msra.mxu0 0.0
    %702 = vmatprep.subr.mxu0 0.0
    %703 = vmatpush1.msra.mxu0 0.0
    %704 = vmatprep.subr.mxu0 0.0
    %705 = vmatpush1.msra.mxu0 0.0
    %706 = vmatprep.subr.mxu0 0.0
    %707 = vmatpush1.msra.mxu0 0.0
    %708 = vmatprep.mubr.f32.mxu0 0.0
    %709 = vmatmul.mubr.f32.gmra.mrb[0].mxu0 %v642
    %v710 = vpop.f32.mrb[0].mxu0
    %v711 = vadd.f32 0.0, %v710
    %v712 = vpop.f32.mrb[0].mxu0
    %v713 = vadd.f32 0.0, %v712
    %714 = vdwg.mxu0
    %715 = vmatprep.subr.mxu0 %v531
    %716 = vmatpush1.msra.mxu0 %v530
    %717 = vmatprep.subr.mxu0 %v535
    %718 = vmatpush1.msra.mxu0 %v534
    %719 = vmatprep.subr.mxu0 %v539
    %720 = vmatpush1.msra.mxu0 %v538
    %721 = vmatprep.subr.mxu0 %v543
    %722 = vmatpush1.msra.mxu0 %v542
    %723 = vmatprep.subr.mxu0 %v547
    %724 = vmatpush1.msra.mxu0 %v546
    %725 = vmatprep.subr.mxu0 %v551
    %726 = vmatpush1.msra.mxu0 %v550
    %727 = vmatprep.subr.mxu0 %v555
    %728 = vmatpush1.msra.mxu0 %v554
    %729 = vmatprep.subr.mxu0 %v559
    %730 = vmatpush1.msra.mxu0 %v558
    %731 = vmatprep.subr.mxu0 %v563
    %732 = vmatpush1.msra.mxu0 %v562
    %733 = vmatprep.subr.mxu0 %v567
    %734 = vmatpush1.msra.mxu0 %v566
    %735 = vmatprep.subr.mxu0 %v571
    %736 = vmatpush1.msra.mxu0 %v570
    %737 = vmatprep.subr.mxu0 %v575
    %738 = vmatpush1.msra.mxu0 %v574
    %739 = vmatprep.subr.mxu0 %v579
    %740 = vmatpush1.msra.mxu0 %v578
    %741 = vmatprep.subr.mxu0 %v583
    %742 = vmatpush1.msra.mxu0 %v582
    %743 = vmatprep.subr.mxu0 %v587
    %744 = vmatpush1.msra.mxu0 %v586
    %745 = vmatprep.subr.mxu0 %v591
    %746 = vmatpush1.msra.mxu0 %v590
    %747 = vmatprep.subr.mxu0 0.0
    %748 = vmatpush1.msra.mxu0 0.0
    %749 = vmatprep.subr.mxu0 0.0
    %750 = vmatpush1.msra.mxu0 0.0
    %751 = vmatprep.subr.mxu0 0.0
    %752 = vmatpush1.msra.mxu0 0.0
    %753 = vmatprep.subr.mxu0 0.0
    %754 = vmatpush1.msra.mxu0 0.0
    %755 = vmatprep.subr.mxu0 0.0
    %756 = vmatpush1.msra.mxu0 0.0
    %757 = vmatprep.subr.mxu0 0.0
    %758 = vmatpush1.msra.mxu0 0.0
    %759 = vmatprep.subr.mxu0 0.0
    %760 = vmatpush1.msra.mxu0 0.0
    %761 = vmatprep.subr.mxu0 0.0
    %762 = vmatpush1.msra.mxu0 0.0
    %763 = vmatprep.subr.mxu0 0.0
    %764 = vmatpush1.msra.mxu0 0.0
    %765 = vmatprep.subr.mxu0 0.0
    %766 = vmatpush1.msra.mxu0 0.0
    %767 = vmatprep.subr.mxu0 0.0
    %768 = vmatpush1.msra.mxu0 0.0
    %769 = vmatprep.subr.mxu0 0.0
    %770 = vmatpush1.msra.mxu0 0.0
    %771 = vmatprep.subr.mxu0 0.0
    %772 = vmatpush1.msra.mxu0 0.0
    %773 = vmatprep.subr.mxu0 0.0
    %774 = vmatpush1.msra.mxu0 0.0
    %775 = vmatprep.subr.mxu0 0.0
    %776 = vmatpush1.msra.mxu0 0.0
    %777 = vmatprep.subr.mxu0 0.0
    %778 = vmatpush1.msra.mxu0 0.0
    %779 = vmatprep.mubr.f32.mxu0 0.0
    %780 = vmatmul.mubr.f32.gmra.mrb[0].mxu0 %v642
    %v781 = vpop.f32.mrb[0].mxu0
    %v782 = vadd.f32 0.0, %v781
    %v783 = vpop.f32.mrb[0].mxu0
    %v784 = vadd.f32 0.0, %v783
    %785 = vdwg.mxu0
    %v786 = vadd.f32 %v360, %v711
    %v787 = vadd.f32 %v362, %v713
    %v788 = vadd.f32 %v431, %v782
    %v789 = vadd.f32 %v433, %v784
    %v790 = vxor.u32 %v786, 2147483648
    %v791 = vmul.f32 %v790, 1.442695
    %v792 = vpow.pop %v791
    %v793 = vadd.f32 %v792, 1.0
    %v794 = vrcp.pop %v793
    %v795 = vmul.f32 1.0, %v794
    %v796 = vxor.u32 %v787, 2147483648
    %v797 = vmul.f32 %v796, 1.442695
    %v798 = vpow.pop %v797
    %v799 = vadd.f32 %v798, 1.0
    %v800 = vrcp.pop %v799
    %v801 = vmul.f32 1.0, %v800
    %v802 = vtanh.pop %v788
    %v803 = vxor.u32 %v789, 2147483648
    %v804 = vmul.f32 %v803, 1.442695
    %v805 = vpow.pop %v804
    %v806 = vadd.f32 %v805, 1.0
    %v807 = vrcp.pop %v806
    %v808 = vmul.f32 1.0, %v807
    %v809 = vmul.f32 %v801, %v643
    %v810 = vmul.f32 %v795, %v802
    %v811 = vadd.f32 %v809, %v810
    %v812 = vtanh.pop %v811
    %v813 = vmul.f32 %v808, %v812
    %814 = vmatprep.subr.mxu0 0.0
    %815 = vmatpush1.msra.mxu0 %v592
    %816 = vmatprep.subr.mxu0 0.0
    %817 = vmatpush1.msra.mxu0 %v593
    %818 = vmatprep.subr.mxu0 0.0
    %819 = vmatpush1.msra.mxu0 %v594
    %820 = vmatprep.subr.mxu0 0.0
    %821 = vmatpush1.msra.mxu0 %v595
    %822 = vmatprep.subr.mxu0 0.0
    %823 = vmatpush1.msra.mxu0 %v596
    %824 = vmatprep.subr.mxu0 0.0
    %825 = vmatpush1.msra.mxu0 %v597
    %826 = vmatprep.subr.mxu0 0.0
    %827 = vmatpush1.msra.mxu0 %v598
    %828 = vmatprep.subr.mxu0 0.0
    %829 = vmatpush1.msra.mxu0 %v599
    %830 = vmatprep.subr.mxu0 0.0
    %831 = vmatpush1.msra.mxu0 %v600
    %832 = vmatprep.subr.mxu0 0.0
    %833 = vmatpush1.msra.mxu0 %v601
    %834 = vmatprep.subr.mxu0 0.0
    %835 = vmatpush1.msra.mxu0 %v602
    %836 = vmatprep.subr.mxu0 0.0
    %837 = vmatpush1.msra.mxu0 %v603
    %838 = vmatprep.subr.mxu0 0.0
    %839 = vmatpush1.msra.mxu0 %v604
    %840 = vmatprep.subr.mxu0 0.0
    %841 = vmatpush1.msra.mxu0 %v605
    %842 = vmatprep.subr.mxu0 0.0
    %843 = vmatpush1.msra.mxu0 %v606
    %844 = vmatprep.subr.mxu0 0.0
    %845 = vmatpush1.msra.mxu0 %v607
    %846 = vmatprep.subr.mxu0 0.0
    %847 = vmatpush1.msra.mxu0 0.0
    %848 = vmatprep.subr.mxu0 0.0
    %849 = vmatpush1.msra.mxu0 0.0
    %850 = vmatprep.subr.mxu0 0.0
    %851 = vmatpush1.msra.mxu0 0.0
    %852 = vmatprep.subr.mxu0 0.0
    %853 = vmatpush1.msra.mxu0 0.0
    %854 = vmatprep.subr.mxu0 0.0
    %855 = vmatpush1.msra.mxu0 0.0
    %856 = vmatprep.subr.mxu0 0.0
    %857 = vmatpush1.msra.mxu0 0.0
    %858 = vmatprep.subr.mxu0 0.0
    %859 = vmatpush1.msra.mxu0 0.0
    %860 = vmatprep.subr.mxu0 0.0
    %861 = vmatpush1.msra.mxu0 0.0
    %862 = vmatprep.subr.mxu0 0.0
    %863 = vmatpush1.msra.mxu0 0.0
    %864 = vmatprep.subr.mxu0 0.0
    %865 = vmatpush1.msra.mxu0 0.0
    %866 = vmatprep.subr.mxu0 0.0
    %867 = vmatpush1.msra.mxu0 0.0
    %868 = vmatprep.subr.mxu0 0.0
    %869 = vmatpush1.msra.mxu0 0.0
    %870 = vmatprep.subr.mxu0 0.0
    %871 = vmatpush1.msra.mxu0 0.0
    %872 = vmatprep.subr.mxu0 0.0
    %873 = vmatpush1.msra.mxu0 0.0
    %874 = vmatprep.subr.mxu0 0.0
    %875 = vmatpush1.msra.mxu0 0.0
    %876 = vmatprep.subr.mxu0 0.0
    %877 = vmatpush1.msra.mxu0 0.0
    %878 = vmatprep.mubr.f32.mxu0 0.0
    %879 = vmatmul.mubr.f32.gmra.mrb[0].mxu0 %v813
    %v880 = vpop.f32.mrb[0].mxu0
    %v881 = vadd.f32 0.0, %v880
    %v882 = vpop.f32.mrb[0].mxu0
    %883 = vdwg.mxu0
    %v884 = vadd.f32 %v525, %v881
    %v885 = vmax.f32 %v884, 0.0
    %886 = vmatprep.subr.mxu0 0.0
    %887 = vmatpush1.msra.mxu0 %v608
    %888 = vmatprep.subr.mxu0 0.0
    %889 = vmatpush1.msra.mxu0 %v609
    %890 = vmatprep.subr.mxu0 0.0
    %891 = vmatpush1.msra.mxu0 %v610
    %892 = vmatprep.subr.mxu0 0.0
    %893 = vmatpush1.msra.mxu0 %v611
    %894 = vmatprep.subr.mxu0 0.0
    %895 = vmatpush1.msra.mxu0 %v612
    %896 = vmatprep.subr.mxu0 0.0
    %897 = vmatpush1.msra.mxu0 %v613
    %898 = vmatprep.subr.mxu0 0.0
    %899 = vmatpush1.msra.mxu0 %v614
    %900 = vmatprep.subr.mxu0 0.0
    %901 = vmatpush1.msra.mxu0 %v615
    %902 = vmatprep.subr.mxu0 0.0
    %903 = vmatpush1.msra.mxu0 %v616
    %904 = vmatprep.subr.mxu0 0.0
    %905 = vmatpush1.msra.mxu0 %v617
    %906 = vmatprep.subr.mxu0 0.0
    %907 = vmatpush1.msra.mxu0 %v618
    %908 = vmatprep.subr.mxu0 0.0
    %909 = vmatpush1.msra.mxu0 %v619
    %910 = vmatprep.subr.mxu0 0.0
    %911 = vmatpush1.msra.mxu0 %v620
    %912 = vmatprep.subr.mxu0 0.0
    %913 = vmatpush1.msra.mxu0 %v621
    %914 = vmatprep.subr.mxu0 0.0
    %915 = vmatpush1.msra.mxu0 %v622
    %916 = vmatprep.subr.mxu0 0.0
    %917 = vmatpush1.msra.mxu0 %v623
    %918 = vmatprep.subr.mxu0 0.0
    %919 = vmatpush1.msra.mxu0 0.0
    %920 = vmatprep.subr.mxu0 0.0
    %921 = vmatpush1.msra.mxu0 0.0
    %922 = vmatprep.subr.mxu0 0.0
    %923 = vmatpush1.msra.mxu0 0.0
    %924 = vmatprep.subr.mxu0 0.0
    %925 = vmatpush1.msra.mxu0 0.0
    %926 = vmatprep.subr.mxu0 0.0
    %927 = vmatpush1.msra.mxu0 0.0
    %928 = vmatprep.subr.mxu0 0.0
    %929 = vmatpush1.msra.mxu0 0.0
    %930 = vmatprep.subr.mxu0 0.0
    %931 = vmatpush1.msra.mxu0 0.0
    %932 = vmatprep.subr.mxu0 0.0
    %933 = vmatpush1.msra.mxu0 0.0
    %934 = vmatprep.subr.mxu0 0.0
    %935 = vmatpush1.msra.mxu0 0.0
    %936 = vmatprep.subr.mxu0 0.0
    %937 = vmatpush1.msra.mxu0 0.0
    %938 = vmatprep.subr.mxu0 0.0
    %939 = vmatpush1.msra.mxu0 0.0
    %940 = vmatprep.subr.mxu0 0.0
    %941 = vmatpush1.msra.mxu0 0.0
    %942 = vmatprep.subr.mxu0 0.0
    %943 = vmatpush1.msra.mxu0 0.0
    %944 = vmatprep.subr.mxu0 0.0
    %945 = vmatpush1.msra.mxu0 0.0
    %946 = vmatprep.subr.mxu0 0.0
    %947 = vmatpush1.msra.mxu0 0.0
    %948 = vmatprep.subr.mxu0 0.0
    %949 = vmatpush1.msra.mxu0 0.0
    %950 = vmatprep.mubr.f32.mxu0 0.0
    %951 = vmatmul.mubr.f32.gmra.mrb[0].mxu0 %v885
    %v952 = vpop.f32.mrb[0].mxu0
    %v953 = vadd.f32 %v624, %v952
    %v954 = vpop.f32.mrb[0].mxu0
    %955 = vdwg.mxu0
    %v956 = vmax.f32 %v953, 0.0
    %957 = vmatprep.subr.mxu0 0.0
    %958 = vmatpush1.msra.mxu0 %v625
    %959 = vmatprep.subr.mxu0 0.0
    %960 = vmatpush1.msra.mxu0 %v626
    %961 = vmatprep.subr.mxu0 0.0
    %962 = vmatpush1.msra.mxu0 %v627
    %963 = vmatprep.subr.mxu0 0.0
    %964 = vmatpush1.msra.mxu0 %v628
    %965 = vmatprep.subr.mxu0 0.0
    %966 = vmatpush1.msra.mxu0 %v629
    %967 = vmatprep.subr.mxu0 0.0
    %968 = vmatpush1.msra.mxu0 %v630
    %969 = vmatprep.subr.mxu0 0.0
    %970 = vmatpush1.msra.mxu0 %v631
    %971 = vmatprep.subr.mxu0 0.0
    %972 = vmatpush1.msra.mxu0 %v632
    %973 = vmatprep.subr.mxu0 0.0
    %974 = vmatpush1.msra.mxu0 %v633
    %975 = vmatprep.subr.mxu0 0.0
    %976 = vmatpush1.msra.mxu0 %v634
    %977 = vmatprep.subr.mxu0 0.0
    %978 = vmatpush1.msra.mxu0 %v635
    %979 = vmatprep.subr.mxu0 0.0
    %980 = vmatpush1.msra.mxu0 %v636
    %981 = vmatprep.subr.mxu0 0.0
    %982 = vmatpush1.msra.mxu0 %v637
    %983 = vmatprep.subr.mxu0 0.0
    %984 = vmatpush1.msra.mxu0 %v638
    %985 = vmatprep.subr.mxu0 0.0
    %986 = vmatpush1.msra.mxu0 %v639
    %987 = vmatprep.subr.mxu0 0.0
    %988 = vmatpush1.msra.mxu0 %v640
    %989 = vmatprep.subr.mxu0 0.0
    %990 = vmatpush1.msra.mxu0 0.0
    %991 = vmatprep.subr.mxu0 0.0
    %992 = vmatpush1.msra.mxu0 0.0
    %993 = vmatprep.subr.mxu0 0.0
    %994 = vmatpush1.msra.mxu0 0.0
    %995 = vmatprep.subr.mxu0 0.0
    %996 = vmatpush1.msra.mxu0 0.0
    %997 = vmatprep.subr.mxu0 0.0
    %998 = vmatpush1.msra.mxu0 0.0
    %999 = vmatprep.subr.mxu0 0.0
    %1000 = vmatpush1.msra.mxu0 0.0
    %1001 = vmatprep.subr.mxu0 0.0
    %1002 = vmatpush1.msra.mxu0 0.0
    %1003 = vmatprep.subr.mxu0 0.0
    %1004 = vmatpush1.msra.mxu0 0.0
    %1005 = vmatprep.subr.mxu0 0.0
    %1006 = vmatpush1.msra.mxu0 0.0
    %1007 = vmatprep.subr.mxu0 0.0
    %1008 = vmatpush1.msra.mxu0 0.0
    %1009 = vmatprep.subr.mxu0 0.0
    %1010 = vmatpush1.msra.mxu0 0.0
    %1011 = vmatprep.subr.mxu0 0.0
    %1012 = vmatpush1.msra.mxu0 0.0
    %1013 = vmatprep.subr.mxu0 0.0
    %1014 = vmatpush1.msra.mxu0 0.0
    %1015 = vmatprep.subr.mxu0 0.0
    %1016 = vmatpush1.msra.mxu0 0.0
    %1017 = vmatprep.subr.mxu0 0.0
    %1018 = vmatpush1.msra.mxu0 0.0
    %1019 = vmatprep.subr.mxu0 0.0
    %1020 = vmatpush1.msra.mxu0 0.0
    %1021 = vmatprep.mubr.f32.mxu0 0.0
    %1022 = vmatmul.mubr.f32.gmra.mrb[0].mxu0 %v956
    %v1023 = vpop.f32.mrb[0].mxu0
    %v1024 = vadd.f32 %v641, %v1023
    %v1025 = vpop.f32.mrb[0].mxu0
    %1026 = vdwg.mxu0
    %v1027 = vtanh.pop %v1024
    %1028 = vmatprep.subr.mxu0 %v529
    %1029 = vmatpush1.msra.mxu0 %v528
    %1030 = vmatprep.subr.mxu0 %v533
    %1031 = vmatpush1.msra.mxu0 %v532
    %1032 = vmatprep.subr.mxu0 %v537
    %1033 = vmatpush1.msra.mxu0 %v536
    %1034 = vmatprep.subr.mxu0 %v541
    %1035 = vmatpush1.msra.mxu0 %v540
    %1036 = vmatprep.subr.mxu0 %v545
    %1037 = vmatpush1.msra.mxu0 %v544
    %1038 = vmatprep.subr.mxu0 %v549
    %1039 = vmatpush1.msra.mxu0 %v548
    %1040 = vmatprep.subr.mxu0 %v553
    %1041 = vmatpush1.msra.mxu0 %v552
    %1042 = vmatprep.subr.mxu0 %v557
    %1043 = vmatpush1.msra.mxu0 %v556
    %1044 = vmatprep.subr.mxu0 %v561
    %1045 = vmatpush1.msra.mxu0 %v560
    %1046 = vmatprep.subr.mxu0 %v565
    %1047 = vmatpush1.msra.mxu0 %v564
    %1048 = vmatprep.subr.mxu0 %v569
    %1049 = vmatpush1.msra.mxu0 %v568
    %1050 = vmatprep.subr.mxu0 %v573
    %1051 = vmatpush1.msra.mxu0 %v572
    %1052 = vmatprep.subr.mxu0 %v577
    %1053 = vmatpush1.msra.mxu0 %v576
    %1054 = vmatprep.subr.mxu0 %v581
    %1055 = vmatpush1.msra.mxu0 %v580
    %1056 = vmatprep.subr.mxu0 %v585
    %1057 = vmatpush1.msra.mxu0 %v584
    %1058 = vmatprep.subr.mxu0 %v589
    %1059 = vmatpush1.msra.mxu0 %v588
    %1060 = vmatprep.subr.mxu0 0.0
    %1061 = vmatpush1.msra.mxu0 0.0
    %1062 = vmatprep.subr.mxu0 0.0
    %1063 = vmatpush1.msra.mxu0 0.0
    %1064 = vmatprep.subr.mxu0 0.0
    %1065 = vmatpush1.msra.mxu0 0.0
    %1066 = vmatprep.subr.mxu0 0.0
    %1067 = vmatpush1.msra.mxu0 0.0
    %1068 = vmatprep.subr.mxu0 0.0
    %1069 = vmatpush1.msra.mxu0 0.0
    %1070 = vmatprep.subr.mxu0 0.0
    %1071 = vmatpush1.msra.mxu0 0.0
    %1072 = vmatprep.subr.mxu0 0.0
    %1073 = vmatpush1.msra.mxu0 0.0
    %1074 = vmatprep.subr.mxu0 0.0
    %1075 = vmatpush1.msra.mxu0 0.0
    %1076 = vmatprep.subr.mxu0 0.0
    %1077 = vmatpush1.msra.mxu0 0.0
    %1078 = vmatprep.subr.mxu0 0.0
    %1079 = vmatpush1.msra.mxu0 0.0
    %1080 = vmatprep.subr.mxu0 0.0
    %1081 = vmatpush1.msra.mxu0 0.0
    %1082 = vmatprep.subr.mxu0 0.0
    %1083 = vmatpush1.msra.mxu0 0.0
    %1084 = vmatprep.subr.mxu0 0.0
    %1085 = vmatpush1.msra.mxu0 0.0
    %1086 = vmatprep.subr.mxu0 0.0
    %1087 = vmatpush1.msra.mxu0 0.0
    %1088 = vmatprep.subr.mxu0 0.0
    %1089 = vmatpush1.msra.mxu0 0.0
    %1090 = vmatprep.subr.mxu0 0.0
    %1091 = vmatpush1.msra.mxu0 0.0
    %1092 = vmatprep.mubr.f32.mxu0 0.0
    %1093 = vmatmul.mubr.f32.gmra.mrb[0].mxu0 %v813
    %v1094 = vpop.f32.mrb[0].mxu0
    %v1095 = vadd.f32 0.0, %v1094
    %v1096 = vpop.f32.mrb[0].mxu0
    %v1097 = vadd.f32 0.0, %v1096
    %1098 = vdwg.mxu0
    %1099 = vmatprep.subr.mxu0 %v531
    %1100 = vmatpush1.msra.mxu0 %v530
    %1101 = vmatprep.subr.mxu0 %v535
    %1102 = vmatpush1.msra.mxu0 %v534
    %1103 = vmatprep.subr.mxu0 %v539
    %1104 = vmatpush1.msra.mxu0 %v538
    %1105 = vmatprep.subr.mxu0 %v543
    %1106 = vmatpush1.msra.mxu0 %v542
    %1107 = vmatprep.subr.mxu0 %v547
    %1108 = vmatpush1.msra.mxu0 %v546
    %1109 = vmatprep.subr.mxu0 %v551
    %1110 = vmatpush1.msra.mxu0 %v550
    %1111 = vmatprep.subr.mxu0 %v555
    %1112 = vmatpush1.msra.mxu0 %v554
    %1113 = vmatprep.subr.mxu0 %v559
    %1114 = vmatpush1.msra.mxu0 %v558
    %1115 = vmatprep.subr.mxu0 %v563
    %1116 = vmatpush1.msra.mxu0 %v562
    %1117 = vmatprep.subr.mxu0 %v567
    %1118 = vmatpush1.msra.mxu0 %v566
    %1119 = vmatprep.subr.mxu0 %v571
    %1120 = vmatpush1.msra.mxu0 %v570
    %1121 = vmatprep.subr.mxu0 %v575
    %1122 = vmatpush1.msra.mxu0 %v574
    %1123 = vmatprep.subr.mxu0 %v579
    %1124 = vmatpush1.msra.mxu0 %v578
    %1125 = vmatprep.subr.mxu0 %v583
    %1126 = vmatpush1.msra.mxu0 %v582
    %1127 = vmatprep.subr.mxu0 %v587
    %1128 = vmatpush1.msra.mxu0 %v586
    %1129 = vmatprep.subr.mxu0 %v591
    %1130 = vmatpush1.msra.mxu0 %v590
    %1131 = vmatprep.subr.mxu0 0.0
    %1132 = vmatpush1.msra.mxu0 0.0
    %1133 = vmatprep.subr.mxu0 0.0
    %1134 = vmatpush1.msra.mxu0 0.0
    %1135 = vmatprep.subr.mxu0 0.0
    %1136 = vmatpush1.msra.mxu0 0.0
    %1137 = vmatprep.subr.mxu0 0.0
    %1138 = vmatpush1.msra.mxu0 0.0
    %1139 = vmatprep.subr.mxu0 0.0
    %1140 = vmatpush1.msra.mxu0 0.0
    %1141 = vmatprep.subr.mxu0 0.0
    %1142 = vmatpush1.msra.mxu0 0.0
    %1143 = vmatprep.subr.mxu0 0.0
    %1144 = vmatpush1.msra.mxu0 0.0
    %1145 = vmatprep.subr.mxu0 0.0
    %1146 = vmatpush1.msra.mxu0 0.0
    %1147 = vmatprep.subr.mxu0 0.0
    %1148 = vmatpush1.msra.mxu0 0.0
    %1149 = vmatprep.subr.mxu0 0.0
    %1150 = vmatpush1.msra.mxu0 0.0
    %1151 = vmatprep.subr.mxu0 0.0
    %1152 = vmatpush1.msra.mxu0 0.0
    %1153 = vmatprep.subr.mxu0 0.0
    %1154 = vmatpush1.msra.mxu0 0.0
    %1155 = vmatprep.subr.mxu0 0.0
    %1156 = vmatpush1.msra.mxu0 0.0
    %1157 = vmatprep.subr.mxu0 0.0
    %1158 = vmatpush1.msra.mxu0 0.0
    %1159 = vmatprep.subr.mxu0 0.0
    %1160 = vmatpush1.msra.mxu0 0.0
    %1161 = vmatprep.subr.mxu0 0.0
    %1162 = vmatpush1.msra.mxu0 0.0
    %1163 = vmatprep.mubr.f32.mxu0 0.0
    %1164 = vmatmul.mubr.f32.gmra.mrb[0].mxu0 %v813
    %v1165 = vpop.f32.mrb[0].mxu0
    %v1166 = vadd.f32 0.0, %v1165
    %v1167 = vpop.f32.mrb[0].mxu0
    %v1168 = vadd.f32 0.0, %v1167
    %1169 = vdwg.mxu0
    %v1174 = vrot.slane %v1095, 7
    %v1175 = vrot.slane %v1097, 7
    %v1176 = vrot.slane %v1166, 7
    %v1177 = vrot.slane %v1168, 7
    %v1182 = vadd.f32 %v360, %v1174
    %v1183 = vadd.f32 %v362, %v1175
    %v1184 = vadd.f32 %v431, %v1176
    %v1185 = vadd.f32 %v433, %v1177
    %v1186 = vxor.u32 %v1182, 2147483648
    %v1187 = vmul.f32 %v1186, 1.442695
    %v1188 = vpow.pop %v1187
    %v1189 = vadd.f32 %v1188, 1.0
    %v1190 = vrcp.pop %v1189
    %v1191 = vmul.f32 1.0, %v1190
    %v1192 = vxor.u32 %v1183, 2147483648
    %v1193 = vmul.f32 %v1192, 1.442695
    %v1194 = vpow.pop %v1193
    %v1195 = vadd.f32 %v1194, 1.0
    %v1196 = vrcp.pop %v1195
    %v1197 = vmul.f32 1.0, %v1196
    %v1198 = vtanh.pop %v1184
    %v1199 = vxor.u32 %v1185, 2147483648
    %v1200 = vmul.f32 %v1199, 1.442695
    %v1201 = vpow.pop %v1200
    %v1202 = vadd.f32 %v1201, 1.0
    %v1203 = vrcp.pop %v1202
    %v1204 = vmul.f32 1.0, %v1203
    %v1206 = vrot.slane %v811, 7
    %v1208 = vmul.f32 %v1197, %v1206
    %v1209 = vmul.f32 %v1191, %v1198
    %v1210 = vadd.f32 %v1208, %v1209
    %v1211 = vtanh.pop %v1210
    %v1212 = vmul.f32 %v1204, %v1211
    %v1214 = vrot.slane %v1212, 1
    %1216 = vmatprep.subr.mxu0 0.0
    %1217 = vmatpush1.msra.mxu0 %v592
    %1218 = vmatprep.subr.mxu0 0.0
    %1219 = vmatpush1.msra.mxu0 %v593
    %1220 = vmatprep.subr.mxu0 0.0
    %1221 = vmatpush1.msra.mxu0 %v594
    %1222 = vmatprep.subr.mxu0 0.0
    %1223 = vmatpush1.msra.mxu0 %v595
    %1224 = vmatprep.subr.mxu0 0.0
    %1225 = vmatpush1.msra.mxu0 %v596
    %1226 = vmatprep.subr.mxu0 0.0
    %1227 = vmatpush1.msra.mxu0 %v597
    %1228 = vmatprep.subr.mxu0 0.0
    %1229 = vmatpush1.msra.mxu0 %v598
    %1230 = vmatprep.subr.mxu0 0.0
    %1231 = vmatpush1.msra.mxu0 %v599
    %1232 = vmatprep.subr.mxu0 0.0
    %1233 = vmatpush1.msra.mxu0 %v600
    %1234 = vmatprep.subr.mxu0 0.0
    %1235 = vmatpush1.msra.mxu0 %v601
    %1236 = vmatprep.subr.mxu0 0.0
    %1237 = vmatpush1.msra.mxu0 %v602
    %1238 = vmatprep.subr.mxu0 0.0
    %1239 = vmatpush1.msra.mxu0 %v603
    %1240 = vmatprep.subr.mxu0 0.0
    %1241 = vmatpush1.msra.mxu0 %v604
    %1242 = vmatprep.subr.mxu0 0.0
    %1243 = vmatpush1.msra.mxu0 %v605
    %1244 = vmatprep.subr.mxu0 0.0
    %1245 = vmatpush1.msra.mxu0 %v606
    %1246 = vmatprep.subr.mxu0 0.0
    %1247 = vmatpush1.msra.mxu0 %v607
    %1248 = vmatprep.subr.mxu0 0.0
    %1249 = vmatpush1.msra.mxu0 0.0
    %1250 = vmatprep.subr.mxu0 0.0
    %1251 = vmatpush1.msra.mxu0 0.0
    %1252 = vmatprep.subr.mxu0 0.0
    %1253 = vmatpush1.msra.mxu0 0.0
    %1254 = vmatprep.subr.mxu0 0.0
    %1255 = vmatpush1.msra.mxu0 0.0
    %1256 = vmatprep.subr.mxu0 0.0
    %1257 = vmatpush1.msra.mxu0 0.0
    %1258 = vmatprep.subr.mxu0 0.0
    %1259 = vmatpush1.msra.mxu0 0.0
    %1260 = vmatprep.subr.mxu0 0.0
    %1261 = vmatpush1.msra.mxu0 0.0
    %1262 = vmatprep.subr.mxu0 0.0
    %1263 = vmatpush1.msra.mxu0 0.0
    %1264 = vmatprep.subr.mxu0 0.0
    %1265 = vmatpush1.msra.mxu0 0.0
    %1266 = vmatprep.subr.mxu0 0.0
    %1267 = vmatpush1.msra.mxu0 0.0
    %1268 = vmatprep.subr.mxu0 0.0
    %1269 = vmatpush1.msra.mxu0 0.0
    %1270 = vmatprep.subr.mxu0 0.0
    %1271 = vmatpush1.msra.mxu0 0.0
    %1272 = vmatprep.subr.mxu0 0.0
    %1273 = vmatpush1.msra.mxu0 0.0
    %1274 = vmatprep.subr.mxu0 0.0
    %1275 = vmatpush1.msra.mxu0 0.0
    %1276 = vmatprep.subr.mxu0 0.0
    %1277 = vmatpush1.msra.mxu0 0.0
    %1278 = vmatprep.subr.mxu0 0.0
    %1279 = vmatpush1.msra.mxu0 0.0
    %1280 = vmatprep.mubr.f32.mxu0 0.0
    %1281 = vmatmul.mubr.f32.gmra.mrb[0].mxu0 %v1214
    %v1282 = vpop.f32.mrb[0].mxu0
    %v1283 = vadd.f32 0.0, %v1282
    %v1284 = vpop.f32.mrb[0].mxu0
    %1285 = vdwg.mxu0
    %v1287 = vrot.slane %v1283, 7
    %v1289 = vadd.f32 %v525, %v1287
    %v1290 = vmax.f32 %v1289, 0.0
    %v1292 = vrot.slane %v1290, 1
    %1294 = vmatprep.subr.mxu0 0.0
    %1295 = vmatpush1.msra.mxu0 %v608
    %1296 = vmatprep.subr.mxu0 0.0
    %1297 = vmatpush1.msra.mxu0 %v609
    %1298 = vmatprep.subr.mxu0 0.0
    %1299 = vmatpush1.msra.mxu0 %v610
    %1300 = vmatprep.subr.mxu0 0.0
    %1301 = vmatpush1.msra.mxu0 %v611
    %1302 = vmatprep.subr.mxu0 0.0
    %1303 = vmatpush1.msra.mxu0 %v612
    %1304 = vmatprep.subr.mxu0 0.0
    %1305 = vmatpush1.msra.mxu0 %v613
    %1306 = vmatprep.subr.mxu0 0.0
    %1307 = vmatpush1.msra.mxu0 %v614
    %1308 = vmatprep.subr.mxu0 0.0
    %1309 = vmatpush1.msra.mxu0 %v615
    %1310 = vmatprep.subr.mxu0 0.0
    %1311 = vmatpush1.msra.mxu0 %v616
    %1312 = vmatprep.subr.mxu0 0.0
    %1313 = vmatpush1.msra.mxu0 %v617
    %1314 = vmatprep.subr.mxu0 0.0
    %1315 = vmatpush1.msra.mxu0 %v618
    %1316 = vmatprep.subr.mxu0 0.0
    %1317 = vmatpush1.msra.mxu0 %v619
    %1318 = vmatprep.subr.mxu0 0.0
    %1319 = vmatpush1.msra.mxu0 %v620
    %1320 = vmatprep.subr.mxu0 0.0
    %1321 = vmatpush1.msra.mxu0 %v621
    %1322 = vmatprep.subr.mxu0 0.0
    %1323 = vmatpush1.msra.mxu0 %v622
    %1324 = vmatprep.subr.mxu0 0.0
    %1325 = vmatpush1.msra.mxu0 %v623
    %1326 = vmatprep.subr.mxu0 0.0
    %1327 = vmatpush1.msra.mxu0 0.0
    %1328 = vmatprep.subr.mxu0 0.0
    %1329 = vmatpush1.msra.mxu0 0.0
    %1330 = vmatprep.subr.mxu0 0.0
    %1331 = vmatpush1.msra.mxu0 0.0
    %1332 = vmatprep.subr.mxu0 0.0
    %1333 = vmatpush1.msra.mxu0 0.0
    %1334 = vmatprep.subr.mxu0 0.0
    %1335 = vmatpush1.msra.mxu0 0.0
    %1336 = vmatprep.subr.mxu0 0.0
    %1337 = vmatpush1.msra.mxu0 0.0
    %1338 = vmatprep.subr.mxu0 0.0
    %1339 = vmatpush1.msra.mxu0 0.0
    %1340 = vmatprep.subr.mxu0 0.0
    %1341 = vmatpush1.msra.mxu0 0.0
    %1342 = vmatprep.subr.mxu0 0.0
    %1343 = vmatpush1.msra.mxu0 0.0
    %1344 = vmatprep.subr.mxu0 0.0
    %1345 = vmatpush1.msra.mxu0 0.0
    %1346 = vmatprep.subr.mxu0 0.0
    %1347 = vmatpush1.msra.mxu0 0.0
    %1348 = vmatprep.subr.mxu0 0.0
    %1349 = vmatpush1.msra.mxu0 0.0
    %1350 = vmatprep.subr.mxu0 0.0
    %1351 = vmatpush1.msra.mxu0 0.0
    %1352 = vmatprep.subr.mxu0 0.0
    %1353 = vmatpush1.msra.mxu0 0.0
    %1354 = vmatprep.subr.mxu0 0.0
    %1355 = vmatpush1.msra.mxu0 0.0
    %1356 = vmatprep.subr.mxu0 0.0
    %1357 = vmatpush1.msra.mxu0 0.0
    %1358 = vmatprep.mubr.f32.mxu0 0.0
    %1359 = vmatmul.mubr.f32.gmra.mrb[0].mxu0 %v1292
    %v1360 = vpop.f32.mrb[0].mxu0
    %v1361 = vadd.f32 %v624, %v1360
    %v1362 = vpop.f32.mrb[0].mxu0
    %1363 = vdwg.mxu0
    %v1364 = vmax.f32 %v1361, 0.0
    %1365 = vmatprep.subr.mxu0 0.0
    %1366 = vmatpush1.msra.mxu0 %v625
    %1367 = vmatprep.subr.mxu0 0.0
    %1368 = vmatpush1.msra.mxu0 %v626
    %1369 = vmatprep.subr.mxu0 0.0
    %1370 = vmatpush1.msra.mxu0 %v627
    %1371 = vmatprep.subr.mxu0 0.0
    %1372 = vmatpush1.msra.mxu0 %v628
    %1373 = vmatprep.subr.mxu0 0.0
    %1374 = vmatpush1.msra.mxu0 %v629
    %1375 = vmatprep.subr.mxu0 0.0
    %1376 = vmatpush1.msra.mxu0 %v630
    %1377 = vmatprep.subr.mxu0 0.0
    %1378 = vmatpush1.msra.mxu0 %v631
    %1379 = vmatprep.subr.mxu0 0.0
    %1380 = vmatpush1.msra.mxu0 %v632
    %1381 = vmatprep.subr.mxu0 0.0
    %1382 = vmatpush1.msra.mxu0 %v633
    %1383 = vmatprep.subr.mxu0 0.0
    %1384 = vmatpush1.msra.mxu0 %v634
    %1385 = vmatprep.subr.mxu0 0.0
    %1386 = vmatpush1.msra.mxu0 %v635
    %1387 = vmatprep.subr.mxu0 0.0
    %1388 = vmatpush1.msra.mxu0 %v636
    %1389 = vmatprep.subr.mxu0 0.0
    %1390 = vmatpush1.msra.mxu0 %v637
    %1391 = vmatprep.subr.mxu0 0.0
    %1392 = vmatpush1.msra.mxu0 %v638
    %1393 = vmatprep.subr.mxu0 0.0
    %1394 = vmatpush1.msra.mxu0 %v639
    %1395 = vmatprep.subr.mxu0 0.0
    %1396 = vmatpush1.msra.mxu0 %v640
    %1397 = vmatprep.subr.mxu0 0.0
    %1398 = vmatpush1.msra.mxu0 0.0
    %1399 = vmatprep.subr.mxu0 0.0
    %1400 = vmatpush1.msra.mxu0 0.0
    %1401 = vmatprep.subr.mxu0 0.0
    %1402 = vmatpush1.msra.mxu0 0.0
    %1403 = vmatprep.subr.mxu0 0.0
    %1404 = vmatpush1.msra.mxu0 0.0
    %1405 = vmatprep.subr.mxu0 0.0
    %1406 = vmatpush1.msra.mxu0 0.0
    %1407 = vmatprep.subr.mxu0 0.0
    %1408 = vmatpush1.msra.mxu0 0.0
    %1409 = vmatprep.subr.mxu0 0.0
    %1410 = vmatpush1.msra.mxu0 0.0
    %1411 = vmatprep.subr.mxu0 0.0
    %1412 = vmatpush1.msra.mxu0 0.0
    %1413 = vmatprep.subr.mxu0 0.0
    %1414 = vmatpush1.msra.mxu0 0.0
    %1415 = vmatprep.subr.mxu0 0.0
    %1416 = vmatpush1.msra.mxu0 0.0
    %1417 = vmatprep.subr.mxu0 0.0
    %1418 = vmatpush1.msra.mxu0 0.0
    %1419 = vmatprep.subr.mxu0 0.0
    %1420 = vmatpush1.msra.mxu0 0.0
    %1421 = vmatprep.subr.mxu0 0.0
    %1422 = vmatpush1.msra.mxu0 0.0
    %1423 = vmatprep.subr.mxu0 0.0
    %1424 = vmatpush1.msra.mxu0 0.0
    %1425 = vmatprep.subr.mxu0 0.0
    %1426 = vmatpush1.msra.mxu0 0.0
    %1427 = vmatprep.subr.mxu0 0.0
    %1428 = vmatpush1.msra.mxu0 0.0
    %1429 = vmatprep.mubr.f32.mxu0 0.0
    %1430 = vmatmul.mubr.f32.gmra.mrb[0].mxu0 %v1364
    %v1431 = vpop.f32.mrb[0].mxu0
    %v1432 = vadd.f32 %v641, %v1431
    %v1433 = vpop.f32.mrb[0].mxu0
    %1434 = vdwg.mxu0
    %v1435 = vtanh.pop %v1432
    %1436 = vmatprep.subr.mxu0 %v529
    %1437 = vmatpush1.msra.mxu0 %v528
    %1438 = vmatprep.subr.mxu0 %v533
    %1439 = vmatpush1.msra.mxu0 %v532
    %1440 = vmatprep.subr.mxu0 %v537
    %1441 = vmatpush1.msra.mxu0 %v536
    %1442 = vmatprep.subr.mxu0 %v541
    %1443 = vmatpush1.msra.mxu0 %v540
    %1444 = vmatprep.subr.mxu0 %v545
    %1445 = vmatpush1.msra.mxu0 %v544
    %1446 = vmatprep.subr.mxu0 %v549
    %1447 = vmatpush1.msra.mxu0 %v548
    %1448 = vmatprep.subr.mxu0 %v553
    %1449 = vmatpush1.msra.mxu0 %v552
    %1450 = vmatprep.subr.mxu0 %v557
    %1451 = vmatpush1.msra.mxu0 %v556
    %1452 = vmatprep.subr.mxu0 %v561
    %1453 = vmatpush1.msra.mxu0 %v560
    %1454 = vmatprep.subr.mxu0 %v565
    %1455 = vmatpush1.msra.mxu0 %v564
    %1456 = vmatprep.subr.mxu0 %v569
    %1457 = vmatpush1.msra.mxu0 %v568
    %1458 = vmatprep.subr.mxu0 %v573
    %1459 = vmatpush1.msra.mxu0 %v572
    %1460 = vmatprep.subr.mxu0 %v577
    %1461 = vmatpush1.msra.mxu0 %v576
    %1462 = vmatprep.subr.mxu0 %v581
    %1463 = vmatpush1.msra.mxu0 %v580
    %1464 = vmatprep.subr.mxu0 %v585
    %1465 = vmatpush1.msra.mxu0 %v584
    %1466 = vmatprep.subr.mxu0 %v589
    %1467 = vmatpush1.msra.mxu0 %v588
    %1468 = vmatprep.subr.mxu0 0.0
    %1469 = vmatpush1.msra.mxu0 0.0
    %1470 = vmatprep.subr.mxu0 0.0
    %1471 = vmatpush1.msra.mxu0 0.0
    %1472 = vmatprep.subr.mxu0 0.0
    %1473 = vmatpush1.msra.mxu0 0.0
    %1474 = vmatprep.subr.mxu0 0.0
    %1475 = vmatpush1.msra.mxu0 0.0
    %1476 = vmatprep.subr.mxu0 0.0
    %1477 = vmatpush1.msra.mxu0 0.0
    %1478 = vmatprep.subr.mxu0 0.0
    %1479 = vmatpush1.msra.mxu0 0.0
    %1480 = vmatprep.subr.mxu0 0.0
    %1481 = vmatpush1.msra.mxu0 0.0
    %1482 = vmatprep.subr.mxu0 0.0
    %1483 = vmatpush1.msra.mxu0 0.0
    %1484 = vmatprep.subr.mxu0 0.0
    %1485 = vmatpush1.msra.mxu0 0.0
    %1486 = vmatprep.subr.mxu0 0.0
    %1487 = vmatpush1.msra.mxu0 0.0
    %1488 = vmatprep.subr.mxu0 0.0
    %1489 = vmatpush1.msra.mxu0 0.0
    %1490 = vmatprep.subr.mxu0 0.0
    %1491 = vmatpush1.msra.mxu0 0.0
    %1492 = vmatprep.subr.mxu0 0.0
    %1493 = vmatpush1.msra.mxu0 0.0
    %1494 = vmatprep.subr.mxu0 0.0
    %1495 = vmatpush1.msra.mxu0 0.0
    %1496 = vmatprep.subr.mxu0 0.0
    %1497 = vmatpush1.msra.mxu0 0.0
    %1498 = vmatprep.subr.mxu0 0.0
    %1499 = vmatpush1.msra.mxu0 0.0
    %1500 = vmatprep.mubr.f32.mxu0 0.0
    %1501 = vmatmul.mubr.f32.gmra.mrb[0].mxu0 %v1214
    %v1502 = vpop.f32.mrb[0].mxu0
    %v1503 = vadd.f32 0.0, %v1502
    %v1504 = vpop.f32.mrb[0].mxu0
    %v1505 = vadd.f32 0.0, %v1504
    %1506 = vdwg.mxu0
    %1507 = vmatprep.subr.mxu0 %v531
    %1508 = vmatpush1.msra.mxu0 %v530
    %1509 = vmatprep.subr.mxu0 %v535
    %1510 = vmatpush1.msra.mxu0 %v534
    %1511 = vmatprep.subr.mxu0 %v539
    %1512 = vmatpush1.msra.mxu0 %v538
    %1513 = vmatprep.subr.mxu0 %v543
    %1514 = vmatpush1.msra.mxu0 %v542
    %1515 = vmatprep.subr.mxu0 %v547
    %1516 = vmatpush1.msra.mxu0 %v546
    %1517 = vmatprep.subr.mxu0 %v551
    %1518 = vmatpush1.msra.mxu0 %v550
    %1519 = vmatprep.subr.mxu0 %v555
    %1520 = vmatpush1.msra.mxu0 %v554
    %1521 = vmatprep.subr.mxu0 %v559
    %1522 = vmatpush1.msra.mxu0 %v558
    %1523 = vmatprep.subr.mxu0 %v563
    %1524 = vmatpush1.msra.mxu0 %v562
    %1525 = vmatprep.subr.mxu0 %v567
    %1526 = vmatpush1.msra.mxu0 %v566
    %1527 = vmatprep.subr.mxu0 %v571
    %1528 = vmatpush1.msra.mxu0 %v570
    %1529 = vmatprep.subr.mxu0 %v575
    %1530 = vmatpush1.msra.mxu0 %v574
    %1531 = vmatprep.subr.mxu0 %v579
    %1532 = vmatpush1.msra.mxu0 %v578
    %1533 = vmatprep.subr.mxu0 %v583
    %1534 = vmatpush1.msra.mxu0 %v582
    %1535 = vmatprep.subr.mxu0 %v587
    %1536 = vmatpush1.msra.mxu0 %v586
    %1537 = vmatprep.subr.mxu0 %v591
    %1538 = vmatpush1.msra.mxu0 %v590
    %1539 = vmatprep.subr.mxu0 0.0
    %1540 = vmatpush1.msra.mxu0 0.0
    %1541 = vmatprep.subr.mxu0 0.0
    %1542 = vmatpush1.msra.mxu0 0.0
    %1543 = vmatprep.subr.mxu0 0.0
    %1544 = vmatpush1.msra.mxu0 0.0
    %1545 = vmatprep.subr.mxu0 0.0
    %1546 = vmatpush1.msra.mxu0 0.0
    %1547 = vmatprep.subr.mxu0 0.0
    %1548 = vmatpush1.msra.mxu0 0.0
    %1549 = vmatprep.subr.mxu0 0.0
    %1550 = vmatpush1.msra.mxu0 0.0
    %1551 = vmatprep.subr.mxu0 0.0
    %1552 = vmatpush1.msra.mxu0 0.0
    %1553 = vmatprep.subr.mxu0 0.0
    %1554 = vmatpush1.msra.mxu0 0.0
    %1555 = vmatprep.subr.mxu0 0.0
    %1556 = vmatpush1.msra.mxu0 0.0
    %1557 = vmatprep.subr.mxu0 0.0
    %1558 = vmatpush1.msra.mxu0 0.0
    %1559 = vmatprep.subr.mxu0 0.0
    %1560 = vmatpush1.msra.mxu0 0.0
    %1561 = vmatprep.subr.mxu0 0.0
    %1562 = vmatpush1.msra.mxu0 0.0
    %1563 = vmatprep.subr.mxu0 0.0
    %1564 = vmatpush1.msra.mxu0 0.0
    %1565 = vmatprep.subr.mxu0 0.0
    %1566 = vmatpush1.msra.mxu0 0.0
    %1567 = vmatprep.subr.mxu0 0.0
    %1568 = vmatpush1.msra.mxu0 0.0
    %1569 = vmatprep.subr.mxu0 0.0
    %1570 = vmatpush1.msra.mxu0 0.0
    %1571 = vmatprep.mubr.f32.mxu0 0.0
    %1572 = vmatmul.mubr.f32.gmra.mrb[0].mxu0 %v1214
    %v1573 = vpop.f32.mrb[0].mxu0
    %v1574 = vadd.f32 0.0, %v1573
    %v1575 = vpop.f32.mrb[0].mxu0
    %v1576 = vadd.f32 0.0, %v1575
    %1577 = vdwg.mxu0
    %v1582 = vrot.slane %v1503, 6
    %v1583 = vrot.slane %v1505, 6
    %v1584 = vrot.slane %v1574, 6
    %v1585 = vrot.slane %v1576, 6
    %v1590 = vadd.f32 %v360, %v1582
    %v1591 = vadd.f32 %v362, %v1583
    %v1592 = vadd.f32 %v431, %v1584
    %v1593 = vadd.f32 %v433, %v1585
    %v1594 = vxor.u32 %v1590, 2147483648
    %v1595 = vmul.f32 %v1594, 1.442695
    %v1596 = vpow.pop %v1595
    %v1597 = vadd.f32 %v1596, 1.0
    %v1598 = vrcp.pop %v1597
    %v1599 = vmul.f32 1.0, %v1598
    %v1600 = vxor.u32 %v1591, 2147483648
    %v1601 = vmul.f32 %v1600, 1.442695
    %v1602 = vpow.pop %v1601
    %v1603 = vadd.f32 %v1602, 1.0
    %v1604 = vrcp.pop %v1603
    %v1605 = vmul.f32 1.0, %v1604
    %v1606 = vtanh.pop %v1592
    %v1607 = vxor.u32 %v1593, 2147483648
    %v1608 = vmul.f32 %v1607, 1.442695
    %v1609 = vpow.pop %v1608
    %v1610 = vadd.f32 %v1609, 1.0
    %v1611 = vrcp.pop %v1610
    %v1612 = vmul.f32 1.0, %v1611
    %v1614 = vrot.slane %v1210, 7
    %v1616 = vmul.f32 %v1605, %v1614
    %v1617 = vmul.f32 %v1599, %v1606
    %v1618 = vadd.f32 %v1616, %v1617
    %v1619 = vtanh.pop %v1618
    %v1620 = vmul.f32 %v1612, %v1619
    %v1622 = vrot.slane %v1620, 2
    %1624 = vmatprep.subr.mxu0 0.0
    %1625 = vmatpush1.msra.mxu0 %v592
    %1626 = vmatprep.subr.mxu0 0.0
    %1627 = vmatpush1.msra.mxu0 %v593
    %1628 = vmatprep.subr.mxu0 0.0
    %1629 = vmatpush1.msra.mxu0 %v594
    %1630 = vmatprep.subr.mxu0 0.0
    %1631 = vmatpush1.msra.mxu0 %v595
    %1632 = vmatprep.subr.mxu0 0.0
    %1633 = vmatpush1.msra.mxu0 %v596
    %1634 = vmatprep.subr.mxu0 0.0
    %1635 = vmatpush1.msra.mxu0 %v597
    %1636 = vmatprep.subr.mxu0 0.0
    %1637 = vmatpush1.msra.mxu0 %v598
    %1638 = vmatprep.subr.mxu0 0.0
    %1639 = vmatpush1.msra.mxu0 %v599
    %1640 = vmatprep.subr.mxu0 0.0
    %1641 = vmatpush1.msra.mxu0 %v600
    %1642 = vmatprep.subr.mxu0 0.0
    %1643 = vmatpush1.msra.mxu0 %v601
    %1644 = vmatprep.subr.mxu0 0.0
    %1645 = vmatpush1.msra.mxu0 %v602
    %1646 = vmatprep.subr.mxu0 0.0
    %1647 = vmatpush1.msra.mxu0 %v603
    %1648 = vmatprep.subr.mxu0 0.0
    %1649 = vmatpush1.msra.mxu0 %v604
    %1650 = vmatprep.subr.mxu0 0.0
    %1651 = vmatpush1.msra.mxu0 %v605
    %1652 = vmatprep.subr.mxu0 0.0
    %1653 = vmatpush1.msra.mxu0 %v606
    %1654 = vmatprep.subr.mxu0 0.0
    %1655 = vmatpush1.msra.mxu0 %v607
    %1656 = vmatprep.subr.mxu0 0.0
    %1657 = vmatpush1.msra.mxu0 0.0
    %1658 = vmatprep.subr.mxu0 0.0
    %1659 = vmatpush1.msra.mxu0 0.0
    %1660 = vmatprep.subr.mxu0 0.0
    %1661 = vmatpush1.msra.mxu0 0.0
    %1662 = vmatprep.subr.mxu0 0.0
    %1663 = vmatpush1.msra.mxu0 0.0
    %1664 = vmatprep.subr.mxu0 0.0
    %1665 = vmatpush1.msra.mxu0 0.0
    %1666 = vmatprep.subr.mxu0 0.0
    %1667 = vmatpush1.msra.mxu0 0.0
    %1668 = vmatprep.subr.mxu0 0.0
    %1669 = vmatpush1.msra.mxu0 0.0
    %1670 = vmatprep.subr.mxu0 0.0
    %1671 = vmatpush1.msra.mxu0 0.0
    %1672 = vmatprep.subr.mxu0 0.0
    %1673 = vmatpush1.msra.mxu0 0.0
    %1674 = vmatprep.subr.mxu0 0.0
    %1675 = vmatpush1.msra.mxu0 0.0
    %1676 = vmatprep.subr.mxu0 0.0
    %1677 = vmatpush1.msra.mxu0 0.0
    %1678 = vmatprep.subr.mxu0 0.0
    %1679 = vmatpush1.msra.mxu0 0.0
    %1680 = vmatprep.subr.mxu0 0.0
    %1681 = vmatpush1.msra.mxu0 0.0
    %1682 = vmatprep.subr.mxu0 0.0
    %1683 = vmatpush1.msra.mxu0 0.0
    %1684 = vmatprep.subr.mxu0 0.0
    %1685 = vmatpush1.msra.mxu0 0.0
    %1686 = vmatprep.subr.mxu0 0.0
    %1687 = vmatpush1.msra.mxu0 0.0
    %1688 = vmatprep.mubr.f32.mxu0 0.0
    %1689 = vmatmul.mubr.f32.gmra.mrb[0].mxu0 %v1622
    %v1690 = vpop.f32.mrb[0].mxu0
    %v1691 = vadd.f32 0.0, %v1690
    %v1692 = vpop.f32.mrb[0].mxu0
    %1693 = vdwg.mxu0
    %v1695 = vrot.slane %v1691, 6
    %v1697 = vadd.f32 %v525, %v1695
    %v1698 = vmax.f32 %v1697, 0.0
    %v1700 = vrot.slane %v1698, 2
    %1702 = vmatprep.subr.mxu0 0.0
    %1703 = vmatpush1.msra.mxu0 %v608
    %1704 = vmatprep.subr.mxu0 0.0
    %1705 = vmatpush1.msra.mxu0 %v609
    %1706 = vmatprep.subr.mxu0 0.0
    %1707 = vmatpush1.msra.mxu0 %v610
    %1708 = vmatprep.subr.mxu0 0.0
    %1709 = vmatpush1.msra.mxu0 %v611
    %1710 = vmatprep.subr.mxu0 0.0
    %1711 = vmatpush1.msra.mxu0 %v612
    %1712 = vmatprep.subr.mxu0 0.0
    %1713 = vmatpush1.msra.mxu0 %v613
    %1714 = vmatprep.subr.mxu0 0.0
    %1715 = vmatpush1.msra.mxu0 %v614
    %1716 = vmatprep.subr.mxu0 0.0
    %1717 = vmatpush1.msra.mxu0 %v615
    %1718 = vmatprep.subr.mxu0 0.0
    %1719 = vmatpush1.msra.mxu0 %v616
    %1720 = vmatprep.subr.mxu0 0.0
    %1721 = vmatpush1.msra.mxu0 %v617
    %1722 = vmatprep.subr.mxu0 0.0
    %1723 = vmatpush1.msra.mxu0 %v618
    %1724 = vmatprep.subr.mxu0 0.0
    %1725 = vmatpush1.msra.mxu0 %v619
    %1726 = vmatprep.subr.mxu0 0.0
    %1727 = vmatpush1.msra.mxu0 %v620
    %1728 = vmatprep.subr.mxu0 0.0
    %1729 = vmatpush1.msra.mxu0 %v621
    %1730 = vmatprep.subr.mxu0 0.0
    %1731 = vmatpush1.msra.mxu0 %v622
    %1732 = vmatprep.subr.mxu0 0.0
    %1733 = vmatpush1.msra.mxu0 %v623
    %1734 = vmatprep.subr.mxu0 0.0
    %1735 = vmatpush1.msra.mxu0 0.0
    %1736 = vmatprep.subr.mxu0 0.0
    %1737 = vmatpush1.msra.mxu0 0.0
    %1738 = vmatprep.subr.mxu0 0.0
    %1739 = vmatpush1.msra.mxu0 0.0
    %1740 = vmatprep.subr.mxu0 0.0
    %1741 = vmatpush1.msra.mxu0 0.0
    %1742 = vmatprep.subr.mxu0 0.0
    %1743 = vmatpush1.msra.mxu0 0.0
    %1744 = vmatprep.subr.mxu0 0.0
    %1745 = vmatpush1.msra.mxu0 0.0
    %1746 = vmatprep.subr.mxu0 0.0
    %1747 = vmatpush1.msra.mxu0 0.0
    %1748 = vmatprep.subr.mxu0 0.0
    %1749 = vmatpush1.msra.mxu0 0.0
    %1750 = vmatprep.subr.mxu0 0.0
    %1751 = vmatpush1.msra.mxu0 0.0
    %1752 = vmatprep.subr.mxu0 0.0
    %1753 = vmatpush1.msra.mxu0 0.0
    %1754 = vmatprep.subr.mxu0 0.0
    %1755 = vmatpush1.msra.mxu0 0.0
    %1756 = vmatprep.subr.mxu0 0.0
    %1757 = vmatpush1.msra.mxu0 0.0
    %1758 = vmatprep.subr.mxu0 0.0
    %1759 = vmatpush1.msra.mxu0 0.0
    %1760 = vmatprep.subr.mxu0 0.0
    %1761 = vmatpush1.msra.mxu0 0.0
    %1762 = vmatprep.subr.mxu0 0.0
    %1763 = vmatpush1.msra.mxu0 0.0
    %1764 = vmatprep.subr.mxu0 0.0
    %1765 = vmatpush1.msra.mxu0 0.0
    %1766 = vmatprep.mubr.f32.mxu0 0.0
    %1767 = vmatmul.mubr.f32.gmra.mrb[0].mxu0 %v1700
    %v1768 = vpop.f32.mrb[0].mxu0
    %v1769 = vadd.f32 %v624, %v1768
    %v1770 = vpop.f32.mrb[0].mxu0
    %1771 = vdwg.mxu0
    %v1772 = vmax.f32 %v1769, 0.0
    %1773 = vmatprep.subr.mxu0 0.0
    %1774 = vmatpush1.msra.mxu0 %v625
    %1775 = vmatprep.subr.mxu0 0.0
    %1776 = vmatpush1.msra.mxu0 %v626
    %1777 = vmatprep.subr.mxu0 0.0
    %1778 = vmatpush1.msra.mxu0 %v627
    %1779 = vmatprep.subr.mxu0 0.0
    %1780 = vmatpush1.msra.mxu0 %v628
    %1781 = vmatprep.subr.mxu0 0.0
    %1782 = vmatpush1.msra.mxu0 %v629
    %1783 = vmatprep.subr.mxu0 0.0
    %1784 = vmatpush1.msra.mxu0 %v630
    %1785 = vmatprep.subr.mxu0 0.0
    %1786 = vmatpush1.msra.mxu0 %v631
    %1787 = vmatprep.subr.mxu0 0.0
    %1788 = vmatpush1.msra.mxu0 %v632
    %1789 = vmatprep.subr.mxu0 0.0
    %1790 = vmatpush1.msra.mxu0 %v633
    %1791 = vmatprep.subr.mxu0 0.0
    %1792 = vmatpush1.msra.mxu0 %v634
    %1793 = vmatprep.subr.mxu0 0.0
    %1794 = vmatpush1.msra.mxu0 %v635
    %1795 = vmatprep.subr.mxu0 0.0
    %1796 = vmatpush1.msra.mxu0 %v636
    %1797 = vmatprep.subr.mxu0 0.0
    %1798 = vmatpush1.msra.mxu0 %v637
    %1799 = vmatprep.subr.mxu0 0.0
    %1800 = vmatpush1.msra.mxu0 %v638
    %1801 = vmatprep.subr.mxu0 0.0
    %1802 = vmatpush1.msra.mxu0 %v639
    %1803 = vmatprep.subr.mxu0 0.0
    %1804 = vmatpush1.msra.mxu0 %v640
    %1805 = vmatprep.subr.mxu0 0.0
    %1806 = vmatpush1.msra.mxu0 0.0
    %1807 = vmatprep.subr.mxu0 0.0
    %1808 = vmatpush1.msra.mxu0 0.0
    %1809 = vmatprep.subr.mxu0 0.0
    %1810 = vmatpush1.msra.mxu0 0.0
    %1811 = vmatprep.subr.mxu0 0.0
    %1812 = vmatpush1.msra.mxu0 0.0
    %1813 = vmatprep.subr.mxu0 0.0
    %1814 = vmatpush1.msra.mxu0 0.0
    %1815 = vmatprep.subr.mxu0 0.0
    %1816 = vmatpush1.msra.mxu0 0.0
    %1817 = vmatprep.subr.mxu0 0.0
    %1818 = vmatpush1.msra.mxu0 0.0
    %1819 = vmatprep.subr.mxu0 0.0
    %1820 = vmatpush1.msra.mxu0 0.0
    %1821 = vmatprep.subr.mxu0 0.0
    %1822 = vmatpush1.msra.mxu0 0.0
    %1823 = vmatprep.subr.mxu0 0.0
    %1824 = vmatpush1.msra.mxu0 0.0
    %1825 = vmatprep.subr.mxu0 0.0
    %1826 = vmatpush1.msra.mxu0 0.0
    %1827 = vmatprep.subr.mxu0 0.0
    %1828 = vmatpush1.msra.mxu0 0.0
    %1829 = vmatprep.subr.mxu0 0.0
    %1830 = vmatpush1.msra.mxu0 0.0
    %1831 = vmatprep.subr.mxu0 0.0
    %1832 = vmatpush1.msra.mxu0 0.0
    %1833 = vmatprep.subr.mxu0 0.0
    %1834 = vmatpush1.msra.mxu0 0.0
    %1835 = vmatprep.subr.mxu0 0.0
    %1836 = vmatpush1.msra.mxu0 0.0
    %1837 = vmatprep.mubr.f32.mxu0 0.0
    %1838 = vmatmul.mubr.f32.gmra.mrb[0].mxu0 %v1772
    %v1839 = vpop.f32.mrb[0].mxu0
    %v1840 = vadd.f32 %v641, %v1839
    %v1841 = vpop.f32.mrb[0].mxu0
    %1842 = vdwg.mxu0
    %v1843 = vtanh.pop %v1840
    %1844 = vmatprep.subr.mxu0 %v529
    %1845 = vmatpush1.msra.mxu0 %v528
    %1846 = vmatprep.subr.mxu0 %v533
    %1847 = vmatpush1.msra.mxu0 %v532
    %1848 = vmatprep.subr.mxu0 %v537
    %1849 = vmatpush1.msra.mxu0 %v536
    %1850 = vmatprep.subr.mxu0 %v541
    %1851 = vmatpush1.msra.mxu0 %v540
    %1852 = vmatprep.subr.mxu0 %v545
    %1853 = vmatpush1.msra.mxu0 %v544
    %1854 = vmatprep.subr.mxu0 %v549
    %1855 = vmatpush1.msra.mxu0 %v548
    %1856 = vmatprep.subr.mxu0 %v553
    %1857 = vmatpush1.msra.mxu0 %v552
    %1858 = vmatprep.subr.mxu0 %v557
    %1859 = vmatpush1.msra.mxu0 %v556
    %1860 = vmatprep.subr.mxu0 %v561
    %1861 = vmatpush1.msra.mxu0 %v560
    %1862 = vmatprep.subr.mxu0 %v565
    %1863 = vmatpush1.msra.mxu0 %v564
    %1864 = vmatprep.subr.mxu0 %v569
    %1865 = vmatpush1.msra.mxu0 %v568
    %1866 = vmatprep.subr.mxu0 %v573
    %1867 = vmatpush1.msra.mxu0 %v572
    %1868 = vmatprep.subr.mxu0 %v577
    %1869 = vmatpush1.msra.mxu0 %v576
    %1870 = vmatprep.subr.mxu0 %v581
    %1871 = vmatpush1.msra.mxu0 %v580
    %1872 = vmatprep.subr.mxu0 %v585
    %1873 = vmatpush1.msra.mxu0 %v584
    %1874 = vmatprep.subr.mxu0 %v589
    %1875 = vmatpush1.msra.mxu0 %v588
    %1876 = vmatprep.subr.mxu0 0.0
    %1877 = vmatpush1.msra.mxu0 0.0
    %1878 = vmatprep.subr.mxu0 0.0
    %1879 = vmatpush1.msra.mxu0 0.0
    %1880 = vmatprep.subr.mxu0 0.0
    %1881 = vmatpush1.msra.mxu0 0.0
    %1882 = vmatprep.subr.mxu0 0.0
    %1883 = vmatpush1.msra.mxu0 0.0
    %1884 = vmatprep.subr.mxu0 0.0
    %1885 = vmatpush1.msra.mxu0 0.0
    %1886 = vmatprep.subr.mxu0 0.0
    %1887 = vmatpush1.msra.mxu0 0.0
    %1888 = vmatprep.subr.mxu0 0.0
    %1889 = vmatpush1.msra.mxu0 0.0
    %1890 = vmatprep.subr.mxu0 0.0
    %1891 = vmatpush1.msra.mxu0 0.0
    %1892 = vmatprep.subr.mxu0 0.0
    %1893 = vmatpush1.msra.mxu0 0.0
    %1894 = vmatprep.subr.mxu0 0.0
    %1895 = vmatpush1.msra.mxu0 0.0
    %1896 = vmatprep.subr.mxu0 0.0
    %1897 = vmatpush1.msra.mxu0 0.0
    %1898 = vmatprep.subr.mxu0 0.0
    %1899 = vmatpush1.msra.mxu0 0.0
    %1900 = vmatprep.subr.mxu0 0.0
    %1901 = vmatpush1.msra.mxu0 0.0
    %1902 = vmatprep.subr.mxu0 0.0
    %1903 = vmatpush1.msra.mxu0 0.0
    %1904 = vmatprep.subr.mxu0 0.0
    %1905 = vmatpush1.msra.mxu0 0.0
    %1906 = vmatprep.subr.mxu0 0.0
    %1907 = vmatpush1.msra.mxu0 0.0
    %1908 = vmatprep.mubr.f32.mxu0 0.0
    %1909 = vmatmul.mubr.f32.gmra.mrb[0].mxu0 %v1622
    %v1910 = vpop.f32.mrb[0].mxu0
    %v1911 = vadd.f32 0.0, %v1910
    %v1912 = vpop.f32.mrb[0].mxu0
    %v1913 = vadd.f32 0.0, %v1912
    %1914 = vdwg.mxu0
    %1915 = vmatprep.subr.mxu0 %v531
    %1916 = vmatpush1.msra.mxu0 %v530
    %1917 = vmatprep.subr.mxu0 %v535
    %1918 = vmatpush1.msra.mxu0 %v534
    %1919 = vmatprep.subr.mxu0 %v539
    %1920 = vmatpush1.msra.mxu0 %v538
    %1921 = vmatprep.subr.mxu0 %v543
    %1922 = vmatpush1.msra.mxu0 %v542
    %1923 = vmatprep.subr.mxu0 %v547
    %1924 = vmatpush1.msra.mxu0 %v546
    %1925 = vmatprep.subr.mxu0 %v551
    %1926 = vmatpush1.msra.mxu0 %v550
    %1927 = vmatprep.subr.mxu0 %v555
    %1928 = vmatpush1.msra.mxu0 %v554
    %1929 = vmatprep.subr.mxu0 %v559
    %1930 = vmatpush1.msra.mxu0 %v558
    %1931 = vmatprep.subr.mxu0 %v563
    %1932 = vmatpush1.msra.mxu0 %v562
    %1933 = vmatprep.subr.mxu0 %v567
    %1934 = vmatpush1.msra.mxu0 %v566
    %1935 = vmatprep.subr.mxu0 %v571
    %1936 = vmatpush1.msra.mxu0 %v570
    %1937 = vmatprep.subr.mxu0 %v575
    %1938 = vmatpush1.msra.mxu0 %v574
    %1939 = vmatprep.subr.mxu0 %v579
    %1940 = vmatpush1.msra.mxu0 %v578
    %1941 = vmatprep.subr.mxu0 %v583
    %1942 = vmatpush1.msra.mxu0 %v582
    %1943 = vmatprep.subr.mxu0 %v587
    %1944 = vmatpush1.msra.mxu0 %v586
    %1945 = vmatprep.subr.mxu0 %v591
    %1946 = vmatpush1.msra.mxu0 %v590
    %1947 = vmatprep.subr.mxu0 0.0
    %1948 = vmatpush1.msra.mxu0 0.0
    %1949 = vmatprep.subr.mxu0 0.0
    %1950 = vmatpush1.msra.mxu0 0.0
    %1951 = vmatprep.subr.mxu0 0.0
    %1952 = vmatpush1.msra.mxu0 0.0
    %1953 = vmatprep.subr.mxu0 0.0
    %1954 = vmatpush1.msra.mxu0 0.0
    %1955 = vmatprep.subr.mxu0 0.0
    %1956 = vmatpush1.msra.mxu0 0.0
    %1957 = vmatprep.subr.mxu0 0.0
    %1958 = vmatpush1.msra.mxu0 0.0
    %1959 = vmatprep.subr.mxu0 0.0
    %1960 = vmatpush1.msra.mxu0 0.0
    %1961 = vmatprep.subr.mxu0 0.0
    %1962 = vmatpush1.msra.mxu0 0.0
    %1963 = vmatprep.subr.mxu0 0.0
    %1964 = vmatpush1.msra.mxu0 0.0
    %1965 = vmatprep.subr.mxu0 0.0
    %1966 = vmatpush1.msra.mxu0 0.0
    %1967 = vmatprep.subr.mxu0 0.0
    %1968 = vmatpush1.msra.mxu0 0.0
    %1969 = vmatprep.subr.mxu0 0.0
    %1970 = vmatpush1.msra.mxu0 0.0
    %1971 = vmatprep.subr.mxu0 0.0
    %1972 = vmatpush1.msra.mxu0 0.0
    %1973 = vmatprep.subr.mxu0 0.0
    %1974 = vmatpush1.msra.mxu0 0.0
    %1975 = vmatprep.subr.mxu0 0.0
    %1976 = vmatpush1.msra.mxu0 0.0
    %1977 = vmatprep.subr.mxu0 0.0
    %1978 = vmatpush1.msra.mxu0 0.0
    %1979 = vmatprep.mubr.f32.mxu0 0.0
    %1980 = vmatmul.mubr.f32.gmra.mrb[0].mxu0 %v1622
    %v1981 = vpop.f32.mrb[0].mxu0
    %v1982 = vadd.f32 0.0, %v1981
    %v1983 = vpop.f32.mrb[0].mxu0
    %v1984 = vadd.f32 0.0, %v1983
    %1985 = vdwg.mxu0
    %v1990 = vrot.slane %v1911, 5
    %v1991 = vrot.slane %v1913, 5
    %v1992 = vrot.slane %v1982, 5
    %v1993 = vrot.slane %v1984, 5
    %v1998 = vadd.f32 %v360, %v1990
    %v1999 = vadd.f32 %v362, %v1991
    %v2000 = vadd.f32 %v431, %v1992
    %v2001 = vadd.f32 %v433, %v1993
    %v2002 = vxor.u32 %v1998, 2147483648
    %v2003 = vmul.f32 %v2002, 1.442695
    %v2004 = vpow.pop %v2003
    %v2005 = vadd.f32 %v2004, 1.0
    %v2006 = vrcp.pop %v2005
    %v2007 = vmul.f32 1.0, %v2006
    %v2008 = vxor.u32 %v1999, 2147483648
    %v2009 = vmul.f32 %v2008, 1.442695
    %v2010 = vpow.pop %v2009
    %v2011 = vadd.f32 %v2010, 1.0
    %v2012 = vrcp.pop %v2011
    %v2013 = vmul.f32 1.0, %v2012
    %v2014 = vtanh.pop %v2000
    %v2015 = vxor.u32 %v2001, 2147483648
    %v2016 = vmul.f32 %v2015, 1.442695
    %v2017 = vpow.pop %v2016
    %v2018 = vadd.f32 %v2017, 1.0
    %v2019 = vrcp.pop %v2018
    %v2020 = vmul.f32 1.0, %v2019
    %v2022 = vrot.slane %v1618, 7
    %v2024 = vmul.f32 %v2013, %v2022
    %v2025 = vmul.f32 %v2007, %v2014
    %v2026 = vadd.f32 %v2024, %v2025
    %v2027 = vtanh.pop %v2026
    %v2028 = vmul.f32 %v2020, %v2027
    %v2030 = vrot.slane %v2028, 3
    %2032 = vmatprep.subr.mxu0 0.0
    %2033 = vmatpush1.msra.mxu0 %v592
    %2034 = vmatprep.subr.mxu0 0.0
    %2035 = vmatpush1.msra.mxu0 %v593
    %2036 = vmatprep.subr.mxu0 0.0
    %2037 = vmatpush1.msra.mxu0 %v594
    %2038 = vmatprep.subr.mxu0 0.0
    %2039 = vmatpush1.msra.mxu0 %v595
    %2040 = vmatprep.subr.mxu0 0.0
    %2041 = vmatpush1.msra.mxu0 %v596
    %2042 = vmatprep.subr.mxu0 0.0
    %2043 = vmatpush1.msra.mxu0 %v597
    %2044 = vmatprep.subr.mxu0 0.0
    %2045 = vmatpush1.msra.mxu0 %v598
    %2046 = vmatprep.subr.mxu0 0.0
    %2047 = vmatpush1.msra.mxu0 %v599
    %2048 = vmatprep.subr.mxu0 0.0
    %2049 = vmatpush1.msra.mxu0 %v600
    %2050 = vmatprep.subr.mxu0 0.0
    %2051 = vmatpush1.msra.mxu0 %v601
    %2052 = vmatprep.subr.mxu0 0.0
    %2053 = vmatpush1.msra.mxu0 %v602
    %2054 = vmatprep.subr.mxu0 0.0
    %2055 = vmatpush1.msra.mxu0 %v603
    %2056 = vmatprep.subr.mxu0 0.0
    %2057 = vmatpush1.msra.mxu0 %v604
    %2058 = vmatprep.subr.mxu0 0.0
    %2059 = vmatpush1.msra.mxu0 %v605
    %2060 = vmatprep.subr.mxu0 0.0
    %2061 = vmatpush1.msra.mxu0 %v606
    %2062 = vmatprep.subr.mxu0 0.0
    %2063 = vmatpush1.msra.mxu0 %v607
    %2064 = vmatprep.subr.mxu0 0.0
    %2065 = vmatpush1.msra.mxu0 0.0
    %2066 = vmatprep.subr.mxu0 0.0
    %2067 = vmatpush1.msra.mxu0 0.0
    %2068 = vmatprep.subr.mxu0 0.0
    %2069 = vmatpush1.msra.mxu0 0.0
    %2070 = vmatprep.subr.mxu0 0.0
    %2071 = vmatpush1.msra.mxu0 0.0
    %2072 = vmatprep.subr.mxu0 0.0
    %2073 = vmatpush1.msra.mxu0 0.0
    %2074 = vmatprep.subr.mxu0 0.0
    %2075 = vmatpush1.msra.mxu0 0.0
    %2076 = vmatprep.subr.mxu0 0.0
    %2077 = vmatpush1.msra.mxu0 0.0
    %2078 = vmatprep.subr.mxu0 0.0
    %2079 = vmatpush1.msra.mxu0 0.0
    %2080 = vmatprep.subr.mxu0 0.0
    %2081 = vmatpush1.msra.mxu0 0.0
    %2082 = vmatprep.subr.mxu0 0.0
    %2083 = vmatpush1.msra.mxu0 0.0
    %2084 = vmatprep.subr.mxu0 0.0
    %2085 = vmatpush1.msra.mxu0 0.0
    %2086 = vmatprep.subr.mxu0 0.0
    %2087 = vmatpush1.msra.mxu0 0.0
    %2088 = vmatprep.subr.mxu0 0.0
    %2089 = vmatpush1.msra.mxu0 0.0
    %2090 = vmatprep.subr.mxu0 0.0
    %2091 = vmatpush1.msra.mxu0 0.0
    %2092 = vmatprep.subr.mxu0 0.0
    %2093 = vmatpush1.msra.mxu0 0.0
    %2094 = vmatprep.subr.mxu0 0.0
    %2095 = vmatpush1.msra.mxu0 0.0
    %2096 = vmatprep.mubr.f32.mxu0 0.0
    %2097 = vmatmul.mubr.f32.gmra.mrb[0].mxu0 %v2030
    %v2098 = vpop.f32.mrb[0].mxu0
    %v2099 = vadd.f32 0.0, %v2098
    %v2100 = vpop.f32.mrb[0].mxu0
    %2101 = vdwg.mxu0
    %v2103 = vrot.slane %v2099, 5
    %v2105 = vadd.f32 %v525, %v2103
    %v2106 = vmax.f32 %v2105, 0.0
    %v2108 = vrot.slane %v2106, 3
    %2110 = vmatprep.subr.mxu0 0.0
    %2111 = vmatpush1.msra.mxu0 %v608
    %2112 = vmatprep.subr.mxu0 0.0
    %2113 = vmatpush1.msra.mxu0 %v609
    %2114 = vmatprep.subr.mxu0 0.0
    %2115 = vmatpush1.msra.mxu0 %v610
    %2116 = vmatprep.subr.mxu0 0.0
    %2117 = vmatpush1.msra.mxu0 %v611
    %2118 = vmatprep.subr.mxu0 0.0
    %2119 = vmatpush1.msra.mxu0 %v612
    %2120 = vmatprep.subr.mxu0 0.0
    %2121 = vmatpush1.msra.mxu0 %v613
    %2122 = vmatprep.subr.mxu0 0.0
    %2123 = vmatpush1.msra.mxu0 %v614
    %2124 = vmatprep.subr.mxu0 0.0
    %2125 = vmatpush1.msra.mxu0 %v615
    %2126 = vmatprep.subr.mxu0 0.0
    %2127 = vmatpush1.msra.mxu0 %v616
    %2128 = vmatprep.subr.mxu0 0.0
    %2129 = vmatpush1.msra.mxu0 %v617
    %2130 = vmatprep.subr.mxu0 0.0
    %2131 = vmatpush1.msra.mxu0 %v618
    %2132 = vmatprep.subr.mxu0 0.0
    %2133 = vmatpush1.msra.mxu0 %v619
    %2134 = vmatprep.subr.mxu0 0.0
    %2135 = vmatpush1.msra.mxu0 %v620
    %2136 = vmatprep.subr.mxu0 0.0
    %2137 = vmatpush1.msra.mxu0 %v621
    %2138 = vmatprep.subr.mxu0 0.0
    %2139 = vmatpush1.msra.mxu0 %v622
    %2140 = vmatprep.subr.mxu0 0.0
    %2141 = vmatpush1.msra.mxu0 %v623
    %2142 = vmatprep.subr.mxu0 0.0
    %2143 = vmatpush1.msra.mxu0 0.0
    %2144 = vmatprep.subr.mxu0 0.0
    %2145 = vmatpush1.msra.mxu0 0.0
    %2146 = vmatprep.subr.mxu0 0.0
    %2147 = vmatpush1.msra.mxu0 0.0
    %2148 = vmatprep.subr.mxu0 0.0
    %2149 = vmatpush1.msra.mxu0 0.0
    %2150 = vmatprep.subr.mxu0 0.0
    %2151 = vmatpush1.msra.mxu0 0.0
    %2152 = vmatprep.subr.mxu0 0.0
    %2153 = vmatpush1.msra.mxu0 0.0
    %2154 = vmatprep.subr.mxu0 0.0
    %2155 = vmatpush1.msra.mxu0 0.0
    %2156 = vmatprep.subr.mxu0 0.0
    %2157 = vmatpush1.msra.mxu0 0.0
    %2158 = vmatprep.subr.mxu0 0.0
    %2159 = vmatpush1.msra.mxu0 0.0
    %2160 = vmatprep.subr.mxu0 0.0
    %2161 = vmatpush1.msra.mxu0 0.0
    %2162 = vmatprep.subr.mxu0 0.0
    %2163 = vmatpush1.msra.mxu0 0.0
    %2164 = vmatprep.subr.mxu0 0.0
    %2165 = vmatpush1.msra.mxu0 0.0
    %2166 = vmatprep.subr.mxu0 0.0
    %2167 = vmatpush1.msra.mxu0 0.0
    %2168 = vmatprep.subr.mxu0 0.0
    %2169 = vmatpush1.msra.mxu0 0.0
    %2170 = vmatprep.subr.mxu0 0.0
    %2171 = vmatpush1.msra.mxu0 0.0
    %2172 = vmatprep.subr.mxu0 0.0
    %2173 = vmatpush1.msra.mxu0 0.0
    %2174 = vmatprep.mubr.f32.mxu0 0.0
    %2175 = vmatmul.mubr.f32.gmra.mrb[0].mxu0 %v2108
    %v2176 = vpop.f32.mrb[0].mxu0
    %v2177 = vadd.f32 %v624, %v2176
    %v2178 = vpop.f32.mrb[0].mxu0
    %2179 = vdwg.mxu0
    %v2180 = vmax.f32 %v2177, 0.0
    %2181 = vmatprep.subr.mxu0 0.0
    %2182 = vmatpush1.msra.mxu0 %v625
    %2183 = vmatprep.subr.mxu0 0.0
    %2184 = vmatpush1.msra.mxu0 %v626
    %2185 = vmatprep.subr.mxu0 0.0
    %2186 = vmatpush1.msra.mxu0 %v627
    %2187 = vmatprep.subr.mxu0 0.0
    %2188 = vmatpush1.msra.mxu0 %v628
    %2189 = vmatprep.subr.mxu0 0.0
    %2190 = vmatpush1.msra.mxu0 %v629
    %2191 = vmatprep.subr.mxu0 0.0
    %2192 = vmatpush1.msra.mxu0 %v630
    %2193 = vmatprep.subr.mxu0 0.0
    %2194 = vmatpush1.msra.mxu0 %v631
    %2195 = vmatprep.subr.mxu0 0.0
    %2196 = vmatpush1.msra.mxu0 %v632
    %2197 = vmatprep.subr.mxu0 0.0
    %2198 = vmatpush1.msra.mxu0 %v633
    %2199 = vmatprep.subr.mxu0 0.0
    %2200 = vmatpush1.msra.mxu0 %v634
    %2201 = vmatprep.subr.mxu0 0.0
    %2202 = vmatpush1.msra.mxu0 %v635
    %2203 = vmatprep.subr.mxu0 0.0
    %2204 = vmatpush1.msra.mxu0 %v636
    %2205 = vmatprep.subr.mxu0 0.0
    %2206 = vmatpush1.msra.mxu0 %v637
    %2207 = vmatprep.subr.mxu0 0.0
    %2208 = vmatpush1.msra.mxu0 %v638
    %2209 = vmatprep.subr.mxu0 0.0
    %2210 = vmatpush1.msra.mxu0 %v639
    %2211 = vmatprep.subr.mxu0 0.0
    %2212 = vmatpush1.msra.mxu0 %v640
    %2213 = vmatprep.subr.mxu0 0.0
    %2214 = vmatpush1.msra.mxu0 0.0
    %2215 = vmatprep.subr.mxu0 0.0
    %2216 = vmatpush1.msra.mxu0 0.0
    %2217 = vmatprep.subr.mxu0 0.0
    %2218 = vmatpush1.msra.mxu0 0.0
    %2219 = vmatprep.subr.mxu0 0.0
    %2220 = vmatpush1.msra.mxu0 0.0
    %2221 = vmatprep.subr.mxu0 0.0
    %2222 = vmatpush1.msra.mxu0 0.0
    %2223 = vmatprep.subr.mxu0 0.0
    %2224 = vmatpush1.msra.mxu0 0.0
    %2225 = vmatprep.subr.mxu0 0.0
    %2226 = vmatpush1.msra.mxu0 0.0
    %2227 = vmatprep.subr.mxu0 0.0
    %2228 = vmatpush1.msra.mxu0 0.0
    %2229 = vmatprep.subr.mxu0 0.0
    %2230 = vmatpush1.msra.mxu0 0.0
    %2231 = vmatprep.subr.mxu0 0.0
    %2232 = vmatpush1.msra.mxu0 0.0
    %2233 = vmatprep.subr.mxu0 0.0
    %2234 = vmatpush1.msra.mxu0 0.0
    %2235 = vmatprep.subr.mxu0 0.0
    %2236 = vmatpush1.msra.mxu0 0.0
    %2237 = vmatprep.subr.mxu0 0.0
    %2238 = vmatpush1.msra.mxu0 0.0
    %2239 = vmatprep.subr.mxu0 0.0
    %2240 = vmatpush1.msra.mxu0 0.0
    %2241 = vmatprep.subr.mxu0 0.0
    %2242 = vmatpush1.msra.mxu0 0.0
    %2243 = vmatprep.subr.mxu0 0.0
    %2244 = vmatpush1.msra.mxu0 0.0
    %2245 = vmatprep.mubr.f32.mxu0 0.0
    %2246 = vmatmul.mubr.f32.gmra.mrb[0].mxu0 %v2180
    %v2247 = vpop.f32.mrb[0].mxu0
    %v2248 = vadd.f32 %v641, %v2247
    %v2249 = vpop.f32.mrb[0].mxu0
    %2250 = vdwg.mxu0
    %v2251 = vtanh.pop %v2248
    %2252 = vmatprep.subr.mxu0 %v529
    %2253 = vmatpush1.msra.mxu0 %v528
    %2254 = vmatprep.subr.mxu0 %v533
    %2255 = vmatpush1.msra.mxu0 %v532
    %2256 = vmatprep.subr.mxu0 %v537
    %2257 = vmatpush1.msra.mxu0 %v536
    %2258 = vmatprep.subr.mxu0 %v541
    %2259 = vmatpush1.msra.mxu0 %v540
    %2260 = vmatprep.subr.mxu0 %v545
    %2261 = vmatpush1.msra.mxu0 %v544
    %2262 = vmatprep.subr.mxu0 %v549
    %2263 = vmatpush1.msra.mxu0 %v548
    %2264 = vmatprep.subr.mxu0 %v553
    %2265 = vmatpush1.msra.mxu0 %v552
    %2266 = vmatprep.subr.mxu0 %v557
    %2267 = vmatpush1.msra.mxu0 %v556
    %2268 = vmatprep.subr.mxu0 %v561
    %2269 = vmatpush1.msra.mxu0 %v560
    %2270 = vmatprep.subr.mxu0 %v565
    %2271 = vmatpush1.msra.mxu0 %v564
    %2272 = vmatprep.subr.mxu0 %v569
    %2273 = vmatpush1.msra.mxu0 %v568
    %2274 = vmatprep.subr.mxu0 %v573
    %2275 = vmatpush1.msra.mxu0 %v572
    %2276 = vmatprep.subr.mxu0 %v577
    %2277 = vmatpush1.msra.mxu0 %v576
    %2278 = vmatprep.subr.mxu0 %v581
    %2279 = vmatpush1.msra.mxu0 %v580
    %2280 = vmatprep.subr.mxu0 %v585
    %2281 = vmatpush1.msra.mxu0 %v584
    %2282 = vmatprep.subr.mxu0 %v589
    %2283 = vmatpush1.msra.mxu0 %v588
    %2284 = vmatprep.subr.mxu0 0.0
    %2285 = vmatpush1.msra.mxu0 0.0
    %2286 = vmatprep.subr.mxu0 0.0
    %2287 = vmatpush1.msra.mxu0 0.0
    %2288 = vmatprep.subr.mxu0 0.0
    %2289 = vmatpush1.msra.mxu0 0.0
    %2290 = vmatprep.subr.mxu0 0.0
    %2291 = vmatpush1.msra.mxu0 0.0
    %2292 = vmatprep.subr.mxu0 0.0
    %2293 = vmatpush1.msra.mxu0 0.0
    %2294 = vmatprep.subr.mxu0 0.0
    %2295 = vmatpush1.msra.mxu0 0.0
    %2296 = vmatprep.subr.mxu0 0.0
    %2297 = vmatpush1.msra.mxu0 0.0
    %2298 = vmatprep.subr.mxu0 0.0
    %2299 = vmatpush1.msra.mxu0 0.0
    %2300 = vmatprep.subr.mxu0 0.0
    %2301 = vmatpush1.msra.mxu0 0.0
    %2302 = vmatprep.subr.mxu0 0.0
    %2303 = vmatpush1.msra.mxu0 0.0
    %2304 = vmatprep.subr.mxu0 0.0
    %2305 = vmatpush1.msra.mxu0 0.0
    %2306 = vmatprep.subr.mxu0 0.0
    %2307 = vmatpush1.msra.mxu0 0.0
    %2308 = vmatprep.subr.mxu0 0.0
    %2309 = vmatpush1.msra.mxu0 0.0
    %2310 = vmatprep.subr.mxu0 0.0
    %2311 = vmatpush1.msra.mxu0 0.0
    %2312 = vmatprep.subr.mxu0 0.0
    %2313 = vmatpush1.msra.mxu0 0.0
    %2314 = vmatprep.subr.mxu0 0.0
    %2315 = vmatpush1.msra.mxu0 0.0
    %2316 = vmatprep.mubr.f32.mxu0 0.0
    %2317 = vmatmul.mubr.f32.gmra.mrb[0].mxu0 %v2030
    %v2318 = vpop.f32.mrb[0].mxu0
    %v2319 = vadd.f32 0.0, %v2318
    %v2320 = vpop.f32.mrb[0].mxu0
    %v2321 = vadd.f32 0.0, %v2320
    %2322 = vdwg.mxu0
    %2323 = vmatprep.subr.mxu0 %v531
    %2324 = vmatpush1.msra.mxu0 %v530
    %2325 = vmatprep.subr.mxu0 %v535
    %2326 = vmatpush1.msra.mxu0 %v534
    %2327 = vmatprep.subr.mxu0 %v539
    %2328 = vmatpush1.msra.mxu0 %v538
    %2329 = vmatprep.subr.mxu0 %v543
    %2330 = vmatpush1.msra.mxu0 %v542
    %2331 = vmatprep.subr.mxu0 %v547
    %2332 = vmatpush1.msra.mxu0 %v546
    %2333 = vmatprep.subr.mxu0 %v551
    %2334 = vmatpush1.msra.mxu0 %v550
    %2335 = vmatprep.subr.mxu0 %v555
    %2336 = vmatpush1.msra.mxu0 %v554
    %2337 = vmatprep.subr.mxu0 %v559
    %2338 = vmatpush1.msra.mxu0 %v558
    %2339 = vmatprep.subr.mxu0 %v563
    %2340 = vmatpush1.msra.mxu0 %v562
    %2341 = vmatprep.subr.mxu0 %v567
    %2342 = vmatpush1.msra.mxu0 %v566
    %2343 = vmatprep.subr.mxu0 %v571
    %2344 = vmatpush1.msra.mxu0 %v570
    %2345 = vmatprep.subr.mxu0 %v575
    %2346 = vmatpush1.msra.mxu0 %v574
    %2347 = vmatprep.subr.mxu0 %v579
    %2348 = vmatpush1.msra.mxu0 %v578
    %2349 = vmatprep.subr.mxu0 %v583
    %2350 = vmatpush1.msra.mxu0 %v582
    %2351 = vmatprep.subr.mxu0 %v587
    %2352 = vmatpush1.msra.mxu0 %v586
    %2353 = vmatprep.subr.mxu0 %v591
    %2354 = vmatpush1.msra.mxu0 %v590
    %2355 = vmatprep.subr.mxu0 0.0
    %2356 = vmatpush1.msra.mxu0 0.0
    %2357 = vmatprep.subr.mxu0 0.0
    %2358 = vmatpush1.msra.mxu0 0.0
    %2359 = vmatprep.subr.mxu0 0.0
    %2360 = vmatpush1.msra.mxu0 0.0
    %2361 = vmatprep.subr.mxu0 0.0
    %2362 = vmatpush1.msra.mxu0 0.0
    %2363 = vmatprep.subr.mxu0 0.0
    %2364 = vmatpush1.msra.mxu0 0.0
    %2365 = vmatprep.subr.mxu0 0.0
    %2366 = vmatpush1.msra.mxu0 0.0
    %2367 = vmatprep.subr.mxu0 0.0
    %2368 = vmatpush1.msra.mxu0 0.0
    %2369 = vmatprep.subr.mxu0 0.0
    %2370 = vmatpush1.msra.mxu0 0.0
    %2371 = vmatprep.subr.mxu0 0.0
    %2372 = vmatpush1.msra.mxu0 0.0
    %2373 = vmatprep.subr.mxu0 0.0
    %2374 = vmatpush1.msra.mxu0 0.0
    %2375 = vmatprep.subr.mxu0 0.0
    %2376 = vmatpush1.msra.mxu0 0.0
    %2377 = vmatprep.subr.mxu0 0.0
    %2378 = vmatpush1.msra.mxu0 0.0
    %2379 = vmatprep.subr.mxu0 0.0
    %2380 = vmatpush1.msra.mxu0 0.0
    %2381 = vmatprep.subr.mxu0 0.0
    %2382 = vmatpush1.msra.mxu0 0.0
    %2383 = vmatprep.subr.mxu0 0.0
    %2384 = vmatpush1.msra.mxu0 0.0
    %2385 = vmatprep.subr.mxu0 0.0
    %2386 = vmatpush1.msra.mxu0 0.0
    %2387 = vmatprep.mubr.f32.mxu0 0.0
    %2388 = vmatmul.mubr.f32.gmra.mrb[0].mxu0 %v2030
    %v2389 = vpop.f32.mrb[0].mxu0
    %v2390 = vadd.f32 0.0, %v2389
    %v2391 = vpop.f32.mrb[0].mxu0
    %v2392 = vadd.f32 0.0, %v2391
    %2393 = vdwg.mxu0
    %v2398 = vrot.slane %v2319, 4
    %v2399 = vrot.slane %v2321, 4
    %v2400 = vrot.slane %v2390, 4
    %v2401 = vrot.slane %v2392, 4
    %v2406 = vadd.f32 %v360, %v2398
    %v2407 = vadd.f32 %v362, %v2399
    %v2408 = vadd.f32 %v431, %v2400
    %v2409 = vadd.f32 %v433, %v2401
    %v2410 = vxor.u32 %v2406, 2147483648
    %v2411 = vmul.f32 %v2410, 1.442695
    %v2412 = vpow.pop %v2411
    %v2413 = vadd.f32 %v2412, 1.0
    %v2414 = vrcp.pop %v2413
    %v2415 = vmul.f32 1.0, %v2414
    %v2416 = vxor.u32 %v2407, 2147483648
    %v2417 = vmul.f32 %v2416, 1.442695
    %v2418 = vpow.pop %v2417
    %v2419 = vadd.f32 %v2418, 1.0
    %v2420 = vrcp.pop %v2419
    %v2421 = vmul.f32 1.0, %v2420
    %v2422 = vtanh.pop %v2408
    %v2423 = vxor.u32 %v2409, 2147483648
    %v2424 = vmul.f32 %v2423, 1.442695
    %v2425 = vpow.pop %v2424
    %v2426 = vadd.f32 %v2425, 1.0
    %v2427 = vrcp.pop %v2426
    %v2428 = vmul.f32 1.0, %v2427
    %v2430 = vrot.slane %v2026, 7
    %v2432 = vmul.f32 %v2421, %v2430
    %v2433 = vmul.f32 %v2415, %v2422
    %v2434 = vadd.f32 %v2432, %v2433
    %v2435 = vtanh.pop %v2434
    %v2436 = vmul.f32 %v2428, %v2435
    %v2438 = vrot.slane %v2436, 4
    %2440 = vmatprep.subr.mxu0 0.0
    %2441 = vmatpush1.msra.mxu0 %v592
    %2442 = vmatprep.subr.mxu0 0.0
    %2443 = vmatpush1.msra.mxu0 %v593
    %2444 = vmatprep.subr.mxu0 0.0
    %2445 = vmatpush1.msra.mxu0 %v594
    %2446 = vmatprep.subr.mxu0 0.0
    %2447 = vmatpush1.msra.mxu0 %v595
    %2448 = vmatprep.subr.mxu0 0.0
    %2449 = vmatpush1.msra.mxu0 %v596
    %2450 = vmatprep.subr.mxu0 0.0
    %2451 = vmatpush1.msra.mxu0 %v597
    %2452 = vmatprep.subr.mxu0 0.0
    %2453 = vmatpush1.msra.mxu0 %v598
    %2454 = vmatprep.subr.mxu0 0.0
    %2455 = vmatpush1.msra.mxu0 %v599
    %2456 = vmatprep.subr.mxu0 0.0
    %2457 = vmatpush1.msra.mxu0 %v600
    %2458 = vmatprep.subr.mxu0 0.0
    %2459 = vmatpush1.msra.mxu0 %v601
    %2460 = vmatprep.subr.mxu0 0.0
    %2461 = vmatpush1.msra.mxu0 %v602
    %2462 = vmatprep.subr.mxu0 0.0
    %2463 = vmatpush1.msra.mxu0 %v603
    %2464 = vmatprep.subr.mxu0 0.0
    %2465 = vmatpush1.msra.mxu0 %v604
    %2466 = vmatprep.subr.mxu0 0.0
    %2467 = vmatpush1.msra.mxu0 %v605
    %2468 = vmatprep.subr.mxu0 0.0
    %2469 = vmatpush1.msra.mxu0 %v606
    %2470 = vmatprep.subr.mxu0 0.0
    %2471 = vmatpush1.msra.mxu0 %v607
    %2472 = vmatprep.subr.mxu0 0.0
    %2473 = vmatpush1.msra.mxu0 0.0
    %2474 = vmatprep.subr.mxu0 0.0
    %2475 = vmatpush1.msra.mxu0 0.0
    %2476 = vmatprep.subr.mxu0 0.0
    %2477 = vmatpush1.msra.mxu0 0.0
    %2478 = vmatprep.subr.mxu0 0.0
    %2479 = vmatpush1.msra.mxu0 0.0
    %2480 = vmatprep.subr.mxu0 0.0
    %2481 = vmatpush1.msra.mxu0 0.0
    %2482 = vmatprep.subr.mxu0 0.0
    %2483 = vmatpush1.msra.mxu0 0.0
    %2484 = vmatprep.subr.mxu0 0.0
    %2485 = vmatpush1.msra.mxu0 0.0
    %2486 = vmatprep.subr.mxu0 0.0
    %2487 = vmatpush1.msra.mxu0 0.0
    %2488 = vmatprep.subr.mxu0 0.0
    %2489 = vmatpush1.msra.mxu0 0.0
    %2490 = vmatprep.subr.mxu0 0.0
    %2491 = vmatpush1.msra.mxu0 0.0
    %2492 = vmatprep.subr.mxu0 0.0
    %2493 = vmatpush1.msra.mxu0 0.0
    %2494 = vmatprep.subr.mxu0 0.0
    %2495 = vmatpush1.msra.mxu0 0.0
    %2496 = vmatprep.subr.mxu0 0.0
    %2497 = vmatpush1.msra.mxu0 0.0
    %2498 = vmatprep.subr.mxu0 0.0
    %2499 = vmatpush1.msra.mxu0 0.0
    %2500 = vmatprep.subr.mxu0 0.0
    %2501 = vmatpush1.msra.mxu0 0.0
    %2502 = vmatprep.subr.mxu0 0.0
    %2503 = vmatpush1.msra.mxu0 0.0
    %2504 = vmatprep.mubr.f32.mxu0 0.0
    %2505 = vmatmul.mubr.f32.gmra.mrb[0].mxu0 %v2438
    %v2506 = vpop.f32.mrb[0].mxu0
    %v2507 = vadd.f32 0.0, %v2506
    %v2508 = vpop.f32.mrb[0].mxu0
    %2509 = vdwg.mxu0
    %v2511 = vrot.slane %v2507, 4
    %v2513 = vadd.f32 %v525, %v2511
    %v2514 = vmax.f32 %v2513, 0.0
    %v2516 = vrot.slane %v2514, 4
    %2518 = vmatprep.subr.mxu0 0.0
    %2519 = vmatpush1.msra.mxu0 %v608
    %2520 = vmatprep.subr.mxu0 0.0
    %2521 = vmatpush1.msra.mxu0 %v609
    %2522 = vmatprep.subr.mxu0 0.0
    %2523 = vmatpush1.msra.mxu0 %v610
    %2524 = vmatprep.subr.mxu0 0.0
    %2525 = vmatpush1.msra.mxu0 %v611
    %2526 = vmatprep.subr.mxu0 0.0
    %2527 = vmatpush1.msra.mxu0 %v612
    %2528 = vmatprep.subr.mxu0 0.0
    %2529 = vmatpush1.msra.mxu0 %v613
    %2530 = vmatprep.subr.mxu0 0.0
    %2531 = vmatpush1.msra.mxu0 %v614
    %2532 = vmatprep.subr.mxu0 0.0
    %2533 = vmatpush1.msra.mxu0 %v615
    %2534 = vmatprep.subr.mxu0 0.0
    %2535 = vmatpush1.msra.mxu0 %v616
    %2536 = vmatprep.subr.mxu0 0.0
    %2537 = vmatpush1.msra.mxu0 %v617
    %2538 = vmatprep.subr.mxu0 0.0
    %2539 = vmatpush1.msra.mxu0 %v618
    %2540 = vmatprep.subr.mxu0 0.0
    %2541 = vmatpush1.msra.mxu0 %v619
    %2542 = vmatprep.subr.mxu0 0.0
    %2543 = vmatpush1.msra.mxu0 %v620
    %2544 = vmatprep.subr.mxu0 0.0
    %2545 = vmatpush1.msra.mxu0 %v621
    %2546 = vmatprep.subr.mxu0 0.0
    %2547 = vmatpush1.msra.mxu0 %v622
    %2548 = vmatprep.subr.mxu0 0.0
    %2549 = vmatpush1.msra.mxu0 %v623
    %2550 = vmatprep.subr.mxu0 0.0
    %2551 = vmatpush1.msra.mxu0 0.0
    %2552 = vmatprep.subr.mxu0 0.0
    %2553 = vmatpush1.msra.mxu0 0.0
    %2554 = vmatprep.subr.mxu0 0.0
    %2555 = vmatpush1.msra.mxu0 0.0
    %2556 = vmatprep.subr.mxu0 0.0
    %2557 = vmatpush1.msra.mxu0 0.0
    %2558 = vmatprep.subr.mxu0 0.0
    %2559 = vmatpush1.msra.mxu0 0.0
    %2560 = vmatprep.subr.mxu0 0.0
    %2561 = vmatpush1.msra.mxu0 0.0
    %2562 = vmatprep.subr.mxu0 0.0
    %2563 = vmatpush1.msra.mxu0 0.0
    %2564 = vmatprep.subr.mxu0 0.0
    %2565 = vmatpush1.msra.mxu0 0.0
    %2566 = vmatprep.subr.mxu0 0.0
    %2567 = vmatpush1.msra.mxu0 0.0
    %2568 = vmatprep.subr.mxu0 0.0
    %2569 = vmatpush1.msra.mxu0 0.0
    %2570 = vmatprep.subr.mxu0 0.0
    %2571 = vmatpush1.msra.mxu0 0.0
    %2572 = vmatprep.subr.mxu0 0.0
    %2573 = vmatpush1.msra.mxu0 0.0
    %2574 = vmatprep.subr.mxu0 0.0
    %2575 = vmatpush1.msra.mxu0 0.0
    %2576 = vmatprep.subr.mxu0 0.0
    %2577 = vmatpush1.msra.mxu0 0.0
    %2578 = vmatprep.subr.mxu0 0.0
    %2579 = vmatpush1.msra.mxu0 0.0
    %2580 = vmatprep.subr.mxu0 0.0
    %2581 = vmatpush1.msra.mxu0 0.0
    %2582 = vmatprep.mubr.f32.mxu0 0.0
    %2583 = vmatmul.mubr.f32.gmra.mrb[0].mxu0 %v2516
    %v2584 = vpop.f32.mrb[0].mxu0
    %v2585 = vadd.f32 %v624, %v2584
    %v2586 = vpop.f32.mrb[0].mxu0
    %2587 = vdwg.mxu0
    %v2588 = vmax.f32 %v2585, 0.0
    %2589 = vmatprep.subr.mxu0 0.0
    %2590 = vmatpush1.msra.mxu0 %v625
    %2591 = vmatprep.subr.mxu0 0.0
    %2592 = vmatpush1.msra.mxu0 %v626
    %2593 = vmatprep.subr.mxu0 0.0
    %2594 = vmatpush1.msra.mxu0 %v627
    %2595 = vmatprep.subr.mxu0 0.0
    %2596 = vmatpush1.msra.mxu0 %v628
    %2597 = vmatprep.subr.mxu0 0.0
    %2598 = vmatpush1.msra.mxu0 %v629
    %2599 = vmatprep.subr.mxu0 0.0
    %2600 = vmatpush1.msra.mxu0 %v630
    %2601 = vmatprep.subr.mxu0 0.0
    %2602 = vmatpush1.msra.mxu0 %v631
    %2603 = vmatprep.subr.mxu0 0.0
    %2604 = vmatpush1.msra.mxu0 %v632
    %2605 = vmatprep.subr.mxu0 0.0
    %2606 = vmatpush1.msra.mxu0 %v633
    %2607 = vmatprep.subr.mxu0 0.0
    %2608 = vmatpush1.msra.mxu0 %v634
    %2609 = vmatprep.subr.mxu0 0.0
    %2610 = vmatpush1.msra.mxu0 %v635
    %2611 = vmatprep.subr.mxu0 0.0
    %2612 = vmatpush1.msra.mxu0 %v636
    %2613 = vmatprep.subr.mxu0 0.0
    %2614 = vmatpush1.msra.mxu0 %v637
    %2615 = vmatprep.subr.mxu0 0.0
    %2616 = vmatpush1.msra.mxu0 %v638
    %2617 = vmatprep.subr.mxu0 0.0
    %2618 = vmatpush1.msra.mxu0 %v639
    %2619 = vmatprep.subr.mxu0 0.0
    %2620 = vmatpush1.msra.mxu0 %v640
    %2621 = vmatprep.subr.mxu0 0.0
    %2622 = vmatpush1.msra.mxu0 0.0
    %2623 = vmatprep.subr.mxu0 0.0
    %2624 = vmatpush1.msra.mxu0 0.0
    %2625 = vmatprep.subr.mxu0 0.0
    %2626 = vmatpush1.msra.mxu0 0.0
    %2627 = vmatprep.subr.mxu0 0.0
    %2628 = vmatpush1.msra.mxu0 0.0
    %2629 = vmatprep.subr.mxu0 0.0
    %2630 = vmatpush1.msra.mxu0 0.0
    %2631 = vmatprep.subr.mxu0 0.0
    %2632 = vmatpush1.msra.mxu0 0.0
    %2633 = vmatprep.subr.mxu0 0.0
    %2634 = vmatpush1.msra.mxu0 0.0
    %2635 = vmatprep.subr.mxu0 0.0
    %2636 = vmatpush1.msra.mxu0 0.0
    %2637 = vmatprep.subr.mxu0 0.0
    %2638 = vmatpush1.msra.mxu0 0.0
    %2639 = vmatprep.subr.mxu0 0.0
    %2640 = vmatpush1.msra.mxu0 0.0
    %2641 = vmatprep.subr.mxu0 0.0
    %2642 = vmatpush1.msra.mxu0 0.0
    %2643 = vmatprep.subr.mxu0 0.0
    %2644 = vmatpush1.msra.mxu0 0.0
    %2645 = vmatprep.subr.mxu0 0.0
    %2646 = vmatpush1.msra.mxu0 0.0
    %2647 = vmatprep.subr.mxu0 0.0
    %2648 = vmatpush1.msra.mxu0 0.0
    %2649 = vmatprep.subr.mxu0 0.0
    %2650 = vmatpush1.msra.mxu0 0.0
    %2651 = vmatprep.subr.mxu0 0.0
    %2652 = vmatpush1.msra.mxu0 0.0
    %2653 = vmatprep.mubr.f32.mxu0 0.0
    %2654 = vmatmul.mubr.f32.gmra.mrb[0].mxu0 %v2588
    %v2655 = vpop.f32.mrb[0].mxu0
    %v2656 = vadd.f32 %v641, %v2655
    %v2657 = vpop.f32.mrb[0].mxu0
    %2658 = vdwg.mxu0
    %v2659 = vtanh.pop %v2656
    %2660 = vmatprep.subr.mxu0 %v529
    %2661 = vmatpush1.msra.mxu0 %v528
    %2662 = vmatprep.subr.mxu0 %v533
    %2663 = vmatpush1.msra.mxu0 %v532
    %2664 = vmatprep.subr.mxu0 %v537
    %2665 = vmatpush1.msra.mxu0 %v536
    %2666 = vmatprep.subr.mxu0 %v541
    %2667 = vmatpush1.msra.mxu0 %v540
    %2668 = vmatprep.subr.mxu0 %v545
    %2669 = vmatpush1.msra.mxu0 %v544
    %2670 = vmatprep.subr.mxu0 %v549
    %2671 = vmatpush1.msra.mxu0 %v548
    %2672 = vmatprep.subr.mxu0 %v553
    %2673 = vmatpush1.msra.mxu0 %v552
    %2674 = vmatprep.subr.mxu0 %v557
    %2675 = vmatpush1.msra.mxu0 %v556
    %2676 = vmatprep.subr.mxu0 %v561
    %2677 = vmatpush1.msra.mxu0 %v560
    %2678 = vmatprep.subr.mxu0 %v565
    %2679 = vmatpush1.msra.mxu0 %v564
    %2680 = vmatprep.subr.mxu0 %v569
    %2681 = vmatpush1.msra.mxu0 %v568
    %2682 = vmatprep.subr.mxu0 %v573
    %2683 = vmatpush1.msra.mxu0 %v572
    %2684 = vmatprep.subr.mxu0 %v577
    %2685 = vmatpush1.msra.mxu0 %v576
    %2686 = vmatprep.subr.mxu0 %v581
    %2687 = vmatpush1.msra.mxu0 %v580
    %2688 = vmatprep.subr.mxu0 %v585
    %2689 = vmatpush1.msra.mxu0 %v584
    %2690 = vmatprep.subr.mxu0 %v589
    %2691 = vmatpush1.msra.mxu0 %v588
    %2692 = vmatprep.subr.mxu0 0.0
    %2693 = vmatpush1.msra.mxu0 0.0
    %2694 = vmatprep.subr.mxu0 0.0
    %2695 = vmatpush1.msra.mxu0 0.0
    %2696 = vmatprep.subr.mxu0 0.0
    %2697 = vmatpush1.msra.mxu0 0.0
    %2698 = vmatprep.subr.mxu0 0.0
    %2699 = vmatpush1.msra.mxu0 0.0
    %2700 = vmatprep.subr.mxu0 0.0
    %2701 = vmatpush1.msra.mxu0 0.0
    %2702 = vmatprep.subr.mxu0 0.0
    %2703 = vmatpush1.msra.mxu0 0.0
    %2704 = vmatprep.subr.mxu0 0.0
    %2705 = vmatpush1.msra.mxu0 0.0
    %2706 = vmatprep.subr.mxu0 0.0
    %2707 = vmatpush1.msra.mxu0 0.0
    %2708 = vmatprep.subr.mxu0 0.0
    %2709 = vmatpush1.msra.mxu0 0.0
    %2710 = vmatprep.subr.mxu0 0.0
    %2711 = vmatpush1.msra.mxu0 0.0
    %2712 = vmatprep.subr.mxu0 0.0
    %2713 = vmatpush1.msra.mxu0 0.0
    %2714 = vmatprep.subr.mxu0 0.0
    %2715 = vmatpush1.msra.mxu0 0.0
    %2716 = vmatprep.subr.mxu0 0.0
    %2717 = vmatpush1.msra.mxu0 0.0
    %2718 = vmatprep.subr.mxu0 0.0
    %2719 = vmatpush1.msra.mxu0 0.0
    %2720 = vmatprep.subr.mxu0 0.0
    %2721 = vmatpush1.msra.mxu0 0.0
    %2722 = vmatprep.subr.mxu0 0.0
    %2723 = vmatpush1.msra.mxu0 0.0
    %2724 = vmatprep.mubr.f32.mxu0 0.0
    %2725 = vmatmul.mubr.f32.gmra.mrb[0].mxu0 %v2438
    %v2726 = vpop.f32.mrb[0].mxu0
    %v2727 = vadd.f32 0.0, %v2726
    %v2728 = vpop.f32.mrb[0].mxu0
    %v2729 = vadd.f32 0.0, %v2728
    %2730 = vdwg.mxu0
    %2731 = vmatprep.subr.mxu0 %v531
    %2732 = vmatpush1.msra.mxu0 %v530
    %2733 = vmatprep.subr.mxu0 %v535
    %2734 = vmatpush1.msra.mxu0 %v534
    %2735 = vmatprep.subr.mxu0 %v539
    %2736 = vmatpush1.msra.mxu0 %v538
    %2737 = vmatprep.subr.mxu0 %v543
    %2738 = vmatpush1.msra.mxu0 %v542
    %2739 = vmatprep.subr.mxu0 %v547
    %2740 = vmatpush1.msra.mxu0 %v546
    %2741 = vmatprep.subr.mxu0 %v551
    %2742 = vmatpush1.msra.mxu0 %v550
    %2743 = vmatprep.subr.mxu0 %v555
    %2744 = vmatpush1.msra.mxu0 %v554
    %2745 = vmatprep.subr.mxu0 %v559
    %2746 = vmatpush1.msra.mxu0 %v558
    %2747 = vmatprep.subr.mxu0 %v563
    %2748 = vmatpush1.msra.mxu0 %v562
    %2749 = vmatprep.subr.mxu0 %v567
    %2750 = vmatpush1.msra.mxu0 %v566
    %2751 = vmatprep.subr.mxu0 %v571
    %2752 = vmatpush1.msra.mxu0 %v570
    %2753 = vmatprep.subr.mxu0 %v575
    %2754 = vmatpush1.msra.mxu0 %v574
    %2755 = vmatprep.subr.mxu0 %v579
    %2756 = vmatpush1.msra.mxu0 %v578
    %2757 = vmatprep.subr.mxu0 %v583
    %2758 = vmatpush1.msra.mxu0 %v582
    %2759 = vmatprep.subr.mxu0 %v587
    %2760 = vmatpush1.msra.mxu0 %v586
    %2761 = vmatprep.subr.mxu0 %v591
    %2762 = vmatpush1.msra.mxu0 %v590
    %2763 = vmatprep.subr.mxu0 0.0
    %2764 = vmatpush1.msra.mxu0 0.0
    %2765 = vmatprep.subr.mxu0 0.0
    %2766 = vmatpush1.msra.mxu0 0.0
    %2767 = vmatprep.subr.mxu0 0.0
    %2768 = vmatpush1.msra.mxu0 0.0
    %2769 = vmatprep.subr.mxu0 0.0
    %2770 = vmatpush1.msra.mxu0 0.0
    %2771 = vmatprep.subr.mxu0 0.0
    %2772 = vmatpush1.msra.mxu0 0.0
    %2773 = vmatprep.subr.mxu0 0.0
    %2774 = vmatpush1.msra.mxu0 0.0
    %2775 = vmatprep.subr.mxu0 0.0
    %2776 = vmatpush1.msra.mxu0 0.0
    %2777 = vmatprep.subr.mxu0 0.0
    %2778 = vmatpush1.msra.mxu0 0.0
    %2779 = vmatprep.subr.mxu0 0.0
    %2780 = vmatpush1.msra.mxu0 0.0
    %2781 = vmatprep.subr.mxu0 0.0
    %2782 = vmatpush1.msra.mxu0 0.0
    %2783 = vmatprep.subr.mxu0 0.0
    %2784 = vmatpush1.msra.mxu0 0.0
    %2785 = vmatprep.subr.mxu0 0.0
    %2786 = vmatpush1.msra.mxu0 0.0
    %2787 = vmatprep.subr.mxu0 0.0
    %2788 = vmatpush1.msra.mxu0 0.0
    %2789 = vmatprep.subr.mxu0 0.0
    %2790 = vmatpush1.msra.mxu0 0.0
    %2791 = vmatprep.subr.mxu0 0.0
    %2792 = vmatpush1.msra.mxu0 0.0
    %2793 = vmatprep.subr.mxu0 0.0
    %2794 = vmatpush1.msra.mxu0 0.0
    %2795 = vmatprep.mubr.f32.mxu0 0.0
    %2796 = vmatmul.mubr.f32.gmra.mrb[0].mxu0 %v2438
    %v2797 = vpop.f32.mrb[0].mxu0
    %v2798 = vadd.f32 0.0, %v2797
    %v2799 = vpop.f32.mrb[0].mxu0
    %v2800 = vadd.f32 0.0, %v2799
    %2801 = vdwg.mxu0
    %v2806 = vrot.slane %v2727, 3
    %v2807 = vrot.slane %v2729, 3
    %v2808 = vrot.slane %v2798, 3
    %v2809 = vrot.slane %v2800, 3
    %v2814 = vadd.f32 %v360, %v2806
    %v2815 = vadd.f32 %v362, %v2807
    %v2816 = vadd.f32 %v431, %v2808
    %v2817 = vadd.f32 %v433, %v2809
    %v2818 = vxor.u32 %v2814, 2147483648
    %v2819 = vmul.f32 %v2818, 1.442695
    %v2820 = vpow.pop %v2819
    %v2821 = vadd.f32 %v2820, 1.0
    %v2822 = vrcp.pop %v2821
    %v2823 = vmul.f32 1.0, %v2822
    %v2824 = vxor.u32 %v2815, 2147483648
    %v2825 = vmul.f32 %v2824, 1.442695
    %v2826 = vpow.pop %v2825
    %v2827 = vadd.f32 %v2826, 1.0
    %v2828 = vrcp.pop %v2827
    %v2829 = vmul.f32 1.0, %v2828
    %v2830 = vtanh.pop %v2816
    %v2831 = vxor.u32 %v2817, 2147483648
    %v2832 = vmul.f32 %v2831, 1.442695
    %v2833 = vpow.pop %v2832
    %v2834 = vadd.f32 %v2833, 1.0
    %v2835 = vrcp.pop %v2834
    %v2836 = vmul.f32 1.0, %v2835
    %v2838 = vrot.slane %v2434, 7
    %v2840 = vmul.f32 %v2829, %v2838
    %v2841 = vmul.f32 %v2823, %v2830
    %v2842 = vadd.f32 %v2840, %v2841
    %v2843 = vtanh.pop %v2842
    %v2844 = vmul.f32 %v2836, %v2843
    %v2846 = vrot.slane %v2844, 5
    %2848 = vmatprep.subr.mxu0 0.0
    %2849 = vmatpush1.msra.mxu0 %v592
    %2850 = vmatprep.subr.mxu0 0.0
    %2851 = vmatpush1.msra.mxu0 %v593
    %2852 = vmatprep.subr.mxu0 0.0
    %2853 = vmatpush1.msra.mxu0 %v594
    %2854 = vmatprep.subr.mxu0 0.0
    %2855 = vmatpush1.msra.mxu0 %v595
    %2856 = vmatprep.subr.mxu0 0.0
    %2857 = vmatpush1.msra.mxu0 %v596
    %2858 = vmatprep.subr.mxu0 0.0
    %2859 = vmatpush1.msra.mxu0 %v597
    %2860 = vmatprep.subr.mxu0 0.0
    %2861 = vmatpush1.msra.mxu0 %v598
    %2862 = vmatprep.subr.mxu0 0.0
    %2863 = vmatpush1.msra.mxu0 %v599
    %2864 = vmatprep.subr.mxu0 0.0
    %2865 = vmatpush1.msra.mxu0 %v600
    %2866 = vmatprep.subr.mxu0 0.0
    %2867 = vmatpush1.msra.mxu0 %v601
    %2868 = vmatprep.subr.mxu0 0.0
    %2869 = vmatpush1.msra.mxu0 %v602
    %2870 = vmatprep.subr.mxu0 0.0
    %2871 = vmatpush1.msra.mxu0 %v603
    %2872 = vmatprep.subr.mxu0 0.0
    %2873 = vmatpush1.msra.mxu0 %v604
    %2874 = vmatprep.subr.mxu0 0.0
    %2875 = vmatpush1.msra.mxu0 %v605
    %2876 = vmatprep.subr.mxu0 0.0
    %2877 = vmatpush1.msra.mxu0 %v606
    %2878 = vmatprep.subr.mxu0 0.0
    %2879 = vmatpush1.msra.mxu0 %v607
    %2880 = vmatprep.subr.mxu0 0.0
    %2881 = vmatpush1.msra.mxu0 0.0
    %2882 = vmatprep.subr.mxu0 0.0
    %2883 = vmatpush1.msra.mxu0 0.0
    %2884 = vmatprep.subr.mxu0 0.0
    %2885 = vmatpush1.msra.mxu0 0.0
    %2886 = vmatprep.subr.mxu0 0.0
    %2887 = vmatpush1.msra.mxu0 0.0
    %2888 = vmatprep.subr.mxu0 0.0
    %2889 = vmatpush1.msra.mxu0 0.0
    %2890 = vmatprep.subr.mxu0 0.0
    %2891 = vmatpush1.msra.mxu0 0.0
    %2892 = vmatprep.subr.mxu0 0.0
    %2893 = vmatpush1.msra.mxu0 0.0
    %2894 = vmatprep.subr.mxu0 0.0
    %2895 = vmatpush1.msra.mxu0 0.0
    %2896 = vmatprep.subr.mxu0 0.0
    %2897 = vmatpush1.msra.mxu0 0.0
    %2898 = vmatprep.subr.mxu0 0.0
    %2899 = vmatpush1.msra.mxu0 0.0
    %2900 = vmatprep.subr.mxu0 0.0
    %2901 = vmatpush1.msra.mxu0 0.0
    %2902 = vmatprep.subr.mxu0 0.0
    %2903 = vmatpush1.msra.mxu0 0.0
    %2904 = vmatprep.subr.mxu0 0.0
    %2905 = vmatpush1.msra.mxu0 0.0
    %2906 = vmatprep.subr.mxu0 0.0
    %2907 = vmatpush1.msra.mxu0 0.0
    %2908 = vmatprep.subr.mxu0 0.0
    %2909 = vmatpush1.msra.mxu0 0.0
    %2910 = vmatprep.subr.mxu0 0.0
    %2911 = vmatpush1.msra.mxu0 0.0
    %2912 = vmatprep.mubr.f32.mxu0 0.0
    %2913 = vmatmul.mubr.f32.gmra.mrb[0].mxu0 %v2846
    %v2914 = vpop.f32.mrb[0].mxu0
    %v2915 = vadd.f32 0.0, %v2914
    %v2916 = vpop.f32.mrb[0].mxu0
    %2917 = vdwg.mxu0
    %v2919 = vrot.slane %v2915, 3
    %v2921 = vadd.f32 %v525, %v2919
    %v2922 = vmax.f32 %v2921, 0.0
    %v2924 = vrot.slane %v2922, 5
    %2926 = vmatprep.subr.mxu0 0.0
    %2927 = vmatpush1.msra.mxu0 %v608
    %2928 = vmatprep.subr.mxu0 0.0
    %2929 = vmatpush1.msra.mxu0 %v609
    %2930 = vmatprep.subr.mxu0 0.0
    %2931 = vmatpush1.msra.mxu0 %v610
    %2932 = vmatprep.subr.mxu0 0.0
    %2933 = vmatpush1.msra.mxu0 %v611
    %2934 = vmatprep.subr.mxu0 0.0
    %2935 = vmatpush1.msra.mxu0 %v612
    %2936 = vmatprep.subr.mxu0 0.0
    %2937 = vmatpush1.msra.mxu0 %v613
    %2938 = vmatprep.subr.mxu0 0.0
    %2939 = vmatpush1.msra.mxu0 %v614
    %2940 = vmatprep.subr.mxu0 0.0
    %2941 = vmatpush1.msra.mxu0 %v615
    %2942 = vmatprep.subr.mxu0 0.0
    %2943 = vmatpush1.msra.mxu0 %v616
    %2944 = vmatprep.subr.mxu0 0.0
    %2945 = vmatpush1.msra.mxu0 %v617
    %2946 = vmatprep.subr.mxu0 0.0
    %2947 = vmatpush1.msra.mxu0 %v618
    %2948 = vmatprep.subr.mxu0 0.0
    %2949 = vmatpush1.msra.mxu0 %v619
    %2950 = vmatprep.subr.mxu0 0.0
    %2951 = vmatpush1.msra.mxu0 %v620
    %2952 = vmatprep.subr.mxu0 0.0
    %2953 = vmatpush1.msra.mxu0 %v621
    %2954 = vmatprep.subr.mxu0 0.0
    %2955 = vmatpush1.msra.mxu0 %v622
    %2956 = vmatprep.subr.mxu0 0.0
    %2957 = vmatpush1.msra.mxu0 %v623
    %2958 = vmatprep.subr.mxu0 0.0
    %2959 = vmatpush1.msra.mxu0 0.0
    %2960 = vmatprep.subr.mxu0 0.0
    %2961 = vmatpush1.msra.mxu0 0.0
    %2962 = vmatprep.subr.mxu0 0.0
    %2963 = vmatpush1.msra.mxu0 0.0
    %2964 = vmatprep.subr.mxu0 0.0
    %2965 = vmatpush1.msra.mxu0 0.0
    %2966 = vmatprep.subr.mxu0 0.0
    %2967 = vmatpush1.msra.mxu0 0.0
    %2968 = vmatprep.subr.mxu0 0.0
    %2969 = vmatpush1.msra.mxu0 0.0
    %2970 = vmatprep.subr.mxu0 0.0
    %2971 = vmatpush1.msra.mxu0 0.0
    %2972 = vmatprep.subr.mxu0 0.0
    %2973 = vmatpush1.msra.mxu0 0.0
    %2974 = vmatprep.subr.mxu0 0.0
    %2975 = vmatpush1.msra.mxu0 0.0
    %2976 = vmatprep.subr.mxu0 0.0
    %2977 = vmatpush1.msra.mxu0 0.0
    %2978 = vmatprep.subr.mxu0 0.0
    %2979 = vmatpush1.msra.mxu0 0.0
    %2980 = vmatprep.subr.mxu0 0.0
    %2981 = vmatpush1.msra.mxu0 0.0
    %2982 = vmatprep.subr.mxu0 0.0
    %2983 = vmatpush1.msra.mxu0 0.0
    %2984 = vmatprep.subr.mxu0 0.0
    %2985 = vmatpush1.msra.mxu0 0.0
    %2986 = vmatprep.subr.mxu0 0.0
    %2987 = vmatpush1.msra.mxu0 0.0
    %2988 = vmatprep.subr.mxu0 0.0
    %2989 = vmatpush1.msra.mxu0 0.0
    %2990 = vmatprep.mubr.f32.mxu0 0.0
    %2991 = vmatmul.mubr.f32.gmra.mrb[0].mxu0 %v2924
    %v2992 = vpop.f32.mrb[0].mxu0
    %v2993 = vadd.f32 %v624, %v2992
    %v2994 = vpop.f32.mrb[0].mxu0
    %2995 = vdwg.mxu0
    %v2996 = vmax.f32 %v2993, 0.0
    %2997 = vmatprep.subr.mxu0 0.0
    %2998 = vmatpush1.msra.mxu0 %v625
    %2999 = vmatprep.subr.mxu0 0.0
    %3000 = vmatpush1.msra.mxu0 %v626
    %3001 = vmatprep.subr.mxu0 0.0
    %3002 = vmatpush1.msra.mxu0 %v627
    %3003 = vmatprep.subr.mxu0 0.0
    %3004 = vmatpush1.msra.mxu0 %v628
    %3005 = vmatprep.subr.mxu0 0.0
    %3006 = vmatpush1.msra.mxu0 %v629
    %3007 = vmatprep.subr.mxu0 0.0
    %3008 = vmatpush1.msra.mxu0 %v630
    %3009 = vmatprep.subr.mxu0 0.0
    %3010 = vmatpush1.msra.mxu0 %v631
    %3011 = vmatprep.subr.mxu0 0.0
    %3012 = vmatpush1.msra.mxu0 %v632
    %3013 = vmatprep.subr.mxu0 0.0
    %3014 = vmatpush1.msra.mxu0 %v633
    %3015 = vmatprep.subr.mxu0 0.0
    %3016 = vmatpush1.msra.mxu0 %v634
    %3017 = vmatprep.subr.mxu0 0.0
    %3018 = vmatpush1.msra.mxu0 %v635
    %3019 = vmatprep.subr.mxu0 0.0
    %3020 = vmatpush1.msra.mxu0 %v636
    %3021 = vmatprep.subr.mxu0 0.0
    %3022 = vmatpush1.msra.mxu0 %v637
    %3023 = vmatprep.subr.mxu0 0.0
    %3024 = vmatpush1.msra.mxu0 %v638
    %3025 = vmatprep.subr.mxu0 0.0
    %3026 = vmatpush1.msra.mxu0 %v639
    %3027 = vmatprep.subr.mxu0 0.0
    %3028 = vmatpush1.msra.mxu0 %v640
    %3029 = vmatprep.subr.mxu0 0.0
    %3030 = vmatpush1.msra.mxu0 0.0
    %3031 = vmatprep.subr.mxu0 0.0
    %3032 = vmatpush1.msra.mxu0 0.0
    %3033 = vmatprep.subr.mxu0 0.0
    %3034 = vmatpush1.msra.mxu0 0.0
    %3035 = vmatprep.subr.mxu0 0.0
    %3036 = vmatpush1.msra.mxu0 0.0
    %3037 = vmatprep.subr.mxu0 0.0
    %3038 = vmatpush1.msra.mxu0 0.0
    %3039 = vmatprep.subr.mxu0 0.0
    %3040 = vmatpush1.msra.mxu0 0.0
    %3041 = vmatprep.subr.mxu0 0.0
    %3042 = vmatpush1.msra.mxu0 0.0
    %3043 = vmatprep.subr.mxu0 0.0
    %3044 = vmatpush1.msra.mxu0 0.0
    %3045 = vmatprep.subr.mxu0 0.0
    %3046 = vmatpush1.msra.mxu0 0.0
    %3047 = vmatprep.subr.mxu0 0.0
    %3048 = vmatpush1.msra.mxu0 0.0
    %3049 = vmatprep.subr.mxu0 0.0
    %3050 = vmatpush1.msra.mxu0 0.0
    %3051 = vmatprep.subr.mxu0 0.0
    %3052 = vmatpush1.msra.mxu0 0.0
    %3053 = vmatprep.subr.mxu0 0.0
    %3054 = vmatpush1.msra.mxu0 0.0
    %3055 = vmatprep.subr.mxu0 0.0
    %3056 = vmatpush1.msra.mxu0 0.0
    %3057 = vmatprep.subr.mxu0 0.0
    %3058 = vmatpush1.msra.mxu0 0.0
    %3059 = vmatprep.subr.mxu0 0.0
    %3060 = vmatpush1.msra.mxu0 0.0
    %3061 = vmatprep.mubr.f32.mxu0 0.0
    %3062 = vmatmul.mubr.f32.gmra.mrb[0].mxu0 %v2996
    %v3063 = vpop.f32.mrb[0].mxu0
    %v3064 = vadd.f32 %v641, %v3063
    %v3065 = vpop.f32.mrb[0].mxu0
    %3066 = vdwg.mxu0
    %v3067 = vtanh.pop %v3064
    %3068 = vmatprep.subr.mxu0 %v529
    %3069 = vmatpush1.msra.mxu0 %v528
    %3070 = vmatprep.subr.mxu0 %v533
    %3071 = vmatpush1.msra.mxu0 %v532
    %3072 = vmatprep.subr.mxu0 %v537
    %3073 = vmatpush1.msra.mxu0 %v536
    %3074 = vmatprep.subr.mxu0 %v541
    %3075 = vmatpush1.msra.mxu0 %v540
    %3076 = vmatprep.subr.mxu0 %v545
    %3077 = vmatpush1.msra.mxu0 %v544
    %3078 = vmatprep.subr.mxu0 %v549
    %3079 = vmatpush1.msra.mxu0 %v548
    %3080 = vmatprep.subr.mxu0 %v553
    %3081 = vmatpush1.msra.mxu0 %v552
    %3082 = vmatprep.subr.mxu0 %v557
    %3083 = vmatpush1.msra.mxu0 %v556
    %3084 = vmatprep.subr.mxu0 %v561
    %3085 = vmatpush1.msra.mxu0 %v560
    %3086 = vmatprep.subr.mxu0 %v565
    %3087 = vmatpush1.msra.mxu0 %v564
    %3088 = vmatprep.subr.mxu0 %v569
    %3089 = vmatpush1.msra.mxu0 %v568
    %3090 = vmatprep.subr.mxu0 %v573
    %3091 = vmatpush1.msra.mxu0 %v572
    %3092 = vmatprep.subr.mxu0 %v577
    %3093 = vmatpush1.msra.mxu0 %v576
    %3094 = vmatprep.subr.mxu0 %v581
    %3095 = vmatpush1.msra.mxu0 %v580
    %3096 = vmatprep.subr.mxu0 %v585
    %3097 = vmatpush1.msra.mxu0 %v584
    %3098 = vmatprep.subr.mxu0 %v589
    %3099 = vmatpush1.msra.mxu0 %v588
    %3100 = vmatprep.subr.mxu0 0.0
    %3101 = vmatpush1.msra.mxu0 0.0
    %3102 = vmatprep.subr.mxu0 0.0
    %3103 = vmatpush1.msra.mxu0 0.0
    %3104 = vmatprep.subr.mxu0 0.0
    %3105 = vmatpush1.msra.mxu0 0.0
    %3106 = vmatprep.subr.mxu0 0.0
    %3107 = vmatpush1.msra.mxu0 0.0
    %3108 = vmatprep.subr.mxu0 0.0
    %3109 = vmatpush1.msra.mxu0 0.0
    %3110 = vmatprep.subr.mxu0 0.0
    %3111 = vmatpush1.msra.mxu0 0.0
    %3112 = vmatprep.subr.mxu0 0.0
    %3113 = vmatpush1.msra.mxu0 0.0
    %3114 = vmatprep.subr.mxu0 0.0
    %3115 = vmatpush1.msra.mxu0 0.0
    %3116 = vmatprep.subr.mxu0 0.0
    %3117 = vmatpush1.msra.mxu0 0.0
    %3118 = vmatprep.subr.mxu0 0.0
    %3119 = vmatpush1.msra.mxu0 0.0
    %3120 = vmatprep.subr.mxu0 0.0
    %3121 = vmatpush1.msra.mxu0 0.0
    %3122 = vmatprep.subr.mxu0 0.0
    %3123 = vmatpush1.msra.mxu0 0.0
    %3124 = vmatprep.subr.mxu0 0.0
    %3125 = vmatpush1.msra.mxu0 0.0
    %3126 = vmatprep.subr.mxu0 0.0
    %3127 = vmatpush1.msra.mxu0 0.0
    %3128 = vmatprep.subr.mxu0 0.0
    %3129 = vmatpush1.msra.mxu0 0.0
    %3130 = vmatprep.subr.mxu0 0.0
    %3131 = vmatpush1.msra.mxu0 0.0
    %3132 = vmatprep.mubr.f32.mxu0 0.0
    %3133 = vmatmul.mubr.f32.gmra.mrb[0].mxu0 %v2846
    %v3134 = vpop.f32.mrb[0].mxu0
    %v3135 = vadd.f32 0.0, %v3134
    %v3136 = vpop.f32.mrb[0].mxu0
    %v3137 = vadd.f32 0.0, %v3136
    %3138 = vdwg.mxu0
    %3139 = vmatprep.subr.mxu0 %v531
    %3140 = vmatpush1.msra.mxu0 %v530
    %3141 = vmatprep.subr.mxu0 %v535
    %3142 = vmatpush1.msra.mxu0 %v534
    %3143 = vmatprep.subr.mxu0 %v539
    %3144 = vmatpush1.msra.mxu0 %v538
    %3145 = vmatprep.subr.mxu0 %v543
    %3146 = vmatpush1.msra.mxu0 %v542
    %3147 = vmatprep.subr.mxu0 %v547
    %3148 = vmatpush1.msra.mxu0 %v546
    %3149 = vmatprep.subr.mxu0 %v551
    %3150 = vmatpush1.msra.mxu0 %v550
    %3151 = vmatprep.subr.mxu0 %v555
    %3152 = vmatpush1.msra.mxu0 %v554
    %3153 = vmatprep.subr.mxu0 %v559
    %3154 = vmatpush1.msra.mxu0 %v558
    %3155 = vmatprep.subr.mxu0 %v563
    %3156 = vmatpush1.msra.mxu0 %v562
    %3157 = vmatprep.subr.mxu0 %v567
    %3158 = vmatpush1.msra.mxu0 %v566
    %3159 = vmatprep.subr.mxu0 %v571
    %3160 = vmatpush1.msra.mxu0 %v570
    %3161 = vmatprep.subr.mxu0 %v575
    %3162 = vmatpush1.msra.mxu0 %v574
    %3163 = vmatprep.subr.mxu0 %v579
    %3164 = vmatpush1.msra.mxu0 %v578
    %3165 = vmatprep.subr.mxu0 %v583
    %3166 = vmatpush1.msra.mxu0 %v582
    %3167 = vmatprep.subr.mxu0 %v587
    %3168 = vmatpush1.msra.mxu0 %v586
    %3169 = vmatprep.subr.mxu0 %v591
    %3170 = vmatpush1.msra.mxu0 %v590
    %3171 = vmatprep.subr.mxu0 0.0
    %3172 = vmatpush1.msra.mxu0 0.0
    %3173 = vmatprep.subr.mxu0 0.0
    %3174 = vmatpush1.msra.mxu0 0.0
    %3175 = vmatprep.subr.mxu0 0.0
    %3176 = vmatpush1.msra.mxu0 0.0
    %3177 = vmatprep.subr.mxu0 0.0
    %3178 = vmatpush1.msra.mxu0 0.0
    %3179 = vmatprep.subr.mxu0 0.0
    %3180 = vmatpush1.msra.mxu0 0.0
    %3181 = vmatprep.subr.mxu0 0.0
    %3182 = vmatpush1.msra.mxu0 0.0
    %3183 = vmatprep.subr.mxu0 0.0
    %3184 = vmatpush1.msra.mxu0 0.0
    %3185 = vmatprep.subr.mxu0 0.0
    %3186 = vmatpush1.msra.mxu0 0.0
    %3187 = vmatprep.subr.mxu0 0.0
    %3188 = vmatpush1.msra.mxu0 0.0
    %3189 = vmatprep.subr.mxu0 0.0
    %3190 = vmatpush1.msra.mxu0 0.0
    %3191 = vmatprep.subr.mxu0 0.0
    %3192 = vmatpush1.msra.mxu0 0.0
    %3193 = vmatprep.subr.mxu0 0.0
    %3194 = vmatpush1.msra.mxu0 0.0
    %3195 = vmatprep.subr.mxu0 0.0
    %3196 = vmatpush1.msra.mxu0 0.0
    %3197 = vmatprep.subr.mxu0 0.0
    %3198 = vmatpush1.msra.mxu0 0.0
    %3199 = vmatprep.subr.mxu0 0.0
    %3200 = vmatpush1.msra.mxu0 0.0
    %3201 = vmatprep.subr.mxu0 0.0
    %3202 = vmatpush1.msra.mxu0 0.0
    %3203 = vmatprep.mubr.f32.mxu0 0.0
    %3204 = vmatmul.mubr.f32.gmra.mrb[0].mxu0 %v2846
    %v3205 = vpop.f32.mrb[0].mxu0
    %v3206 = vadd.f32 0.0, %v3205
    %v3207 = vpop.f32.mrb[0].mxu0
    %v3208 = vadd.f32 0.0, %v3207
    %3209 = vdwg.mxu0
    %v3214 = vrot.slane %v3135, 2
    %v3215 = vrot.slane %v3137, 2
    %v3216 = vrot.slane %v3206, 2
    %v3217 = vrot.slane %v3208, 2
    %v3222 = vadd.f32 %v360, %v3214
    %v3223 = vadd.f32 %v362, %v3215
    %v3224 = vadd.f32 %v431, %v3216
    %v3225 = vadd.f32 %v433, %v3217
    %v3226 = vxor.u32 %v3222, 2147483648
    %v3227 = vmul.f32 %v3226, 1.442695
    %v3228 = vpow.pop %v3227
    %v3229 = vadd.f32 %v3228, 1.0
    %v3230 = vrcp.pop %v3229
    %v3231 = vmul.f32 1.0, %v3230
    %v3232 = vxor.u32 %v3223, 2147483648
    %v3233 = vmul.f32 %v3232, 1.442695
    %v3234 = vpow.pop %v3233
    %v3235 = vadd.f32 %v3234, 1.0
    %v3236 = vrcp.pop %v3235
    %v3237 = vmul.f32 1.0, %v3236
    %v3238 = vtanh.pop %v3224
    %v3239 = vxor.u32 %v3225, 2147483648
    %v3240 = vmul.f32 %v3239, 1.442695
    %v3241 = vpow.pop %v3240
    %v3242 = vadd.f32 %v3241, 1.0
    %v3243 = vrcp.pop %v3242
    %v3244 = vmul.f32 1.0, %v3243
    %v3246 = vrot.slane %v2842, 7
    %v3248 = vmul.f32 %v3237, %v3246
    %v3249 = vmul.f32 %v3231, %v3238
    %v3250 = vadd.f32 %v3248, %v3249
    %v3251 = vtanh.pop %v3250
    %v3252 = vmul.f32 %v3244, %v3251
    %v3254 = vrot.slane %v3252, 6
    %3256 = vmatprep.subr.mxu0 0.0
    %3257 = vmatpush1.msra.mxu0 %v592
    %3258 = vmatprep.subr.mxu0 0.0
    %3259 = vmatpush1.msra.mxu0 %v593
    %3260 = vmatprep.subr.mxu0 0.0
    %3261 = vmatpush1.msra.mxu0 %v594
    %3262 = vmatprep.subr.mxu0 0.0
    %3263 = vmatpush1.msra.mxu0 %v595
    %3264 = vmatprep.subr.mxu0 0.0
    %3265 = vmatpush1.msra.mxu0 %v596
    %3266 = vmatprep.subr.mxu0 0.0
    %3267 = vmatpush1.msra.mxu0 %v597
    %3268 = vmatprep.subr.mxu0 0.0
    %3269 = vmatpush1.msra.mxu0 %v598
    %3270 = vmatprep.subr.mxu0 0.0
    %3271 = vmatpush1.msra.mxu0 %v599
    %3272 = vmatprep.subr.mxu0 0.0
    %3273 = vmatpush1.msra.mxu0 %v600
    %3274 = vmatprep.subr.mxu0 0.0
    %3275 = vmatpush1.msra.mxu0 %v601
    %3276 = vmatprep.subr.mxu0 0.0
    %3277 = vmatpush1.msra.mxu0 %v602
    %3278 = vmatprep.subr.mxu0 0.0
    %3279 = vmatpush1.msra.mxu0 %v603
    %3280 = vmatprep.subr.mxu0 0.0
    %3281 = vmatpush1.msra.mxu0 %v604
    %3282 = vmatprep.subr.mxu0 0.0
    %3283 = vmatpush1.msra.mxu0 %v605
    %3284 = vmatprep.subr.mxu0 0.0
    %3285 = vmatpush1.msra.mxu0 %v606
    %3286 = vmatprep.subr.mxu0 0.0
    %3287 = vmatpush1.msra.mxu0 %v607
    %3288 = vmatprep.subr.mxu0 0.0
    %3289 = vmatpush1.msra.mxu0 0.0
    %3290 = vmatprep.subr.mxu0 0.0
    %3291 = vmatpush1.msra.mxu0 0.0
    %3292 = vmatprep.subr.mxu0 0.0
    %3293 = vmatpush1.msra.mxu0 0.0
    %3294 = vmatprep.subr.mxu0 0.0
    %3295 = vmatpush1.msra.mxu0 0.0
    %3296 = vmatprep.subr.mxu0 0.0
    %3297 = vmatpush1.msra.mxu0 0.0
    %3298 = vmatprep.subr.mxu0 0.0
    %3299 = vmatpush1.msra.mxu0 0.0
    %3300 = vmatprep.subr.mxu0 0.0
    %3301 = vmatpush1.msra.mxu0 0.0
    %3302 = vmatprep.subr.mxu0 0.0
    %3303 = vmatpush1.msra.mxu0 0.0
    %3304 = vmatprep.subr.mxu0 0.0
    %3305 = vmatpush1.msra.mxu0 0.0
    %3306 = vmatprep.subr.mxu0 0.0
    %3307 = vmatpush1.msra.mxu0 0.0
    %3308 = vmatprep.subr.mxu0 0.0
    %3309 = vmatpush1.msra.mxu0 0.0
    %3310 = vmatprep.subr.mxu0 0.0
    %3311 = vmatpush1.msra.mxu0 0.0
    %3312 = vmatprep.subr.mxu0 0.0
    %3313 = vmatpush1.msra.mxu0 0.0
    %3314 = vmatprep.subr.mxu0 0.0
    %3315 = vmatpush1.msra.mxu0 0.0
    %3316 = vmatprep.subr.mxu0 0.0
    %3317 = vmatpush1.msra.mxu0 0.0
    %3318 = vmatprep.subr.mxu0 0.0
    %3319 = vmatpush1.msra.mxu0 0.0
    %3320 = vmatprep.mubr.f32.mxu0 0.0
    %3321 = vmatmul.mubr.f32.gmra.mrb[0].mxu0 %v3254
    %v3322 = vpop.f32.mrb[0].mxu0
    %v3323 = vadd.f32 0.0, %v3322
    %v3324 = vpop.f32.mrb[0].mxu0
    %3325 = vdwg.mxu0
    %v3327 = vrot.slane %v3323, 2
    %v3329 = vadd.f32 %v525, %v3327
    %v3330 = vmax.f32 %v3329, 0.0
    %v3332 = vrot.slane %v3330, 6
    %3334 = vmatprep.subr.mxu0 0.0
    %3335 = vmatpush1.msra.mxu0 %v608
    %3336 = vmatprep.subr.mxu0 0.0
    %3337 = vmatpush1.msra.mxu0 %v609
    %3338 = vmatprep.subr.mxu0 0.0
    %3339 = vmatpush1.msra.mxu0 %v610
    %3340 = vmatprep.subr.mxu0 0.0
    %3341 = vmatpush1.msra.mxu0 %v611
    %3342 = vmatprep.subr.mxu0 0.0
    %3343 = vmatpush1.msra.mxu0 %v612
    %3344 = vmatprep.subr.mxu0 0.0
    %3345 = vmatpush1.msra.mxu0 %v613
    %3346 = vmatprep.subr.mxu0 0.0
    %3347 = vmatpush1.msra.mxu0 %v614
    %3348 = vmatprep.subr.mxu0 0.0
    %3349 = vmatpush1.msra.mxu0 %v615
    %3350 = vmatprep.subr.mxu0 0.0
    %3351 = vmatpush1.msra.mxu0 %v616
    %3352 = vmatprep.subr.mxu0 0.0
    %3353 = vmatpush1.msra.mxu0 %v617
    %3354 = vmatprep.subr.mxu0 0.0
    %3355 = vmatpush1.msra.mxu0 %v618
    %3356 = vmatprep.subr.mxu0 0.0
    %3357 = vmatpush1.msra.mxu0 %v619
    %3358 = vmatprep.subr.mxu0 0.0
    %3359 = vmatpush1.msra.mxu0 %v620
    %3360 = vmatprep.subr.mxu0 0.0
    %3361 = vmatpush1.msra.mxu0 %v621
    %3362 = vmatprep.subr.mxu0 0.0
    %3363 = vmatpush1.msra.mxu0 %v622
    %3364 = vmatprep.subr.mxu0 0.0
    %3365 = vmatpush1.msra.mxu0 %v623
    %3366 = vmatprep.subr.mxu0 0.0
    %3367 = vmatpush1.msra.mxu0 0.0
    %3368 = vmatprep.subr.mxu0 0.0
    %3369 = vmatpush1.msra.mxu0 0.0
    %3370 = vmatprep.subr.mxu0 0.0
    %3371 = vmatpush1.msra.mxu0 0.0
    %3372 = vmatprep.subr.mxu0 0.0
    %3373 = vmatpush1.msra.mxu0 0.0
    %3374 = vmatprep.subr.mxu0 0.0
    %3375 = vmatpush1.msra.mxu0 0.0
    %3376 = vmatprep.subr.mxu0 0.0
    %3377 = vmatpush1.msra.mxu0 0.0
    %3378 = vmatprep.subr.mxu0 0.0
    %3379 = vmatpush1.msra.mxu0 0.0
    %3380 = vmatprep.subr.mxu0 0.0
    %3381 = vmatpush1.msra.mxu0 0.0
    %3382 = vmatprep.subr.mxu0 0.0
    %3383 = vmatpush1.msra.mxu0 0.0
    %3384 = vmatprep.subr.mxu0 0.0
    %3385 = vmatpush1.msra.mxu0 0.0
    %3386 = vmatprep.subr.mxu0 0.0
    %3387 = vmatpush1.msra.mxu0 0.0
    %3388 = vmatprep.subr.mxu0 0.0
    %3389 = vmatpush1.msra.mxu0 0.0
    %3390 = vmatprep.subr.mxu0 0.0
    %3391 = vmatpush1.msra.mxu0 0.0
    %3392 = vmatprep.subr.mxu0 0.0
    %3393 = vmatpush1.msra.mxu0 0.0
    %3394 = vmatprep.subr.mxu0 0.0
    %3395 = vmatpush1.msra.mxu0 0.0
    %3396 = vmatprep.subr.mxu0 0.0
    %3397 = vmatpush1.msra.mxu0 0.0
    %3398 = vmatprep.mubr.f32.mxu0 0.0
    %3399 = vmatmul.mubr.f32.gmra.mrb[0].mxu0 %v3332
    %v3400 = vpop.f32.mrb[0].mxu0
    %v3401 = vadd.f32 %v624, %v3400
    %v3402 = vpop.f32.mrb[0].mxu0
    %3403 = vdwg.mxu0
    %v3404 = vmax.f32 %v3401, 0.0
    %3405 = vmatprep.subr.mxu0 0.0
    %3406 = vmatpush1.msra.mxu0 %v625
    %3407 = vmatprep.subr.mxu0 0.0
    %3408 = vmatpush1.msra.mxu0 %v626
    %3409 = vmatprep.subr.mxu0 0.0
    %3410 = vmatpush1.msra.mxu0 %v627
    %3411 = vmatprep.subr.mxu0 0.0
    %3412 = vmatpush1.msra.mxu0 %v628
    %3413 = vmatprep.subr.mxu0 0.0
    %3414 = vmatpush1.msra.mxu0 %v629
    %3415 = vmatprep.subr.mxu0 0.0
    %3416 = vmatpush1.msra.mxu0 %v630
    %3417 = vmatprep.subr.mxu0 0.0
    %3418 = vmatpush1.msra.mxu0 %v631
    %3419 = vmatprep.subr.mxu0 0.0
    %3420 = vmatpush1.msra.mxu0 %v632
    %3421 = vmatprep.subr.mxu0 0.0
    %3422 = vmatpush1.msra.mxu0 %v633
    %3423 = vmatprep.subr.mxu0 0.0
    %3424 = vmatpush1.msra.mxu0 %v634
    %3425 = vmatprep.subr.mxu0 0.0
    %3426 = vmatpush1.msra.mxu0 %v635
    %3427 = vmatprep.subr.mxu0 0.0
    %3428 = vmatpush1.msra.mxu0 %v636
    %3429 = vmatprep.subr.mxu0 0.0
    %3430 = vmatpush1.msra.mxu0 %v637
    %3431 = vmatprep.subr.mxu0 0.0
    %3432 = vmatpush1.msra.mxu0 %v638
    %3433 = vmatprep.subr.mxu0 0.0
    %3434 = vmatpush1.msra.mxu0 %v639
    %3435 = vmatprep.subr.mxu0 0.0
    %3436 = vmatpush1.msra.mxu0 %v640
    %3437 = vmatprep.subr.mxu0 0.0
    %3438 = vmatpush1.msra.mxu0 0.0
    %3439 = vmatprep.subr.mxu0 0.0
    %3440 = vmatpush1.msra.mxu0 0.0
    %3441 = vmatprep.subr.mxu0 0.0
    %3442 = vmatpush1.msra.mxu0 0.0
    %3443 = vmatprep.subr.mxu0 0.0
    %3444 = vmatpush1.msra.mxu0 0.0
    %3445 = vmatprep.subr.mxu0 0.0
    %3446 = vmatpush1.msra.mxu0 0.0
    %3447 = vmatprep.subr.mxu0 0.0
    %3448 = vmatpush1.msra.mxu0 0.0
    %3449 = vmatprep.subr.mxu0 0.0
    %3450 = vmatpush1.msra.mxu0 0.0
    %3451 = vmatprep.subr.mxu0 0.0
    %3452 = vmatpush1.msra.mxu0 0.0
    %3453 = vmatprep.subr.mxu0 0.0
    %3454 = vmatpush1.msra.mxu0 0.0
    %3455 = vmatprep.subr.mxu0 0.0
    %3456 = vmatpush1.msra.mxu0 0.0
    %3457 = vmatprep.subr.mxu0 0.0
    %3458 = vmatpush1.msra.mxu0 0.0
    %3459 = vmatprep.subr.mxu0 0.0
    %3460 = vmatpush1.msra.mxu0 0.0
    %3461 = vmatprep.subr.mxu0 0.0
    %3462 = vmatpush1.msra.mxu0 0.0
    %3463 = vmatprep.subr.mxu0 0.0
    %3464 = vmatpush1.msra.mxu0 0.0
    %3465 = vmatprep.subr.mxu0 0.0
    %3466 = vmatpush1.msra.mxu0 0.0
    %3467 = vmatprep.subr.mxu0 0.0
    %3468 = vmatpush1.msra.mxu0 0.0
    %3469 = vmatprep.mubr.f32.mxu0 0.0
    %3470 = vmatmul.mubr.f32.gmra.mrb[0].mxu0 %v3404
    %v3471 = vpop.f32.mrb[0].mxu0
    %v3472 = vadd.f32 %v641, %v3471
    %v3473 = vpop.f32.mrb[0].mxu0
    %3474 = vdwg.mxu0
    %v3475 = vtanh.pop %v3472
    %3476 = vmatprep.subr.mxu0 %v529
    %3477 = vmatpush1.msra.mxu0 %v528
    %3478 = vmatprep.subr.mxu0 %v533
    %3479 = vmatpush1.msra.mxu0 %v532
    %3480 = vmatprep.subr.mxu0 %v537
    %3481 = vmatpush1.msra.mxu0 %v536
    %3482 = vmatprep.subr.mxu0 %v541
    %3483 = vmatpush1.msra.mxu0 %v540
    %3484 = vmatprep.subr.mxu0 %v545
    %3485 = vmatpush1.msra.mxu0 %v544
    %3486 = vmatprep.subr.mxu0 %v549
    %3487 = vmatpush1.msra.mxu0 %v548
    %3488 = vmatprep.subr.mxu0 %v553
    %3489 = vmatpush1.msra.mxu0 %v552
    %3490 = vmatprep.subr.mxu0 %v557
    %3491 = vmatpush1.msra.mxu0 %v556
    %3492 = vmatprep.subr.mxu0 %v561
    %3493 = vmatpush1.msra.mxu0 %v560
    %3494 = vmatprep.subr.mxu0 %v565
    %3495 = vmatpush1.msra.mxu0 %v564
    %3496 = vmatprep.subr.mxu0 %v569
    %3497 = vmatpush1.msra.mxu0 %v568
    %3498 = vmatprep.subr.mxu0 %v573
    %3499 = vmatpush1.msra.mxu0 %v572
    %3500 = vmatprep.subr.mxu0 %v577
    %3501 = vmatpush1.msra.mxu0 %v576
    %3502 = vmatprep.subr.mxu0 %v581
    %3503 = vmatpush1.msra.mxu0 %v580
    %3504 = vmatprep.subr.mxu0 %v585
    %3505 = vmatpush1.msra.mxu0 %v584
    %3506 = vmatprep.subr.mxu0 %v589
    %3507 = vmatpush1.msra.mxu0 %v588
    %3508 = vmatprep.subr.mxu0 0.0
    %3509 = vmatpush1.msra.mxu0 0.0
    %3510 = vmatprep.subr.mxu0 0.0
    %3511 = vmatpush1.msra.mxu0 0.0
    %3512 = vmatprep.subr.mxu0 0.0
    %3513 = vmatpush1.msra.mxu0 0.0
    %3514 = vmatprep.subr.mxu0 0.0
    %3515 = vmatpush1.msra.mxu0 0.0
    %3516 = vmatprep.subr.mxu0 0.0
    %3517 = vmatpush1.msra.mxu0 0.0
    %3518 = vmatprep.subr.mxu0 0.0
    %3519 = vmatpush1.msra.mxu0 0.0
    %3520 = vmatprep.subr.mxu0 0.0
    %3521 = vmatpush1.msra.mxu0 0.0
    %3522 = vmatprep.subr.mxu0 0.0
    %3523 = vmatpush1.msra.mxu0 0.0
    %3524 = vmatprep.subr.mxu0 0.0
    %3525 = vmatpush1.msra.mxu0 0.0
    %3526 = vmatprep.subr.mxu0 0.0
    %3527 = vmatpush1.msra.mxu0 0.0
    %3528 = vmatprep.subr.mxu0 0.0
    %3529 = vmatpush1.msra.mxu0 0.0
    %3530 = vmatprep.subr.mxu0 0.0
    %3531 = vmatpush1.msra.mxu0 0.0
    %3532 = vmatprep.subr.mxu0 0.0
    %3533 = vmatpush1.msra.mxu0 0.0
    %3534 = vmatprep.subr.mxu0 0.0
    %3535 = vmatpush1.msra.mxu0 0.0
    %3536 = vmatprep.subr.mxu0 0.0
    %3537 = vmatpush1.msra.mxu0 0.0
    %3538 = vmatprep.subr.mxu0 0.0
    %3539 = vmatpush1.msra.mxu0 0.0
    %3540 = vmatprep.mubr.f32.mxu0 0.0
    %3541 = vmatmul.mubr.f32.gmra.mrb[0].mxu0 %v3254
    %v3542 = vpop.f32.mrb[0].mxu0
    %v3543 = vadd.f32 0.0, %v3542
    %v3544 = vpop.f32.mrb[0].mxu0
    %v3545 = vadd.f32 0.0, %v3544
    %3546 = vdwg.mxu0
    %3547 = vmatprep.subr.mxu0 %v531
    %3548 = vmatpush1.msra.mxu0 %v530
    %3549 = vmatprep.subr.mxu0 %v535
    %3550 = vmatpush1.msra.mxu0 %v534
    %3551 = vmatprep.subr.mxu0 %v539
    %3552 = vmatpush1.msra.mxu0 %v538
    %3553 = vmatprep.subr.mxu0 %v543
    %3554 = vmatpush1.msra.mxu0 %v542
    %3555 = vmatprep.subr.mxu0 %v547
    %3556 = vmatpush1.msra.mxu0 %v546
    %3557 = vmatprep.subr.mxu0 %v551
    %3558 = vmatpush1.msra.mxu0 %v550
    %3559 = vmatprep.subr.mxu0 %v555
    %3560 = vmatpush1.msra.mxu0 %v554
    %3561 = vmatprep.subr.mxu0 %v559
    %3562 = vmatpush1.msra.mxu0 %v558
    %3563 = vmatprep.subr.mxu0 %v563
    %3564 = vmatpush1.msra.mxu0 %v562
    %3565 = vmatprep.subr.mxu0 %v567
    %3566 = vmatpush1.msra.mxu0 %v566
    %3567 = vmatprep.subr.mxu0 %v571
    %3568 = vmatpush1.msra.mxu0 %v570
    %3569 = vmatprep.subr.mxu0 %v575
    %3570 = vmatpush1.msra.mxu0 %v574
    %3571 = vmatprep.subr.mxu0 %v579
    %3572 = vmatpush1.msra.mxu0 %v578
    %3573 = vmatprep.subr.mxu0 %v583
    %3574 = vmatpush1.msra.mxu0 %v582
    %3575 = vmatprep.subr.mxu0 %v587
    %3576 = vmatpush1.msra.mxu0 %v586
    %3577 = vmatprep.subr.mxu0 %v591
    %3578 = vmatpush1.msra.mxu0 %v590
    %3579 = vmatprep.subr.mxu0 0.0
    %3580 = vmatpush1.msra.mxu0 0.0
    %3581 = vmatprep.subr.mxu0 0.0
    %3582 = vmatpush1.msra.mxu0 0.0
    %3583 = vmatprep.subr.mxu0 0.0
    %3584 = vmatpush1.msra.mxu0 0.0
    %3585 = vmatprep.subr.mxu0 0.0
    %3586 = vmatpush1.msra.mxu0 0.0
    %3587 = vmatprep.subr.mxu0 0.0
    %3588 = vmatpush1.msra.mxu0 0.0
    %3589 = vmatprep.subr.mxu0 0.0
    %3590 = vmatpush1.msra.mxu0 0.0
    %3591 = vmatprep.subr.mxu0 0.0
    %3592 = vmatpush1.msra.mxu0 0.0
    %3593 = vmatprep.subr.mxu0 0.0
    %3594 = vmatpush1.msra.mxu0 0.0
    %3595 = vmatprep.subr.mxu0 0.0
    %3596 = vmatpush1.msra.mxu0 0.0
    %3597 = vmatprep.subr.mxu0 0.0
    %3598 = vmatpush1.msra.mxu0 0.0
    %3599 = vmatprep.subr.mxu0 0.0
    %3600 = vmatpush1.msra.mxu0 0.0
    %3601 = vmatprep.subr.mxu0 0.0
    %3602 = vmatpush1.msra.mxu0 0.0
    %3603 = vmatprep.subr.mxu0 0.0
    %3604 = vmatpush1.msra.mxu0 0.0
    %3605 = vmatprep.subr.mxu0 0.0
    %3606 = vmatpush1.msra.mxu0 0.0
    %3607 = vmatprep.subr.mxu0 0.0
    %3608 = vmatpush1.msra.mxu0 0.0
    %3609 = vmatprep.subr.mxu0 0.0
    %3610 = vmatpush1.msra.mxu0 0.0
    %3611 = vmatprep.mubr.f32.mxu0 0.0
    %3612 = vmatmul.mubr.f32.gmra.mrb[0].mxu0 %v3254
    %v3613 = vpop.f32.mrb[0].mxu0
    %v3614 = vadd.f32 0.0, %v3613
    %v3615 = vpop.f32.mrb[0].mxu0
    %v3616 = vadd.f32 0.0, %v3615
    %3617 = vdwg.mxu0
    %v3622 = vrot.slane %v3543, 1
    %v3623 = vrot.slane %v3545, 1
    %v3624 = vrot.slane %v3614, 1
    %v3625 = vrot.slane %v3616, 1
    %v3630 = vadd.f32 %v360, %v3622
    %v3631 = vadd.f32 %v362, %v3623
    %v3632 = vadd.f32 %v431, %v3624
    %v3633 = vadd.f32 %v433, %v3625
    %v3634 = vxor.u32 %v3630, 2147483648
    %v3635 = vmul.f32 %v3634, 1.442695
    %v3636 = vpow.pop %v3635
    %v3637 = vadd.f32 %v3636, 1.0
    %v3638 = vrcp.pop %v3637
    %v3639 = vmul.f32 1.0, %v3638
    %v3640 = vxor.u32 %v3631, 2147483648
    %v3641 = vmul.f32 %v3640, 1.442695
    %v3642 = vpow.pop %v3641
    %v3643 = vadd.f32 %v3642, 1.0
    %v3644 = vrcp.pop %v3643
    %v3645 = vmul.f32 1.0, %v3644
    %v3646 = vtanh.pop %v3632
    %v3647 = vxor.u32 %v3633, 2147483648
    %v3648 = vmul.f32 %v3647, 1.442695
    %v3649 = vpow.pop %v3648
    %v3650 = vadd.f32 %v3649, 1.0
    %v3651 = vrcp.pop %v3650
    %v3652 = vmul.f32 1.0, %v3651
    %v3654 = vrot.slane %v3250, 7
    %v3656 = vmul.f32 %v3645, %v3654
    %v3657 = vmul.f32 %v3639, %v3646
    %v3658 = vadd.f32 %v3656, %v3657
    %v3659 = vtanh.pop %v3658
    %v3660 = vmul.f32 %v3652, %v3659
    %v3662 = vrot.slane %v3660, 7
    %3664 = vmatprep.subr.mxu0 0.0
    %3665 = vmatpush1.msra.mxu0 %v592
    %3666 = vmatprep.subr.mxu0 0.0
    %3667 = vmatpush1.msra.mxu0 %v593
    %3668 = vmatprep.subr.mxu0 0.0
    %3669 = vmatpush1.msra.mxu0 %v594
    %3670 = vmatprep.subr.mxu0 0.0
    %3671 = vmatpush1.msra.mxu0 %v595
    %3672 = vmatprep.subr.mxu0 0.0
    %3673 = vmatpush1.msra.mxu0 %v596
    %3674 = vmatprep.subr.mxu0 0.0
    %3675 = vmatpush1.msra.mxu0 %v597
    %3676 = vmatprep.subr.mxu0 0.0
    %3677 = vmatpush1.msra.mxu0 %v598
    %3678 = vmatprep.subr.mxu0 0.0
    %3679 = vmatpush1.msra.mxu0 %v599
    %3680 = vmatprep.subr.mxu0 0.0
    %3681 = vmatpush1.msra.mxu0 %v600
    %3682 = vmatprep.subr.mxu0 0.0
    %3683 = vmatpush1.msra.mxu0 %v601
    %3684 = vmatprep.subr.mxu0 0.0
    %3685 = vmatpush1.msra.mxu0 %v602
    %3686 = vmatprep.subr.mxu0 0.0
    %3687 = vmatpush1.msra.mxu0 %v603
    %3688 = vmatprep.subr.mxu0 0.0
    %3689 = vmatpush1.msra.mxu0 %v604
    %3690 = vmatprep.subr.mxu0 0.0
    %3691 = vmatpush1.msra.mxu0 %v605
    %3692 = vmatprep.subr.mxu0 0.0
    %3693 = vmatpush1.msra.mxu0 %v606
    %3694 = vmatprep.subr.mxu0 0.0
    %3695 = vmatpush1.msra.mxu0 %v607
    %3696 = vmatprep.subr.mxu0 0.0
    %3697 = vmatpush1.msra.mxu0 0.0
    %3698 = vmatprep.subr.mxu0 0.0
    %3699 = vmatpush1.msra.mxu0 0.0
    %3700 = vmatprep.subr.mxu0 0.0
    %3701 = vmatpush1.msra.mxu0 0.0
    %3702 = vmatprep.subr.mxu0 0.0
    %3703 = vmatpush1.msra.mxu0 0.0
    %3704 = vmatprep.subr.mxu0 0.0
    %3705 = vmatpush1.msra.mxu0 0.0
    %3706 = vmatprep.subr.mxu0 0.0
    %3707 = vmatpush1.msra.mxu0 0.0
    %3708 = vmatprep.subr.mxu0 0.0
    %3709 = vmatpush1.msra.mxu0 0.0
    %3710 = vmatprep.subr.mxu0 0.0
    %3711 = vmatpush1.msra.mxu0 0.0
    %3712 = vmatprep.subr.mxu0 0.0
    %3713 = vmatpush1.msra.mxu0 0.0
    %3714 = vmatprep.subr.mxu0 0.0
    %3715 = vmatpush1.msra.mxu0 0.0
    %3716 = vmatprep.subr.mxu0 0.0
    %3717 = vmatpush1.msra.mxu0 0.0
    %3718 = vmatprep.subr.mxu0 0.0
    %3719 = vmatpush1.msra.mxu0 0.0
    %3720 = vmatprep.subr.mxu0 0.0
    %3721 = vmatpush1.msra.mxu0 0.0
    %3722 = vmatprep.subr.mxu0 0.0
    %3723 = vmatpush1.msra.mxu0 0.0
    %3724 = vmatprep.subr.mxu0 0.0
    %3725 = vmatpush1.msra.mxu0 0.0
    %3726 = vmatprep.subr.mxu0 0.0
    %3727 = vmatpush1.msra.mxu0 0.0
    %3728 = vmatprep.mubr.f32.mxu0 0.0
    %3729 = vmatmul.mubr.f32.gmra.mrb[0].mxu0 %v3662
    %v3730 = vpop.f32.mrb[0].mxu0
    %v3731 = vadd.f32 0.0, %v3730
    %v3732 = vpop.f32.mrb[0].mxu0
    %3733 = vdwg.mxu0
    %v3735 = vrot.slane %v3731, 1
    %v3737 = vadd.f32 %v525, %v3735
    %v3738 = vmax.f32 %v3737, 0.0
    %v3740 = vrot.slane %v3738, 7
    %3742 = vmatprep.subr.mxu0 0.0
    %3743 = vmatpush1.msra.mxu0 %v608
    %3744 = vmatprep.subr.mxu0 0.0
    %3745 = vmatpush1.msra.mxu0 %v609
    %3746 = vmatprep.subr.mxu0 0.0
    %3747 = vmatpush1.msra.mxu0 %v610
    %3748 = vmatprep.subr.mxu0 0.0
    %3749 = vmatpush1.msra.mxu0 %v611
    %3750 = vmatprep.subr.mxu0 0.0
    %3751 = vmatpush1.msra.mxu0 %v612
    %3752 = vmatprep.subr.mxu0 0.0
    %3753 = vmatpush1.msra.mxu0 %v613
    %3754 = vmatprep.subr.mxu0 0.0
    %3755 = vmatpush1.msra.mxu0 %v614
    %3756 = vmatprep.subr.mxu0 0.0
    %3757 = vmatpush1.msra.mxu0 %v615
    %3758 = vmatprep.subr.mxu0 0.0
    %3759 = vmatpush1.msra.mxu0 %v616
    %3760 = vmatprep.subr.mxu0 0.0
    %3761 = vmatpush1.msra.mxu0 %v617
    %3762 = vmatprep.subr.mxu0 0.0
    %3763 = vmatpush1.msra.mxu0 %v618
    %3764 = vmatprep.subr.mxu0 0.0
    %3765 = vmatpush1.msra.mxu0 %v619
    %3766 = vmatprep.subr.mxu0 0.0
    %3767 = vmatpush1.msra.mxu0 %v620
    %3768 = vmatprep.subr.mxu0 0.0
    %3769 = vmatpush1.msra.mxu0 %v621
    %3770 = vmatprep.subr.mxu0 0.0
    %3771 = vmatpush1.msra.mxu0 %v622
    %3772 = vmatprep.subr.mxu0 0.0
    %3773 = vmatpush1.msra.mxu0 %v623
    %3774 = vmatprep.subr.mxu0 0.0
    %3775 = vmatpush1.msra.mxu0 0.0
    %3776 = vmatprep.subr.mxu0 0.0
    %3777 = vmatpush1.msra.mxu0 0.0
    %3778 = vmatprep.subr.mxu0 0.0
    %3779 = vmatpush1.msra.mxu0 0.0
    %3780 = vmatprep.subr.mxu0 0.0
    %3781 = vmatpush1.msra.mxu0 0.0
    %3782 = vmatprep.subr.mxu0 0.0
    %3783 = vmatpush1.msra.mxu0 0.0
    %3784 = vmatprep.subr.mxu0 0.0
    %3785 = vmatpush1.msra.mxu0 0.0
    %3786 = vmatprep.subr.mxu0 0.0
    %3787 = vmatpush1.msra.mxu0 0.0
    %3788 = vmatprep.subr.mxu0 0.0
    %3789 = vmatpush1.msra.mxu0 0.0
    %3790 = vmatprep.subr.mxu0 0.0
    %3791 = vmatpush1.msra.mxu0 0.0
    %3792 = vmatprep.subr.mxu0 0.0
    %3793 = vmatpush1.msra.mxu0 0.0
    %3794 = vmatprep.subr.mxu0 0.0
    %3795 = vmatpush1.msra.mxu0 0.0
    %3796 = vmatprep.subr.mxu0 0.0
    %3797 = vmatpush1.msra.mxu0 0.0
    %3798 = vmatprep.subr.mxu0 0.0
    %3799 = vmatpush1.msra.mxu0 0.0
    %3800 = vmatprep.subr.mxu0 0.0
    %3801 = vmatpush1.msra.mxu0 0.0
    %3802 = vmatprep.subr.mxu0 0.0
    %3803 = vmatpush1.msra.mxu0 0.0
    %3804 = vmatprep.subr.mxu0 0.0
    %3805 = vmatpush1.msra.mxu0 0.0
    %3806 = vmatprep.mubr.f32.mxu0 0.0
    %3807 = vmatmul.mubr.f32.gmra.mrb[0].mxu0 %v3740
    %v3808 = vpop.f32.mrb[0].mxu0
    %v3809 = vadd.f32 %v624, %v3808
    %v3810 = vpop.f32.mrb[0].mxu0
    %3811 = vdwg.mxu0
    %v3812 = vmax.f32 %v3809, 0.0
    %3813 = vmatprep.subr.mxu0 0.0
    %3814 = vmatpush1.msra.mxu0 %v625
    %3815 = vmatprep.subr.mxu0 0.0
    %3816 = vmatpush1.msra.mxu0 %v626
    %3817 = vmatprep.subr.mxu0 0.0
    %3818 = vmatpush1.msra.mxu0 %v627
    %3819 = vmatprep.subr.mxu0 0.0
    %3820 = vmatpush1.msra.mxu0 %v628
    %3821 = vmatprep.subr.mxu0 0.0
    %3822 = vmatpush1.msra.mxu0 %v629
    %3823 = vmatprep.subr.mxu0 0.0
    %3824 = vmatpush1.msra.mxu0 %v630
    %3825 = vmatprep.subr.mxu0 0.0
    %3826 = vmatpush1.msra.mxu0 %v631
    %3827 = vmatprep.subr.mxu0 0.0
    %3828 = vmatpush1.msra.mxu0 %v632
    %3829 = vmatprep.subr.mxu0 0.0
    %3830 = vmatpush1.msra.mxu0 %v633
    %3831 = vmatprep.subr.mxu0 0.0
    %3832 = vmatpush1.msra.mxu0 %v634
    %3833 = vmatprep.subr.mxu0 0.0
    %3834 = vmatpush1.msra.mxu0 %v635
    %3835 = vmatprep.subr.mxu0 0.0
    %3836 = vmatpush1.msra.mxu0 %v636
    %3837 = vmatprep.subr.mxu0 0.0
    %3838 = vmatpush1.msra.mxu0 %v637
    %3839 = vmatprep.subr.mxu0 0.0
    %3840 = vmatpush1.msra.mxu0 %v638
    %3841 = vmatprep.subr.mxu0 0.0
    %3842 = vmatpush1.msra.mxu0 %v639
    %3843 = vmatprep.subr.mxu0 0.0
    %3844 = vmatpush1.msra.mxu0 %v640
    %3845 = vmatprep.subr.mxu0 0.0
    %3846 = vmatpush1.msra.mxu0 0.0
    %3847 = vmatprep.subr.mxu0 0.0
    %3848 = vmatpush1.msra.mxu0 0.0
    %3849 = vmatprep.subr.mxu0 0.0
    %3850 = vmatpush1.msra.mxu0 0.0
    %3851 = vmatprep.subr.mxu0 0.0
    %3852 = vmatpush1.msra.mxu0 0.0
    %3853 = vmatprep.subr.mxu0 0.0
    %3854 = vmatpush1.msra.mxu0 0.0
    %3855 = vmatprep.subr.mxu0 0.0
    %3856 = vmatpush1.msra.mxu0 0.0
    %3857 = vmatprep.subr.mxu0 0.0
    %3858 = vmatpush1.msra.mxu0 0.0
    %3859 = vmatprep.subr.mxu0 0.0
    %3860 = vmatpush1.msra.mxu0 0.0
    %3861 = vmatprep.subr.mxu0 0.0
    %3862 = vmatpush1.msra.mxu0 0.0
    %3863 = vmatprep.subr.mxu0 0.0
    %3864 = vmatpush1.msra.mxu0 0.0
    %3865 = vmatprep.subr.mxu0 0.0
    %3866 = vmatpush1.msra.mxu0 0.0
    %3867 = vmatprep.subr.mxu0 0.0
    %3868 = vmatpush1.msra.mxu0 0.0
    %3869 = vmatprep.subr.mxu0 0.0
    %3870 = vmatpush1.msra.mxu0 0.0
    %3871 = vmatprep.subr.mxu0 0.0
    %3872 = vmatpush1.msra.mxu0 0.0
    %3873 = vmatprep.subr.mxu0 0.0
    %3874 = vmatpush1.msra.mxu0 0.0
    %3875 = vmatprep.subr.mxu0 0.0
    %3876 = vmatpush1.msra.mxu0 0.0
    %3877 = vmatprep.mubr.f32.mxu0 0.0
    %3878 = vmatmul.mubr.f32.gmra.mrb[0].mxu0 %v3812
    %v3879 = vpop.f32.mrb[0].mxu0
    %v3880 = vadd.f32 %v641, %v3879
    %v3881 = vpop.f32.mrb[0].mxu0
    %3882 = vdwg.mxu0
    %v3883 = vtanh.pop %v3880
    %v3885 = vrot.slane %v1435, 7
    %v3888 = vrot.slane %v1843, 6
    %v3891 = vrot.slane %v2251, 5
    %v3894 = vrot.slane %v2659, 4
    %v3897 = vrot.slane %v3067, 3
    %v3900 = vrot.slane %v3475, 2
    %v3903 = vrot.slane %v3883, 1
    %vm3905 = vcmask 1040384
    %v3906 = vsel %vm3905, %v1027, %v3885
    %vm3907 = vcmask 1041408
    %v3908 = vsel %vm3907, %v3906, %v3888
    %vm3909 = vcmask 1042432
    %v3910 = vsel %vm3909, %v3908, %v3891
    %v3911 = vsel %vm127, %v3910, %v3894
    %vm3912 = vcmask 1044480
    %v3913 = vsel %vm3912, %v3911, %v3897
    %vm3914 = vcmask 1045504
    %v3915 = vsel %vm3914, %v3913, %v3900
    %vm3916 = vcmask 1046528
    %v3917 = vsel %vm3916, %v3915, %v3903
    %3918 = vst [vmem:[%s15] sm:$0xff] %v3917
    %v3919 = vsel %vm3905, %v813, %v1212
    %v3920 = vsel %vm3907, %v3919, %v1620
    %v3921 = vsel %vm3909, %v3920, %v2028
    %v3922 = vsel %vm127, %v3921, %v2436
    %v3923 = vsel %vm3912, %v3922, %v2844
    %v3924 = vsel %vm3914, %v3923, %v3252
    %v3925 = vsel %vm3916, %v3924, %v3660
    %3926 = vst [vmem:[#allocation10] sm:$0xff] %v3925
    %v3927 = vsel %vm3905, %v811, %v1210
    %v3928 = vsel %vm3907, %v3927, %v1618
    %v3929 = vsel %vm3909, %v3928, %v2026
    %v3930 = vsel %vm127, %v3929, %v2434
    %v3931 = vsel %vm3912, %v3930, %v2842
    %v3932 = vsel %vm3914, %v3931, %v3250
    %v3933 = vsel %vm3916, %v3932, %v3658
    %3934 = vst [vmem:[#allocation11] sm:$0xff] %v3933
    // Predicated region
    $region78: #{actor_rollout.1} parent=1 // pred_check
      _
    $region79: #{actor_rollout.1} parent=1 // pred_check_branch
      %3936 = sbr.rel (0) target = $region81
    $region80: #{actor_rollout.1} parent=1 // pred_region
      _
    $region81: #{actor_rollout.1} parent=1 // pred_fallthru
      _
    // Predicated region
    $region82: #{actor_rollout.1} parent=1 // pred_check
      _
    $region83: #{actor_rollout.1} parent=1 // pred_check_branch
      %3938 = sbr.rel (0) target = $region85
    $region84: #{actor_rollout.1} parent=1 // pred_region
      %s3940 = ssub.s32 128, 128
      %3941 = vsyncadd [#allocation4], %s3940
      %s3943 = sshll.u32 [#allocation10], 4
      %s3944 = int_to_ptr.vmem [resolvable:$true] %s3943
      %3946 = dma.vmem_to_hbm [thread:$0]  %s3944, 128, %s16, [#allocation4]
    $region85: #{actor_rollout.1} parent=1 // pred_fallthru
      _
    // Predicated region
    $region86: #{actor_rollout.1} parent=1 // pred_check
      _
    $region87: #{actor_rollout.1} parent=1 // pred_check_branch
      %3948 = sbr.rel (0) target = $region89
    $region88: #{actor_rollout.1} parent=1 // pred_region
      %s3950 = ssub.s32 128, 128
      %3951 = vsyncadd [#allocation12], %s3950
      %s3953 = sshll.u32 [#allocation11], 4
      %s3954 = int_to_ptr.vmem [resolvable:$true] %s3953
      %3956 = dma.vmem_to_hbm [thread:$0]  %s3954, 128, %s17, [#allocation12]
    $region89: #{actor_rollout.1} parent=1 // pred_fallthru
      _
    // Predicated region
    $region90: #{actor_rollout.1} parent=1 // pred_check
      _
    $region91: #{actor_rollout.1} parent=1 // pred_check_branch
      %3958 = sbr.rel (0) target = $region93
    $region92: #{actor_rollout.1} parent=1 // pred_region
      _
    $region93: #{actor_rollout.1} parent=1 // pred_fallthru
      _
    // Predicated region
    $region94: #{actor_rollout.1} parent=1 // pred_check
      _
    $region95: #{actor_rollout.1} parent=1 // pred_check_branch
      %3960 = sbr.rel (0) target = $region97
    $region96: #{actor_rollout.1} parent=1 // pred_region
      %3961 = dma.done [#allocation4], 128
    $region97: #{actor_rollout.1} parent=1 // pred_fallthru
      _
    // Predicated region
    $region98: #{actor_rollout.1} parent=1 // pred_check
      _
    $region99: #{actor_rollout.1} parent=1 // pred_check_branch
      %3963 = sbr.rel (0) target = $region101
    $region100: #{actor_rollout.1} parent=1 // pred_region
      %3964 = dma.done [#allocation12], 128
    $region101: #{actor_rollout.1} parent=1 // pred_fallthru
      _
    %3965 = vsyncpa [#allocation3], 1
    %3966 = vsyncpa [#allocation6], 1
    %3967 = vsyncpa [#allocation9], 1
    %3968 = vsyncpa [#allocation4], 1
    %3969 = vsyncpa [#allocation12], 1

</llo_original>
